<compile_context>
chip_gen: v5e
topology: v5e:2x2
jax: 0.10.0
libtpu: 0.0.40
codegen_flags: <defaults>
</compile_context>

<pallas_src>
import jax
import jax.numpy as jnp
from jax.experimental import pallas as pl
from jax.experimental.pallas import tpu as pltpu

INPUT_DIM = 28 * 28          # 784
HIDDEN_DIM = 400
Z_DIM = 20

IN_PAD = 896                 # 7 * 128, lane-aligned padded input/output width
ZP = 128                     # lane-aligned padded latent width


def _round_up(n, m):
    return ((n + m - 1) // m) * m


def _vae_kernel(x_ref, eps_ref,
                w1e_ref, b1e_ref,
                wmulv_ref, bmulv_ref,
                w1d_ref, b1d_ref,
                w2d_ref, b2d_ref,
                xrec_ref, mulv_ref):
    bf16 = jnp.bfloat16
    x = x_ref[...]                                              # (BM, 896) f32

    # ---- Encoder fc1 + relu ----
    h = jnp.dot(x.astype(bf16), w1e_ref[...],
                preferred_element_type=jnp.float32) + b1e_ref[...]
    h = jnp.maximum(h, 0.0)                                     # (BM, 400) f32

    # ---- Fused mu / logvar projection (two 128-lane slots) ----
    mulv = jnp.dot(h.astype(bf16), wmulv_ref[...],
                   preferred_element_type=jnp.float32) + bmulv_ref[...]
    mu_p = mulv[:, :ZP]                                         # (BM, 128)
    logvar_p = mulv[:, ZP:]                                     # (BM, 128)

    # ---- Reparameterize (f32): z = mu + eps * exp(0.5 * logvar) ----
    # Padded lanes: mu=0, logvar=0, eps=0  ->  z padded lanes are exactly 0,
    # so the zero-padded dec_w1 rows contribute nothing downstream.
    z = mu_p + eps_ref[...] * jnp.exp(0.5 * logvar_p)           # (BM, 128) f32

    # ---- Decoder fc1 + relu ----
    hd = jnp.dot(z.astype(bf16), w1d_ref[...],
                 preferred_element_type=jnp.float32) + b1d_ref[...]
    hd = jnp.maximum(hd, 0.0)                                   # (BM, 400) f32

    # ---- Decoder fc2 + sigmoid ----
    logits = jnp.dot(hd.astype(bf16), w2d_ref[...],
                     preferred_element_type=jnp.float32) + b2d_ref[...]
    xrec_ref[...] = jax.nn.sigmoid(logits)                      # (BM, 896) f32
    mulv_ref[...] = mulv                                        # (BM, 256) f32


def vae_forward(x, eps, packed, *, block_b=256):
    """x: (B, 784) f32, eps: (B, 20) f32 (the randn_like noise).
    `packed` comes from pack_params(): fused/padded bf16 weights, f32 biases."""
    B = x.shape[0]
    BM = min(block_b, _round_up(B, 8))        # batch tile (multiple of 8)
    Bp = _round_up(B, BM)
    grid = (pl.cdiv(Bp, BM),)

    xp = jnp.pad(x.astype(jnp.float32),
                 ((0, Bp - B), (0, IN_PAD - INPUT_DIM)))
    epsp = jnp.pad(eps.astype(jnp.float32),
                   ((0, Bp - B), (0, ZP - Z_DIM)))

    resident = lambda i: (0, 0)               # weights: same block every step
    in_specs = [
        pl.BlockSpec((BM, IN_PAD), lambda i: (i, 0)),        # x tile
        pl.BlockSpec((BM, ZP), lambda i: (i, 0)),            # eps tile
        pl.BlockSpec((IN_PAD, HIDDEN_DIM), resident),        # enc_w1 (bf16)
        pl.BlockSpec((1, HIDDEN_DIM), resident),             # enc_b1
        pl.BlockSpec((HIDDEN_DIM, 2 * ZP), resident),        # fused mu/logvar W
        pl.BlockSpec((1, 2 * ZP), resident),                 # fused mu/logvar b
        pl.BlockSpec((ZP, HIDDEN_DIM), resident),            # dec_w1 (bf16)
        pl.BlockSpec((1, HIDDEN_DIM), resident),             # dec_b1
        pl.BlockSpec((HIDDEN_DIM, IN_PAD), resident),        # dec_w2 (bf16)
        pl.BlockSpec((1, IN_PAD), resident),                 # dec_b2
    ]
    out_specs = (
        pl.BlockSpec((BM, IN_PAD), lambda i: (i, 0)),        # x_recon (padded)
        pl.BlockSpec((BM, 2 * ZP), lambda i: (i, 0)),        # mu|logvar slab
    )
    out_shape = (
        jax.ShapeDtypeStruct((Bp, IN_PAD), jnp.float32),
        jax.ShapeDtypeStruct((Bp, 2 * ZP), jnp.float32),
    )

    xrec_p, mulv = pl.pallas_call(
        _vae_kernel,
        out_shape=out_shape,
        grid=grid,
        in_specs=in_specs,
        out_specs=out_specs,
        compiler_params=pltpu.CompilerParams(
            dimension_semantics=("parallel",),      # shard batch across TCs (v7x)
            vmem_limit_bytes=32 << 20,              # ~10 MiB footprint + headroom
        ),
    )(
        xp, epsp,
        packed["enc_w1"], packed["enc_b1"],
        packed["enc_wmulv"], packed["enc_bmulv"],
        packed["dec_w1"], packed["dec_b1"],
        packed["dec_w2"], packed["dec_b2"],
    )

    x_recon = xrec_p[:B, :INPUT_DIM]
    mu = mulv[:B, :Z_DIM]
    logvar = mulv[:B, ZP:ZP + Z_DIM]
    return x_recon, mu, logvar


# ----------------------------- parameters ---------------------------------

def _linear_params(key, in_dim, out_dim):
    # PyTorch nn.Linear default init: U(-1/sqrt(in_dim), 1/sqrt(in_dim)).
    # Weight stored transposed: (in_dim, out_dim).
    kw, kb = jax.random.split(key)
    bound = 1.0 / jnp.sqrt(in_dim)
    w = jax.random.uniform(kw, (in_dim, out_dim), jnp.float32, -bound, bound)
    b = jax.random.uniform(kb, (out_dim,), jnp.float32, -bound, bound)
    return w, b.reshape(1, out_dim)


def init_params(key):
    """Raw f32 parameters matching the PyTorch module (weights transposed)."""
    keys = jax.random.split(key, 5)
    enc_w1, enc_b1 = _linear_params(keys[0], INPUT_DIM, HIDDEN_DIM)
    enc_wmu, enc_bmu = _linear_params(keys[1], HIDDEN_DIM, Z_DIM)
    enc_wlv, enc_blv = _linear_params(keys[2], HIDDEN_DIM, Z_DIM)
    dec_w1, dec_b1 = _linear_params(keys[3], Z_DIM, HIDDEN_DIM)
    dec_w2, dec_b2 = _linear_params(keys[4], HIDDEN_DIM, INPUT_DIM)
    return dict(
        enc_w1=enc_w1, enc_b1=enc_b1,
        enc_wmu=enc_wmu, enc_bmu=enc_bmu,
        enc_wlv=enc_wlv, enc_blv=enc_blv,
        dec_w1=dec_w1, dec_b1=dec_b1,
        dec_w2=dec_w2, dec_b2=dec_b2,
    )


def pack_params(p):
    """Fuse mu/logvar projections, zero-pad to lane-aligned shapes, and cast
    weights to bf16 (biases stay f32)."""
    bf16 = jnp.bfloat16
    # enc fc1: pad input rows 784 -> 896 (zero rows, so zero-padded x cols are inert)
    enc_w1 = jnp.zeros((IN_PAD, HIDDEN_DIM), jnp.float32)
    enc_w1 = enc_w1.at[:INPUT_DIM].set(p["enc_w1"]).astype(bf16)
    enc_b1 = p["enc_b1"].astype(jnp.float32)

    # fused mu/logvar: each head gets a 128-lane slot (cols [0:20] and [128:148])
    enc_wmulv = jnp.zeros((HIDDEN_DIM, 2 * ZP), jnp.float32)
    enc_wmulv = enc_wmulv.at[:, :Z_DIM].set(p["enc_wmu"])
    enc_wmulv = enc_wmulv.at[:, ZP:ZP + Z_DIM].set(p["enc_wlv"]).astype(bf16)
    enc_bmulv = jnp.zeros((1, 2 * ZP), jnp.float32)
    enc_bmulv = enc_bmulv.at[:, :Z_DIM].set(p["enc_bmu"])
    enc_bmulv = enc_bmulv.at[:, ZP:ZP + Z_DIM].set(p["enc_blv"])

    # dec fc1: pad latent rows 20 -> 128 (padded z lanes are 0, so harmless)
    dec_w1 = jnp.zeros((ZP, HIDDEN_DIM), jnp.float32)
    dec_w1 = dec_w1.at[:Z_DIM].set(p["dec_w1"]).astype(bf16)
    dec_b1 = p["dec_b1"].astype(jnp.float32)

    # dec fc2: pad output cols 784 -> 896
    dec_w2 = jnp.zeros((HIDDEN_DIM, IN_PAD), jnp.float32)
    dec_w2 = dec_w2.at[:, :INPUT_DIM].set(p["dec_w2"]).astype(bf16)
    dec_b2 = jnp.zeros((1, IN_PAD), jnp.float32)
    dec_b2 = dec_b2.at[:, :INPUT_DIM].set(p["dec_b2"])

    return dict(
        enc_w1=enc_w1, enc_b1=enc_b1,
        enc_wmulv=enc_wmulv, enc_bmulv=enc_bmulv,
        dec_w1=dec_w1, dec_b1=dec_b1,
        dec_w2=dec_w2, dec_b2=dec_b2,
    )


def _reference_forward(x, eps, p):
    # Pure-JAX f32 reference matching the original PyTorch module semantics.
    h = jnp.maximum(x @ p["enc_w1"] + p["enc_b1"], 0.0)
    mu = h @ p["enc_wmu"] + p["enc_bmu"]
    logvar = h @ p["enc_wlv"] + p["enc_blv"]
    z = mu + eps * jnp.exp(0.5 * logvar)
    hd = jnp.maximum(z @ p["dec_w1"] + p["dec_b1"], 0.0)
    x_recon = jax.nn.sigmoid(hd @ p["dec_w2"] + p["dec_b2"])
    return x_recon, mu, logvar


if __name__ == "__main__":
    key = jax.random.PRNGKey(0)
    k_params, k_x, k_eps = jax.random.split(key, 3)

    B = 16
    raw = init_params(k_params)
    packed = pack_params(raw)
    x = jax.random.uniform(k_x, (B, INPUT_DIM), jnp.float32)    # flattened "images"
    eps = jax.random.normal(k_eps, (B, Z_DIM), jnp.float32)     # randn_like(std)

    x_recon, mu, logvar = vae_forward(x, eps, packed)
    jax.block_until_ready((x_recon, mu, logvar))

    # correctness vs f32 reference (tolerance loosened for bf16 weights/acts)
    ref_xr, ref_mu, ref_lv = _reference_forward(x, eps, raw)
    assert jnp.allclose(x_recon, ref_xr, atol=3e-2, rtol=3e-2)
    assert jnp.allclose(mu, ref_mu, atol=3e-2, rtol=3e-2)
    assert jnp.allclose(logvar, ref_lv, atol=3e-2, rtol=3e-2)

    print("KERNEL_OK")
</pallas_src>

<mosaic_0001>
module attributes {stable_mosaic.version = 11 : i64} {
  func.func @_vae_kernel(%arg0: i32, %arg1: memref<16x896xf32, #tpu.memory_space<vmem>>, %arg2: memref<16x128xf32, #tpu.memory_space<vmem>>, %arg3: memref<896x400xbf16, #tpu.memory_space<vmem>>, %arg4: memref<1x400xf32, #tpu.memory_space<vmem>>, %arg5: memref<400x256xbf16, #tpu.memory_space<vmem>>, %arg6: memref<1x256xf32, #tpu.memory_space<vmem>>, %arg7: memref<128x400xbf16, #tpu.memory_space<vmem>>, %arg8: memref<1x400xf32, #tpu.memory_space<vmem>>, %arg9: memref<400x896xbf16, #tpu.memory_space<vmem>>, %arg10: memref<1x896xf32, #tpu.memory_space<vmem>>, %arg11: memref<16x896xf32, #tpu.memory_space<vmem>>, %arg12: memref<16x256xf32, #tpu.memory_space<vmem>>) attributes {dimension_semantics = [#tpu.dimension_semantics<parallel>], iteration_bounds = array<i64: 1>, scalar_prefetch = 0 : i64, scratch_operands = 0 : i64, tpu.core_type = #tpu.core_type<tc>, window_params = [{transform_indices = @transform_0, window_bounds = array<i64: 16, 896>}, {transform_indices = @transform_1, window_bounds = array<i64: 16, 128>}, {pipeline_mode = #tpu.pipeline_mode<synchronous>, transform_indices = @transform_2, window_bounds = array<i64: 896, 400>}, {pipeline_mode = #tpu.pipeline_mode<synchronous>, transform_indices = @transform_3, window_bounds = array<i64: 1, 400>}, {pipeline_mode = #tpu.pipeline_mode<synchronous>, transform_indices = @transform_4, window_bounds = array<i64: 400, 256>}, {pipeline_mode = #tpu.pipeline_mode<synchronous>, transform_indices = @transform_5, window_bounds = array<i64: 1, 256>}, {pipeline_mode = #tpu.pipeline_mode<synchronous>, transform_indices = @transform_6, window_bounds = array<i64: 128, 400>}, {pipeline_mode = #tpu.pipeline_mode<synchronous>, transform_indices = @transform_7, window_bounds = array<i64: 1, 400>}, {pipeline_mode = #tpu.pipeline_mode<synchronous>, transform_indices = @transform_8, window_bounds = array<i64: 400, 896>}, {pipeline_mode = #tpu.pipeline_mode<synchronous>, transform_indices = @transform_9, window_bounds = array<i64: 1, 896>}, {transform_indices = @transform_10, window_bounds = array<i64: 16, 896>}, {transform_indices = @transform_11, window_bounds = array<i64: 16, 256>}]} {
    %c0 = arith.constant 0 : index
    %c0_0 = arith.constant 0 : index
    %0 = vector.load %arg1[%c0, %c0_0] : memref<16x896xf32, #tpu.memory_space<vmem>>, vector<16x896xf32>
    %1 = arith.truncf %0 : vector<16x896xf32> to vector<16x896xbf16>
    %c0_1 = arith.constant 0 : index
    %c0_2 = arith.constant 0 : index
    %2 = vector.load %arg3[%c0_1, %c0_2] : memref<896x400xbf16, #tpu.memory_space<vmem>>, vector<896x400xbf16>
    %cst = arith.constant dense<0.000000e+00> : vector<16x400xf32>
    %3 = tpu.matmul %1, %2, %cst {dimension_numbers = #tpu.dot_dimension_numbers<[1], [0], [0], [1], [0, 0, 1, 1], [], []>} : vector<16x896xbf16>, vector<896x400xbf16>, vector<16x400xf32> -> vector<16x400xf32>
    %c0_3 = arith.constant 0 : index
    %c0_4 = arith.constant 0 : index
    %4 = vector.load %arg4[%c0_3, %c0_4] : memref<1x400xf32, #tpu.memory_space<vmem>>, vector<1x400xf32>
    %5 = vector.broadcast %4 : vector<1x400xf32> to vector<16x400xf32>
    %6 = arith.addf %3, %5 : vector<16x400xf32>
    %cst_5 = arith.constant 0.000000e+00 : f32
    %7 = vector.broadcast %cst_5 : f32 to vector<16x400xf32>
    %8 = arith.maximumf %6, %7 : vector<16x400xf32>
    %9 = arith.truncf %8 : vector<16x400xf32> to vector<16x400xbf16>
    %c0_6 = arith.constant 0 : index
    %c0_7 = arith.constant 0 : index
    %10 = vector.load %arg5[%c0_6, %c0_7] : memref<400x256xbf16, #tpu.memory_space<vmem>>, vector<400x256xbf16>
    %cst_8 = arith.constant dense<0.000000e+00> : vector<16x256xf32>
    %11 = tpu.matmul %9, %10, %cst_8 {dimension_numbers = #tpu.dot_dimension_numbers<[1], [0], [0], [1], [0, 0, 1, 1], [], []>} : vector<16x400xbf16>, vector<400x256xbf16>, vector<16x256xf32> -> vector<16x256xf32>
    %c0_9 = arith.constant 0 : index
    %c0_10 = arith.constant 0 : index
    %12 = vector.load %arg6[%c0_9, %c0_10] : memref<1x256xf32, #tpu.memory_space<vmem>>, vector<1x256xf32>
    %13 = vector.broadcast %12 : vector<1x256xf32> to vector<16x256xf32>
    %14 = arith.addf %11, %13 : vector<16x256xf32>
    %15 = vector.extract_strided_slice %14 {offsets = [0, 0], sizes = [16, 128], strides = [1, 1]} : vector<16x256xf32> to vector<16x128xf32>
    %16 = vector.extract_strided_slice %14 {offsets = [0, 128], sizes = [16, 128], strides = [1, 1]} : vector<16x256xf32> to vector<16x128xf32>
    %c0_11 = arith.constant 0 : index
    %c0_12 = arith.constant 0 : index
    %17 = vector.load %arg2[%c0_11, %c0_12] : memref<16x128xf32, #tpu.memory_space<vmem>>, vector<16x128xf32>
    %cst_13 = arith.constant 5.000000e-01 : f32
    %18 = vector.broadcast %cst_13 : f32 to vector<16x128xf32>
    %19 = arith.mulf %18, %16 : vector<16x128xf32>
    %20 = math.exp %19 : vector<16x128xf32>
    %21 = arith.mulf %17, %20 : vector<16x128xf32>
    %22 = arith.addf %15, %21 : vector<16x128xf32>
    %23 = arith.truncf %22 : vector<16x128xf32> to vector<16x128xbf16>
    %c0_14 = arith.constant 0 : index
    %c0_15 = arith.constant 0 : index
    %24 = vector.load %arg7[%c0_14, %c0_15] : memref<128x400xbf16, #tpu.memory_space<vmem>>, vector<128x400xbf16>
    %cst_16 = arith.constant dense<0.000000e+00> : vector<16x400xf32>
    %25 = tpu.matmul %23, %24, %cst_16 {dimension_numbers = #tpu.dot_dimension_numbers<[1], [0], [0], [1], [0, 0, 1, 1], [], []>} : vector<16x128xbf16>, vector<128x400xbf16>, vector<16x400xf32> -> vector<16x400xf32>
    %c0_17 = arith.constant 0 : index
    %c0_18 = arith.constant 0 : index
    %26 = vector.load %arg8[%c0_17, %c0_18] : memref<1x400xf32, #tpu.memory_space<vmem>>, vector<1x400xf32>
    %27 = vector.broadcast %26 : vector<1x400xf32> to vector<16x400xf32>
    %28 = arith.addf %25, %27 : vector<16x400xf32>
    %cst_19 = arith.constant 0.000000e+00 : f32
    %29 = vector.broadcast %cst_19 : f32 to vector<16x400xf32>
    %30 = arith.maximumf %28, %29 : vector<16x400xf32>
    %31 = arith.truncf %30 : vector<16x400xf32> to vector<16x400xbf16>
    %c0_20 = arith.constant 0 : index
    %c0_21 = arith.constant 0 : index
    %32 = vector.load %arg9[%c0_20, %c0_21] : memref<400x896xbf16, #tpu.memory_space<vmem>>, vector<400x896xbf16>
    %cst_22 = arith.constant dense<0.000000e+00> : vector<16x896xf32>
    %33 = tpu.matmul %31, %32, %cst_22 {dimension_numbers = #tpu.dot_dimension_numbers<[1], [0], [0], [1], [0, 0, 1, 1], [], []>} : vector<16x400xbf16>, vector<400x896xbf16>, vector<16x896xf32> -> vector<16x896xf32>
    %c0_23 = arith.constant 0 : index
    %c0_24 = arith.constant 0 : index
    %34 = vector.load %arg10[%c0_23, %c0_24] : memref<1x896xf32, #tpu.memory_space<vmem>>, vector<1x896xf32>
    %35 = vector.broadcast %34 : vector<1x896xf32> to vector<16x896xf32>
    %36 = arith.addf %33, %35 : vector<16x896xf32>
    %37 = arith.negf %36 : vector<16x896xf32>
    %38 = math.exp %37 : vector<16x896xf32>
    %cst_25 = arith.constant 1.000000e+00 : f32
    %39 = vector.broadcast %cst_25 : f32 to vector<16x896xf32>
    %40 = arith.addf %39, %38 : vector<16x896xf32>
    %41 = arith.divf %39, %40 : vector<16x896xf32>
    %c0_26 = arith.constant 0 : index
    %c0_27 = arith.constant 0 : index
    %42 = vector.load %arg11[%c0_26, %c0_27] : memref<16x896xf32, #tpu.memory_space<vmem>>, vector<16x896xf32>
    tpu.vector_store %arg11[%c0_26, %c0_27], %41 {strides = array<i32>} : memref<16x896xf32, #tpu.memory_space<vmem>>, vector<16x896xf32>,
    %c0_28 = arith.constant 0 : index
    %c0_29 = arith.constant 0 : index
    %43 = vector.load %arg12[%c0_28, %c0_29] : memref<16x256xf32, #tpu.memory_space<vmem>>, vector<16x256xf32>
    tpu.vector_store %arg12[%c0_28, %c0_29], %14 {strides = array<i32>} : memref<16x256xf32, #tpu.memory_space<vmem>>, vector<16x256xf32>,
    return
  }
  func.func @transform_0(%arg0: i32) -> (i32, i32) {
    %c0_i32 = arith.constant 0 : i32
    %c0_i32_0 = arith.constant 0 : i32
    return %arg0, %c0_i32 : i32, i32
  }
  func.func @transform_1(%arg0: i32) -> (i32, i32) {
    %c0_i32 = arith.constant 0 : i32
    %c0_i32_0 = arith.constant 0 : i32
    return %arg0, %c0_i32 : i32, i32
  }
  func.func @transform_2(%arg0: i32) -> (i32, i32) {
    %c0_i32 = arith.constant 0 : i32
    %c0_i32_0 = arith.constant 0 : i32
    %c0_i32_1 = arith.constant 0 : i32
    return %c0_i32, %c0_i32_0 : i32, i32
  }
  func.func @transform_3(%arg0: i32) -> (i32, i32) {
    %c0_i32 = arith.constant 0 : i32
    %c0_i32_0 = arith.constant 0 : i32
    %c0_i32_1 = arith.constant 0 : i32
    return %c0_i32, %c0_i32_0 : i32, i32
  }
  func.func @transform_4(%arg0: i32) -> (i32, i32) {
    %c0_i32 = arith.constant 0 : i32
    %c0_i32_0 = arith.constant 0 : i32
    %c0_i32_1 = arith.constant 0 : i32
    return %c0_i32, %c0_i32_0 : i32, i32
  }
  func.func @transform_5(%arg0: i32) -> (i32, i32) {
    %c0_i32 = arith.constant 0 : i32
    %c0_i32_0 = arith.constant 0 : i32
    %c0_i32_1 = arith.constant 0 : i32
    return %c0_i32, %c0_i32_0 : i32, i32
  }
  func.func @transform_6(%arg0: i32) -> (i32, i32) {
    %c0_i32 = arith.constant 0 : i32
    %c0_i32_0 = arith.constant 0 : i32
    %c0_i32_1 = arith.constant 0 : i32
    return %c0_i32, %c0_i32_0 : i32, i32
  }
  func.func @transform_7(%arg0: i32) -> (i32, i32) {
    %c0_i32 = arith.constant 0 : i32
    %c0_i32_0 = arith.constant 0 : i32
    %c0_i32_1 = arith.constant 0 : i32
    return %c0_i32, %c0_i32_0 : i32, i32
  }
  func.func @transform_8(%arg0: i32) -> (i32, i32) {
    %c0_i32 = arith.constant 0 : i32
    %c0_i32_0 = arith.constant 0 : i32
    %c0_i32_1 = arith.constant 0 : i32
    return %c0_i32, %c0_i32_0 : i32, i32
  }
  func.func @transform_9(%arg0: i32) -> (i32, i32) {
    %c0_i32 = arith.constant 0 : i32
    %c0_i32_0 = arith.constant 0 : i32
    %c0_i32_1 = arith.constant 0 : i32
    return %c0_i32, %c0_i32_0 : i32, i32
  }
  func.func @transform_10(%arg0: i32) -> (i32, i32) {
    %c0_i32 = arith.constant 0 : i32
    %c0_i32_0 = arith.constant 0 : i32
    return %arg0, %c0_i32 : i32, i32
  }
  func.func @transform_11(%arg0: i32) -> (i32, i32) {
    %c0_i32 = arith.constant 0 : i32
    %c0_i32_0 = arith.constant 0 : i32
    return %arg0, %c0_i32 : i32, i32
  }
}

</mosaic_0001>

<llo_original>
// kernel: tpu_custom_call.1
$region0: #{tpu_custom_call.1}
  #allocation0 [shape = 'u32[]', space=smem, size = 0x4, offset = 0x4, fixed_abs, tag = 'smem constant byte address 0x4 - core index']
  #allocation1 [shape = 'u32[72,128]{1,0:T(1,128)}', space=vmem, size = 0x9000, scoped, tag = 'internal scratch']
  %s0 = inlined_call_operand.vmem [shape: f32[16,896], index: 0, kind: input, shape index: {}]
  %s1 = inlined_call_operand.vmem [shape: f32[16,128], index: 1, kind: input, shape index: {}]
  %s2 = inlined_call_operand.vmem [shape: bf16[896,400], index: 2, kind: input, shape index: {}]
  %s3 = inlined_call_operand.vmem [shape: f32[1,400], index: 3, kind: input, shape index: {}]
  %s4 = inlined_call_operand.vmem [shape: bf16[400,256], index: 4, kind: input, shape index: {}]
  %s5 = inlined_call_operand.vmem [shape: f32[1,256], index: 5, kind: input, shape index: {}]
  %s6 = inlined_call_operand.vmem [shape: bf16[128,400], index: 6, kind: input, shape index: {}]
  %s7 = inlined_call_operand.vmem [shape: f32[1,400], index: 7, kind: input, shape index: {}]
  %s8 = inlined_call_operand.vmem [shape: bf16[400,896], index: 8, kind: input, shape index: {}]
  %s9 = inlined_call_operand.vmem [shape: f32[1,896], index: 9, kind: input, shape index: {}]
  %s10 = inlined_call_operand.hbm [shape: f32[16,896], index: 10, kind: output, shape index: {0}]
  %s11 = inlined_call_operand.hbm [shape: f32[16,256], index: 11, kind: output, shape index: {1}]
  %12 = xla_tuple %s10, %s11
  %s13 = sld [smem:[#allocation0]]
  $region58: #{tpu_custom_call.1} parent=0
    _
  %s15 = ssub.s32 1, %s13
  %s16 = scalar_select 0, %s15, %s13
  $region1: #{tpu_custom_call.1} parent=0
    #allocation2 [shape = 'u8[57344]{0}', space=vmem, size = 0xe000, scoped, tag = 'output window, operand 0, single buffered']
    #allocation3 [shape = 's32[1]{0}', space=sflag, size = 0x4, scoped, tag = 'scoped memory for tpu_custom_call.1']
    #allocation4 [shape = 'u8[16384]{0}', space=vmem, size = 0x4000, scoped, tag = 'output window, operand 1, single buffered']
    #allocation5 [shape = 's32[1]{0}', space=sflag, size = 0x4, scoped, tag = 'scoped memory for tpu_custom_call.1']
    %17 = vsyncpa [#allocation3], 0
    %18 = vsyncpa [#allocation5], 0
    // Predicated region
    $region2: #{tpu_custom_call.1} parent=1 // pred_check
      _
    $region3: #{tpu_custom_call.1} parent=1 // pred_check_branch
      %20 = sbr.rel (0) target = $region5
    $region4: #{tpu_custom_call.1} parent=1 // pred_region
      _
    $region5: #{tpu_custom_call.1} parent=1 // pred_fallthru
      _
    // Predicated region
    $region6: #{tpu_custom_call.1} parent=1 // pred_check
      _
    $region7: #{tpu_custom_call.1} parent=1 // pred_check_branch
      %22 = sbr.rel (0) target = $region9
    $region8: #{tpu_custom_call.1} parent=1 // pred_region
      _
    $region9: #{tpu_custom_call.1} parent=1 // pred_fallthru
      _
    // Predicated region
    $region10: #{tpu_custom_call.1} parent=1 // pred_check
      _
    $region11: #{tpu_custom_call.1} parent=1 // pred_check_branch
      %24 = sbr.rel (0) target = $region13
    $region12: #{tpu_custom_call.1} parent=1 // pred_region
      _
    $region13: #{tpu_custom_call.1} parent=1 // pred_fallthru
      _
    // Predicated region
    $region14: #{tpu_custom_call.1} parent=1 // pred_check
      _
    $region15: #{tpu_custom_call.1} parent=1 // pred_check_branch
      %26 = sbr.rel (0) target = $region17
    $region16: #{tpu_custom_call.1} parent=1 // pred_region
      _
    $region17: #{tpu_custom_call.1} parent=1 // pred_fallthru
      _
    // Predicated region
    $region18: #{tpu_custom_call.1} parent=1 // pred_check
      _
    $region19: #{tpu_custom_call.1} parent=1 // pred_check_branch
      %28 = sbr.rel (0) target = $region21
    $region20: #{tpu_custom_call.1} parent=1 // pred_region
      _
    $region21: #{tpu_custom_call.1} parent=1 // pred_fallthru
      _
    // Predicated region
    $region22: #{tpu_custom_call.1} parent=1 // pred_check
      _
    $region23: #{tpu_custom_call.1} parent=1 // pred_check_branch
      %30 = sbr.rel (0) target = $region25
    $region24: #{tpu_custom_call.1} parent=1 // pred_region
      _
    $region25: #{tpu_custom_call.1} parent=1 // pred_fallthru
      _
    // Predicated region
    $region26: #{tpu_custom_call.1} parent=1 // pred_check
      _
    $region27: #{tpu_custom_call.1} parent=1 // pred_check_branch
      %32 = sbr.rel (0) target = $region29
    $region28: #{tpu_custom_call.1} parent=1 // pred_region
      _
    $region29: #{tpu_custom_call.1} parent=1 // pred_fallthru
      _
    // Predicated region
    $region30: #{tpu_custom_call.1} parent=1 // pred_check
      _
    $region31: #{tpu_custom_call.1} parent=1 // pred_check_branch
      %34 = sbr.rel (0) target = $region33
    $region32: #{tpu_custom_call.1} parent=1 // pred_region
      _
    $region33: #{tpu_custom_call.1} parent=1 // pred_fallthru
      _
    // Predicated region
    $region34: #{tpu_custom_call.1} parent=1 // pred_check
      _
    $region35: #{tpu_custom_call.1} parent=1 // pred_check_branch
      %36 = sbr.rel (0) target = $region37
    $region36: #{tpu_custom_call.1} parent=1 // pred_region
      _
    $region37: #{tpu_custom_call.1} parent=1 // pred_fallthru
      _
    // Predicated region
    $region38: #{tpu_custom_call.1} parent=1 // pred_check
      _
    $region39: #{tpu_custom_call.1} parent=1 // pred_check_branch
      %38 = sbr.rel (0) target = $region41
    $region40: #{tpu_custom_call.1} parent=1 // pred_region
      _
    $region41: #{tpu_custom_call.1} parent=1 // pred_fallthru
      _
    %v40 = vld [vmem:[%s0] sm:$0xff]
    %v41 = vld [vmem:[%s0 + $0x8] sm:$0xff]
    %v42 = vld [vmem:[%s0 + $0x10] sm:$0xff]
    %v43 = vld [vmem:[%s0 + $0x18] sm:$0xff]
    %v44 = vld [vmem:[%s0 + $0x20] sm:$0xff]
    %v45 = vld [vmem:[%s0 + $0x28] sm:$0xff]
    %v46 = vld [vmem:[%s0 + $0x30] sm:$0xff]
    %v47 = vld [vmem:[%s0 + $0x38] sm:$0xff]
    %v48 = vld [vmem:[%s0 + $0x40] sm:$0xff]
    %v49 = vld [vmem:[%s0 + $0x48] sm:$0xff]
    %v50 = vld [vmem:[%s0 + $0x50] sm:$0xff]
    %v51 = vld [vmem:[%s0 + $0x58] sm:$0xff]
    %v52 = vld [vmem:[%s0 + $0x60] sm:$0xff]
    %v53 = vld [vmem:[%s0 + $0x68] sm:$0xff]
    %v54 = vpack.c.bf16 %v47, %v40
    %v55 = vpack.c.bf16 %v48, %v41
    %v56 = vpack.c.bf16 %v49, %v42
    %v57 = vpack.c.bf16 %v50, %v43
    %v58 = vpack.c.bf16 %v51, %v44
    %v59 = vpack.c.bf16 %v52, %v45
    %v60 = vpack.c.bf16 %v53, %v46
    %v61 = vld [vmem:[%s2] sm:$0xff]
    %v62 = vld [vmem:[%s2 + $0x8] sm:$0xff]
    %v63 = vld [vmem:[%s2 + $0x10] sm:$0xff]
    %v64 = vld [vmem:[%s2 + $0x18] sm:$0xff]
    %v65 = vld [vmem:[%s2 + $0x20] sm:$0xff]
    %v66 = vld [vmem:[%s2 + $0x28] sm:$0xff]
    %v67 = vld [vmem:[%s2 + $0x30] sm:$0xff]
    %v68 = vld [vmem:[%s2 + $0x38] sm:$0xff]
    %v69 = vld [vmem:[%s2 + $0x40] sm:$0xff]
    %v70 = vld [vmem:[%s2 + $0x48] sm:$0xff]
    %v71 = vld [vmem:[%s2 + $0x50] sm:$0xff]
    %v72 = vld [vmem:[%s2 + $0x58] sm:$0xff]
    %v73 = vld [vmem:[%s2 + $0x60] sm:$0xff]
    %v74 = vld [vmem:[%s2 + $0x68] sm:$0xff]
    %v75 = vld [vmem:[%s2 + $0x70] sm:$0xff]
    %v76 = vld [vmem:[%s2 + $0x78] sm:$0xff]
    %v77 = vld [vmem:[%s2 + $0x80] sm:$0xff]
    %v78 = vld [vmem:[%s2 + $0x88] sm:$0xff]
    %v79 = vld [vmem:[%s2 + $0x90] sm:$0xff]
    %v80 = vld [vmem:[%s2 + $0x98] sm:$0xff]
    %v81 = vld [vmem:[%s2 + $0xa0] sm:$0xff]
    %v82 = vld [vmem:[%s2 + $0xa8] sm:$0xff]
    %v83 = vld [vmem:[%s2 + $0xb0] sm:$0xff]
    %v84 = vld [vmem:[%s2 + $0xb8] sm:$0xff]
    %v85 = vld [vmem:[%s2 + $0xc0] sm:$0xff]
    %v86 = vld [vmem:[%s2 + $0xc8] sm:$0xff]
    %v87 = vld [vmem:[%s2 + $0xd0] sm:$0xff]
    %v88 = vld [vmem:[%s2 + $0xd8] sm:$0xff]
    %v89 = vld [vmem:[%s2 + $0xe0] sm:$0xff]
    %v90 = vld [vmem:[%s2 + $0xe8] sm:$0xff]
    %v91 = vld [vmem:[%s2 + $0xf0] sm:$0xff]
    %v92 = vld [vmem:[%s2 + $0xf8] sm:$0xff]
    %v93 = vld [vmem:[%s2 + $0x100] sm:$0xff]
    %v94 = vld [vmem:[%s2 + $0x108] sm:$0xff]
    %v95 = vld [vmem:[%s2 + $0x110] sm:$0xff]
    %v96 = vld [vmem:[%s2 + $0x118] sm:$0xff]
    %v97 = vld [vmem:[%s2 + $0x120] sm:$0xff]
    %v98 = vld [vmem:[%s2 + $0x128] sm:$0xff]
    %v99 = vld [vmem:[%s2 + $0x130] sm:$0xff]
    %v100 = vld [vmem:[%s2 + $0x138] sm:$0xff]
    %v101 = vld [vmem:[%s2 + $0x140] sm:$0xff]
    %v102 = vld [vmem:[%s2 + $0x148] sm:$0xff]
    %v103 = vld [vmem:[%s2 + $0x150] sm:$0xff]
    %v104 = vld [vmem:[%s2 + $0x158] sm:$0xff]
    %v105 = vld [vmem:[%s2 + $0x160] sm:$0xff]
    %v106 = vld [vmem:[%s2 + $0x168] sm:$0xff]
    %v107 = vld [vmem:[%s2 + $0x170] sm:$0xff]
    %v108 = vld [vmem:[%s2 + $0x178] sm:$0xff]
    %v109 = vld [vmem:[%s2 + $0x180] sm:$0xff]
    %v110 = vld [vmem:[%s2 + $0x188] sm:$0xff]
    %v111 = vld [vmem:[%s2 + $0x190] sm:$0xff]
    %v112 = vld [vmem:[%s2 + $0x198] sm:$0xff]
    %v113 = vld [vmem:[%s2 + $0x1a0] sm:$0xff]
    %v114 = vld [vmem:[%s2 + $0x1a8] sm:$0xff]
    %v115 = vld [vmem:[%s2 + $0x1b0] sm:$0xff]
    %v116 = vld [vmem:[%s2 + $0x1b8] sm:$0xff]
    %v117 = vld [vmem:[%s2 + $0x1c0] sm:$0xff]
    %v118 = vld [vmem:[%s2 + $0x1c8] sm:$0xff]
    %v119 = vld [vmem:[%s2 + $0x1d0] sm:$0xff]
    %v120 = vld [vmem:[%s2 + $0x1d8] sm:$0xff]
    %v121 = vld [vmem:[%s2 + $0x1e0] sm:$0xff]
    %v122 = vld [vmem:[%s2 + $0x1e8] sm:$0xff]
    %v123 = vld [vmem:[%s2 + $0x1f0] sm:$0xff]
    %v124 = vld [vmem:[%s2 + $0x1f8] sm:$0xff]
    %v125 = vld [vmem:[%s2 + $0x200] sm:$0xff]
    %v126 = vld [vmem:[%s2 + $0x208] sm:$0xff]
    %v127 = vld [vmem:[%s2 + $0x210] sm:$0xff]
    %v128 = vld [vmem:[%s2 + $0x218] sm:$0xff]
    %v129 = vld [vmem:[%s2 + $0x220] sm:$0xff]
    %v130 = vld [vmem:[%s2 + $0x228] sm:$0xff]
    %v131 = vld [vmem:[%s2 + $0x230] sm:$0xff]
    %v132 = vld [vmem:[%s2 + $0x238] sm:$0xff]
    %v133 = vld [vmem:[%s2 + $0x240] sm:$0xff]
    %v134 = vld [vmem:[%s2 + $0x248] sm:$0xff]
    %v135 = vld [vmem:[%s2 + $0x250] sm:$0xff]
    %v136 = vld [vmem:[%s2 + $0x258] sm:$0xff]
    %v137 = vld [vmem:[%s2 + $0x260] sm:$0xff]
    %v138 = vld [vmem:[%s2 + $0x268] sm:$0xff]
    %v139 = vld [vmem:[%s2 + $0x270] sm:$0xff]
    %v140 = vld [vmem:[%s2 + $0x278] sm:$0xff]
    %v141 = vld [vmem:[%s2 + $0x280] sm:$0xff]
    %v142 = vld [vmem:[%s2 + $0x288] sm:$0xff]
    %v143 = vld [vmem:[%s2 + $0x290] sm:$0xff]
    %v144 = vld [vmem:[%s2 + $0x298] sm:$0xff]
    %v145 = vld [vmem:[%s2 + $0x2a0] sm:$0xff]
    %v146 = vld [vmem:[%s2 + $0x2a8] sm:$0xff]
    %v147 = vld [vmem:[%s2 + $0x2b0] sm:$0xff]
    %v148 = vld [vmem:[%s2 + $0x2b8] sm:$0xff]
    %v149 = vld [vmem:[%s2 + $0x2c0] sm:$0xff]
    %v150 = vld [vmem:[%s2 + $0x2c8] sm:$0xff]
    %v151 = vld [vmem:[%s2 + $0x2d0] sm:$0xff]
    %v152 = vld [vmem:[%s2 + $0x2d8] sm:$0xff]
    %v153 = vld [vmem:[%s2 + $0x2e0] sm:$0xff]
    %v154 = vld [vmem:[%s2 + $0x2e8] sm:$0xff]
    %v155 = vld [vmem:[%s2 + $0x2f0] sm:$0xff]
    %v156 = vld [vmem:[%s2 + $0x2f8] sm:$0xff]
    %v157 = vld [vmem:[%s2 + $0x300] sm:$0xff]
    %v158 = vld [vmem:[%s2 + $0x308] sm:$0xff]
    %v159 = vld [vmem:[%s2 + $0x310] sm:$0xff]
    %v160 = vld [vmem:[%s2 + $0x318] sm:$0xff]
    %v161 = vld [vmem:[%s2 + $0x320] sm:$0xff]
    %v162 = vld [vmem:[%s2 + $0x328] sm:$0xff]
    %v163 = vld [vmem:[%s2 + $0x330] sm:$0xff]
    %v164 = vld [vmem:[%s2 + $0x338] sm:$0xff]
    %v165 = vld [vmem:[%s2 + $0x340] sm:$0xff]
    %v166 = vld [vmem:[%s2 + $0x348] sm:$0xff]
    %v167 = vld [vmem:[%s2 + $0x350] sm:$0xff]
    %v168 = vld [vmem:[%s2 + $0x358] sm:$0xff]
    %v169 = vld [vmem:[%s2 + $0x360] sm:$0xff]
    %v170 = vld [vmem:[%s2 + $0x368] sm:$0xff]
    %v171 = vld [vmem:[%s2 + $0x370] sm:$0xff]
    %v172 = vld [vmem:[%s2 + $0x378] sm:$0xff]
    %v173 = vld [vmem:[%s2 + $0x380] sm:$0xff]
    %v174 = vld [vmem:[%s2 + $0x388] sm:$0xff]
    %v175 = vld [vmem:[%s2 + $0x390] sm:$0xff]
    %v176 = vld [vmem:[%s2 + $0x398] sm:$0xff]
    %v177 = vld [vmem:[%s2 + $0x3a0] sm:$0xff]
    %v178 = vld [vmem:[%s2 + $0x3a8] sm:$0xff]
    %v179 = vld [vmem:[%s2 + $0x3b0] sm:$0xff]
    %v180 = vld [vmem:[%s2 + $0x3b8] sm:$0xff]
    %v181 = vld [vmem:[%s2 + $0x3c0] sm:$0xff]
    %v182 = vld [vmem:[%s2 + $0x3c8] sm:$0xff]
    %v183 = vld [vmem:[%s2 + $0x3d0] sm:$0xff]
    %v184 = vld [vmem:[%s2 + $0x3d8] sm:$0xff]
    %v185 = vld [vmem:[%s2 + $0x3e0] sm:$0xff]
    %v186 = vld [vmem:[%s2 + $0x3e8] sm:$0xff]
    %v187 = vld [vmem:[%s2 + $0x3f0] sm:$0xff]
    %v188 = vld [vmem:[%s2 + $0x3f8] sm:$0xff]
    %v189 = vld [vmem:[%s2 + $0x400] sm:$0xff]
    %v190 = vld [vmem:[%s2 + $0x408] sm:$0xff]
    %v191 = vld [vmem:[%s2 + $0x410] sm:$0xff]
    %v192 = vld [vmem:[%s2 + $0x418] sm:$0xff]
    %v193 = vld [vmem:[%s2 + $0x420] sm:$0xff]
    %v194 = vld [vmem:[%s2 + $0x428] sm:$0xff]
    %v195 = vld [vmem:[%s2 + $0x430] sm:$0xff]
    %v196 = vld [vmem:[%s2 + $0x438] sm:$0xff]
    %v197 = vld [vmem:[%s2 + $0x440] sm:$0xff]
    %v198 = vld [vmem:[%s2 + $0x448] sm:$0xff]
    %v199 = vld [vmem:[%s2 + $0x450] sm:$0xff]
    %v200 = vld [vmem:[%s2 + $0x458] sm:$0xff]
    %v201 = vld [vmem:[%s2 + $0x460] sm:$0xff]
    %v202 = vld [vmem:[%s2 + $0x468] sm:$0xff]
    %v203 = vld [vmem:[%s2 + $0x470] sm:$0xff]
    %v204 = vld [vmem:[%s2 + $0x478] sm:$0xff]
    %v205 = vld [vmem:[%s2 + $0x480] sm:$0xff]
    %v206 = vld [vmem:[%s2 + $0x488] sm:$0xff]
    %v207 = vld [vmem:[%s2 + $0x490] sm:$0xff]
    %v208 = vld [vmem:[%s2 + $0x498] sm:$0xff]
    %v209 = vld [vmem:[%s2 + $0x4a0] sm:$0xff]
    %v210 = vld [vmem:[%s2 + $0x4a8] sm:$0xff]
    %v211 = vld [vmem:[%s2 + $0x4b0] sm:$0xff]
    %v212 = vld [vmem:[%s2 + $0x4b8] sm:$0xff]
    %v213 = vld [vmem:[%s2 + $0x4c0] sm:$0xff]
    %v214 = vld [vmem:[%s2 + $0x4c8] sm:$0xff]
    %v215 = vld [vmem:[%s2 + $0x4d0] sm:$0xff]
    %v216 = vld [vmem:[%s2 + $0x4d8] sm:$0xff]
    %v217 = vld [vmem:[%s2 + $0x4e0] sm:$0xff]
    %v218 = vld [vmem:[%s2 + $0x4e8] sm:$0xff]
    %v219 = vld [vmem:[%s2 + $0x4f0] sm:$0xff]
    %v220 = vld [vmem:[%s2 + $0x4f8] sm:$0xff]
    %v221 = vld [vmem:[%s2 + $0x500] sm:$0xff]
    %v222 = vld [vmem:[%s2 + $0x508] sm:$0xff]
    %v223 = vld [vmem:[%s2 + $0x510] sm:$0xff]
    %v224 = vld [vmem:[%s2 + $0x518] sm:$0xff]
    %v225 = vld [vmem:[%s2 + $0x520] sm:$0xff]
    %v226 = vld [vmem:[%s2 + $0x528] sm:$0xff]
    %v227 = vld [vmem:[%s2 + $0x530] sm:$0xff]
    %v228 = vld [vmem:[%s2 + $0x538] sm:$0xff]
    %v229 = vld [vmem:[%s2 + $0x540] sm:$0xff]
    %v230 = vld [vmem:[%s2 + $0x548] sm:$0xff]
    %v231 = vld [vmem:[%s2 + $0x550] sm:$0xff]
    %v232 = vld [vmem:[%s2 + $0x558] sm:$0xff]
    %v233 = vld [vmem:[%s2 + $0x560] sm:$0xff]
    %v234 = vld [vmem:[%s2 + $0x568] sm:$0xff]
    %v235 = vld [vmem:[%s2 + $0x570] sm:$0xff]
    %v236 = vld [vmem:[%s2 + $0x578] sm:$0xff]
    %v237 = vld [vmem:[%s2 + $0x580] sm:$0xff]
    %v238 = vld [vmem:[%s2 + $0x588] sm:$0xff]
    %v239 = vld [vmem:[%s2 + $0x590] sm:$0xff]
    %v240 = vld [vmem:[%s2 + $0x598] sm:$0xff]
    %v241 = vld [vmem:[%s2 + $0x5a0] sm:$0xff]
    %v242 = vld [vmem:[%s2 + $0x5a8] sm:$0xff]
    %v243 = vld [vmem:[%s2 + $0x5b0] sm:$0xff]
    %v244 = vld [vmem:[%s2 + $0x5b8] sm:$0xff]
    %v245 = vld [vmem:[%s2 + $0x5c0] sm:$0xff]
    %v246 = vld [vmem:[%s2 + $0x5c8] sm:$0xff]
    %v247 = vld [vmem:[%s2 + $0x5d0] sm:$0xff]
    %v248 = vld [vmem:[%s2 + $0x5d8] sm:$0xff]
    %v249 = vld [vmem:[%s2 + $0x5e0] sm:$0xff]
    %v250 = vld [vmem:[%s2 + $0x5e8] sm:$0xff]
    %v251 = vld [vmem:[%s2 + $0x5f0] sm:$0xff]
    %v252 = vld [vmem:[%s2 + $0x5f8] sm:$0xff]
    %v253 = vld [vmem:[%s2 + $0x600] sm:$0xff]
    %v254 = vld [vmem:[%s2 + $0x608] sm:$0xff]
    %v255 = vld [vmem:[%s2 + $0x610] sm:$0xff]
    %v256 = vld [vmem:[%s2 + $0x618] sm:$0xff]
    %v257 = vld [vmem:[%s2 + $0x620] sm:$0xff]
    %v258 = vld [vmem:[%s2 + $0x628] sm:$0xff]
    %v259 = vld [vmem:[%s2 + $0x630] sm:$0xff]
    %v260 = vld [vmem:[%s2 + $0x638] sm:$0xff]
    %v261 = vld [vmem:[%s2 + $0x640] sm:$0xff]
    %v262 = vld [vmem:[%s2 + $0x648] sm:$0xff]
    %v263 = vld [vmem:[%s2 + $0x650] sm:$0xff]
    %v264 = vld [vmem:[%s2 + $0x658] sm:$0xff]
    %v265 = vld [vmem:[%s2 + $0x660] sm:$0xff]
    %v266 = vld [vmem:[%s2 + $0x668] sm:$0xff]
    %v267 = vld [vmem:[%s2 + $0x670] sm:$0xff]
    %v268 = vld [vmem:[%s2 + $0x678] sm:$0xff]
    %v269 = vld [vmem:[%s2 + $0x680] sm:$0xff]
    %v270 = vld [vmem:[%s2 + $0x688] sm:$0xff]
    %v271 = vld [vmem:[%s2 + $0x690] sm:$0xff]
    %v272 = vld [vmem:[%s2 + $0x698] sm:$0xff]
    %v273 = vld [vmem:[%s2 + $0x6a0] sm:$0xff]
    %v274 = vld [vmem:[%s2 + $0x6a8] sm:$0xff]
    %v275 = vld [vmem:[%s2 + $0x6b0] sm:$0xff]
    %v276 = vld [vmem:[%s2 + $0x6b8] sm:$0xff]
    %v277 = vld [vmem:[%s2 + $0x6c0] sm:$0xff]
    %v278 = vld [vmem:[%s2 + $0x6c8] sm:$0xff]
    %v279 = vld [vmem:[%s2 + $0x6d0] sm:$0xff]
    %v280 = vld [vmem:[%s2 + $0x6d8] sm:$0xff]
    %v281 = vld [vmem:[%s2 + $0x6e0] sm:$0xff]
    %v282 = vld [vmem:[%s2 + $0x6e8] sm:$0xff]
    %v283 = vld [vmem:[%s2 + $0x6f0] sm:$0xff]
    %v284 = vld [vmem:[%s2 + $0x6f8] sm:$0xff]
    %v285 = vld [vmem:[%s3] sm:$0xf]
    %v287 = vperm.slane %v285, 0
    %v288 = vperm.slane %v285, 1
    %v289 = vperm.slane %v285, 2
    %v290 = vperm.slane %v285, 3
    %v519 = vunpack.c.l.b16 %v61
    %v520 = vunpack.c.h.b16 %v61
    %v521 = vunpack.c.l.b16 %v62
    %v522 = vunpack.c.h.b16 %v62
    %v523 = vunpack.c.l.b16 %v63
    %v524 = vunpack.c.h.b16 %v63
    %v525 = vunpack.c.l.b16 %v64
    %v526 = vunpack.c.h.b16 %v64
    %v527 = vunpack.c.l.b16 %v65
    %v528 = vunpack.c.h.b16 %v65
    %v529 = vunpack.c.l.b16 %v66
    %v530 = vunpack.c.h.b16 %v66
    %v531 = vunpack.c.l.b16 %v67
    %v532 = vunpack.c.h.b16 %v67
    %v533 = vunpack.c.l.b16 %v68
    %v534 = vunpack.c.h.b16 %v68
    %v535 = vunpack.c.l.b16 %v69
    %v536 = vunpack.c.h.b16 %v69
    %v537 = vunpack.c.l.b16 %v70
    %v538 = vunpack.c.h.b16 %v70
    %v539 = vunpack.c.l.b16 %v71
    %v540 = vunpack.c.h.b16 %v71
    %v541 = vunpack.c.l.b16 %v72
    %v542 = vunpack.c.h.b16 %v72
    %v543 = vunpack.c.l.b16 %v73
    %v544 = vunpack.c.h.b16 %v73
    %v545 = vunpack.c.l.b16 %v74
    %v546 = vunpack.c.h.b16 %v74
    %v547 = vunpack.c.l.b16 %v75
    %v548 = vunpack.c.h.b16 %v75
    %v549 = vunpack.c.l.b16 %v76
    %v550 = vunpack.c.h.b16 %v76
    %v551 = vunpack.c.l.b16 %v77
    %v552 = vunpack.c.h.b16 %v77
    %v553 = vunpack.c.l.b16 %v78
    %v554 = vunpack.c.h.b16 %v78
    %v555 = vunpack.c.l.b16 %v79
    %v556 = vunpack.c.h.b16 %v79
    %v557 = vunpack.c.l.b16 %v80
    %v558 = vunpack.c.h.b16 %v80
    %v559 = vunpack.c.l.b16 %v81
    %v560 = vunpack.c.h.b16 %v81
    %v561 = vunpack.c.l.b16 %v82
    %v562 = vunpack.c.h.b16 %v82
    %v563 = vunpack.c.l.b16 %v83
    %v564 = vunpack.c.h.b16 %v83
    %v565 = vunpack.c.l.b16 %v84
    %v566 = vunpack.c.h.b16 %v84
    %v567 = vunpack.c.l.b16 %v85
    %v568 = vunpack.c.h.b16 %v85
    %v569 = vunpack.c.l.b16 %v86
    %v570 = vunpack.c.h.b16 %v86
    %v571 = vunpack.c.l.b16 %v87
    %v572 = vunpack.c.h.b16 %v87
    %v573 = vunpack.c.l.b16 %v88
    %v574 = vunpack.c.h.b16 %v88
    %v575 = vunpack.c.l.b16 %v89
    %v576 = vunpack.c.h.b16 %v89
    %v577 = vunpack.c.l.b16 %v90
    %v578 = vunpack.c.h.b16 %v90
    %v579 = vunpack.c.l.b16 %v91
    %v580 = vunpack.c.h.b16 %v91
    %v581 = vunpack.c.l.b16 %v92
    %v582 = vunpack.c.h.b16 %v92
    %v583 = vunpack.c.l.b16 %v93
    %v584 = vunpack.c.h.b16 %v93
    %v585 = vunpack.c.l.b16 %v94
    %v586 = vunpack.c.h.b16 %v94
    %v587 = vunpack.c.l.b16 %v95
    %v588 = vunpack.c.h.b16 %v95
    %v589 = vunpack.c.l.b16 %v96
    %v590 = vunpack.c.h.b16 %v96
    %v591 = vunpack.c.l.b16 %v97
    %v592 = vunpack.c.h.b16 %v97
    %v593 = vunpack.c.l.b16 %v98
    %v594 = vunpack.c.h.b16 %v98
    %v595 = vunpack.c.l.b16 %v99
    %v596 = vunpack.c.h.b16 %v99
    %v597 = vunpack.c.l.b16 %v100
    %v598 = vunpack.c.h.b16 %v100
    %v599 = vunpack.c.l.b16 %v101
    %v600 = vunpack.c.h.b16 %v101
    %v601 = vunpack.c.l.b16 %v102
    %v602 = vunpack.c.h.b16 %v102
    %v603 = vunpack.c.l.b16 %v103
    %v604 = vunpack.c.h.b16 %v103
    %v605 = vunpack.c.l.b16 %v104
    %v606 = vunpack.c.h.b16 %v104
    %v607 = vunpack.c.l.b16 %v105
    %v608 = vunpack.c.h.b16 %v105
    %v609 = vunpack.c.l.b16 %v106
    %v610 = vunpack.c.h.b16 %v106
    %v611 = vunpack.c.l.b16 %v107
    %v612 = vunpack.c.h.b16 %v107
    %v613 = vunpack.c.l.b16 %v108
    %v614 = vunpack.c.h.b16 %v108
    %v615 = vunpack.c.l.b16 %v109
    %v616 = vunpack.c.h.b16 %v109
    %v617 = vunpack.c.l.b16 %v110
    %v618 = vunpack.c.h.b16 %v110
    %v619 = vunpack.c.l.b16 %v111
    %v620 = vunpack.c.h.b16 %v111
    %v621 = vunpack.c.l.b16 %v112
    %v622 = vunpack.c.h.b16 %v112
    %v623 = vunpack.c.l.b16 %v113
    %v624 = vunpack.c.h.b16 %v113
    %v625 = vunpack.c.l.b16 %v114
    %v626 = vunpack.c.h.b16 %v114
    %v627 = vunpack.c.l.b16 %v115
    %v628 = vunpack.c.h.b16 %v115
    %v629 = vunpack.c.l.b16 %v116
    %v630 = vunpack.c.h.b16 %v116
    %v631 = vunpack.c.l.b16 %v117
    %v632 = vunpack.c.h.b16 %v117
    %v633 = vunpack.c.l.b16 %v118
    %v634 = vunpack.c.h.b16 %v118
    %v635 = vunpack.c.l.b16 %v119
    %v636 = vunpack.c.h.b16 %v119
    %v637 = vunpack.c.l.b16 %v120
    %v638 = vunpack.c.h.b16 %v120
    %v639 = vunpack.c.l.b16 %v121
    %v640 = vunpack.c.h.b16 %v121
    %v641 = vunpack.c.l.b16 %v122
    %v642 = vunpack.c.h.b16 %v122
    %v643 = vunpack.c.l.b16 %v123
    %v644 = vunpack.c.h.b16 %v123
    %v645 = vunpack.c.l.b16 %v124
    %v646 = vunpack.c.h.b16 %v124
    %v647 = vunpack.c.l.b16 %v125
    %v648 = vunpack.c.h.b16 %v125
    %v649 = vunpack.c.l.b16 %v126
    %v650 = vunpack.c.h.b16 %v126
    %v651 = vunpack.c.l.b16 %v127
    %v652 = vunpack.c.h.b16 %v127
    %v653 = vunpack.c.l.b16 %v128
    %v654 = vunpack.c.h.b16 %v128
    %v655 = vunpack.c.l.b16 %v129
    %v656 = vunpack.c.h.b16 %v129
    %v657 = vunpack.c.l.b16 %v130
    %v658 = vunpack.c.h.b16 %v130
    %v659 = vunpack.c.l.b16 %v131
    %v660 = vunpack.c.h.b16 %v131
    %v661 = vunpack.c.l.b16 %v132
    %v662 = vunpack.c.h.b16 %v132
    %v663 = vunpack.c.l.b16 %v133
    %v664 = vunpack.c.h.b16 %v133
    %v665 = vunpack.c.l.b16 %v134
    %v666 = vunpack.c.h.b16 %v134
    %v667 = vunpack.c.l.b16 %v135
    %v668 = vunpack.c.h.b16 %v135
    %v669 = vunpack.c.l.b16 %v136
    %v670 = vunpack.c.h.b16 %v136
    %v671 = vunpack.c.l.b16 %v137
    %v672 = vunpack.c.h.b16 %v137
    %v673 = vunpack.c.l.b16 %v138
    %v674 = vunpack.c.h.b16 %v138
    %v675 = vunpack.c.l.b16 %v139
    %v676 = vunpack.c.h.b16 %v139
    %v677 = vunpack.c.l.b16 %v140
    %v678 = vunpack.c.h.b16 %v140
    %v679 = vunpack.c.l.b16 %v141
    %v680 = vunpack.c.h.b16 %v141
    %v681 = vunpack.c.l.b16 %v142
    %v682 = vunpack.c.h.b16 %v142
    %v683 = vunpack.c.l.b16 %v143
    %v684 = vunpack.c.h.b16 %v143
    %v685 = vunpack.c.l.b16 %v144
    %v686 = vunpack.c.h.b16 %v144
    %v687 = vunpack.c.l.b16 %v145
    %v688 = vunpack.c.h.b16 %v145
    %v689 = vunpack.c.l.b16 %v146
    %v690 = vunpack.c.h.b16 %v146
    %v691 = vunpack.c.l.b16 %v147
    %v692 = vunpack.c.h.b16 %v147
    %v693 = vunpack.c.l.b16 %v148
    %v694 = vunpack.c.h.b16 %v148
    %v695 = vunpack.c.l.b16 %v149
    %v696 = vunpack.c.h.b16 %v149
    %v697 = vunpack.c.l.b16 %v150
    %v698 = vunpack.c.h.b16 %v150
    %v699 = vunpack.c.l.b16 %v151
    %v700 = vunpack.c.h.b16 %v151
    %v701 = vunpack.c.l.b16 %v152
    %v702 = vunpack.c.h.b16 %v152
    %v703 = vunpack.c.l.b16 %v153
    %v704 = vunpack.c.h.b16 %v153
    %v705 = vunpack.c.l.b16 %v154
    %v706 = vunpack.c.h.b16 %v154
    %v707 = vunpack.c.l.b16 %v155
    %v708 = vunpack.c.h.b16 %v155
    %v709 = vunpack.c.l.b16 %v156
    %v710 = vunpack.c.h.b16 %v156
    %v711 = vunpack.c.l.b16 %v157
    %v712 = vunpack.c.h.b16 %v157
    %v713 = vunpack.c.l.b16 %v158
    %v714 = vunpack.c.h.b16 %v158
    %v715 = vunpack.c.l.b16 %v159
    %v716 = vunpack.c.h.b16 %v159
    %v717 = vunpack.c.l.b16 %v160
    %v718 = vunpack.c.h.b16 %v160
    %v719 = vunpack.c.l.b16 %v161
    %v720 = vunpack.c.h.b16 %v161
    %v721 = vunpack.c.l.b16 %v162
    %v722 = vunpack.c.h.b16 %v162
    %v723 = vunpack.c.l.b16 %v163
    %v724 = vunpack.c.h.b16 %v163
    %v725 = vunpack.c.l.b16 %v164
    %v726 = vunpack.c.h.b16 %v164
    %v727 = vunpack.c.l.b16 %v165
    %v728 = vunpack.c.h.b16 %v165
    %v729 = vunpack.c.l.b16 %v166
    %v730 = vunpack.c.h.b16 %v166
    %v731 = vunpack.c.l.b16 %v167
    %v732 = vunpack.c.h.b16 %v167
    %v733 = vunpack.c.l.b16 %v168
    %v734 = vunpack.c.h.b16 %v168
    %v735 = vunpack.c.l.b16 %v169
    %v736 = vunpack.c.h.b16 %v169
    %v737 = vunpack.c.l.b16 %v170
    %v738 = vunpack.c.h.b16 %v170
    %v739 = vunpack.c.l.b16 %v171
    %v740 = vunpack.c.h.b16 %v171
    %v741 = vunpack.c.l.b16 %v172
    %v742 = vunpack.c.h.b16 %v172
    %v743 = vunpack.c.l.b16 %v173
    %v744 = vunpack.c.h.b16 %v173
    %v745 = vunpack.c.l.b16 %v174
    %v746 = vunpack.c.h.b16 %v174
    %v747 = vunpack.c.l.b16 %v175
    %v748 = vunpack.c.h.b16 %v175
    %v749 = vunpack.c.l.b16 %v176
    %v750 = vunpack.c.h.b16 %v176
    %v751 = vunpack.c.l.b16 %v177
    %v752 = vunpack.c.h.b16 %v177
    %v753 = vunpack.c.l.b16 %v178
    %v754 = vunpack.c.h.b16 %v178
    %v755 = vunpack.c.l.b16 %v179
    %v756 = vunpack.c.h.b16 %v179
    %v757 = vunpack.c.l.b16 %v180
    %v758 = vunpack.c.h.b16 %v180
    %v759 = vunpack.c.l.b16 %v181
    %v760 = vunpack.c.h.b16 %v181
    %v761 = vunpack.c.l.b16 %v182
    %v762 = vunpack.c.h.b16 %v182
    %v763 = vunpack.c.l.b16 %v183
    %v764 = vunpack.c.h.b16 %v183
    %v765 = vunpack.c.l.b16 %v184
    %v766 = vunpack.c.h.b16 %v184
    %v767 = vunpack.c.l.b16 %v185
    %v768 = vunpack.c.h.b16 %v185
    %v769 = vunpack.c.l.b16 %v186
    %v770 = vunpack.c.h.b16 %v186
    %v771 = vunpack.c.l.b16 %v187
    %v772 = vunpack.c.h.b16 %v187
    %v773 = vunpack.c.l.b16 %v188
    %v774 = vunpack.c.h.b16 %v188
    %v775 = vunpack.c.l.b16 %v189
    %v776 = vunpack.c.h.b16 %v189
    %v777 = vunpack.c.l.b16 %v190
    %v778 = vunpack.c.h.b16 %v190
    %v779 = vunpack.c.l.b16 %v191
    %v780 = vunpack.c.h.b16 %v191
    %v781 = vunpack.c.l.b16 %v192
    %v782 = vunpack.c.h.b16 %v192
    %v783 = vunpack.c.l.b16 %v193
    %v784 = vunpack.c.h.b16 %v193
    %v785 = vunpack.c.l.b16 %v194
    %v786 = vunpack.c.h.b16 %v194
    %v787 = vunpack.c.l.b16 %v195
    %v788 = vunpack.c.h.b16 %v195
    %v789 = vunpack.c.l.b16 %v196
    %v790 = vunpack.c.h.b16 %v196
    %v791 = vunpack.c.l.b16 %v197
    %v792 = vunpack.c.h.b16 %v197
    %v793 = vunpack.c.l.b16 %v198
    %v794 = vunpack.c.h.b16 %v198
    %v795 = vunpack.c.l.b16 %v199
    %v796 = vunpack.c.h.b16 %v199
    %v797 = vunpack.c.l.b16 %v200
    %v798 = vunpack.c.h.b16 %v200
    %v799 = vunpack.c.l.b16 %v201
    %v800 = vunpack.c.h.b16 %v201
    %v801 = vunpack.c.l.b16 %v202
    %v802 = vunpack.c.h.b16 %v202
    %v803 = vunpack.c.l.b16 %v203
    %v804 = vunpack.c.h.b16 %v203
    %v805 = vunpack.c.l.b16 %v204
    %v806 = vunpack.c.h.b16 %v204
    %v807 = vunpack.c.l.b16 %v205
    %v808 = vunpack.c.h.b16 %v205
    %v809 = vunpack.c.l.b16 %v206
    %v810 = vunpack.c.h.b16 %v206
    %v811 = vunpack.c.l.b16 %v207
    %v812 = vunpack.c.h.b16 %v207
    %v813 = vunpack.c.l.b16 %v208
    %v814 = vunpack.c.h.b16 %v208
    %v815 = vunpack.c.l.b16 %v209
    %v816 = vunpack.c.h.b16 %v209
    %v817 = vunpack.c.l.b16 %v210
    %v818 = vunpack.c.h.b16 %v210
    %v819 = vunpack.c.l.b16 %v211
    %v820 = vunpack.c.h.b16 %v211
    %v821 = vunpack.c.l.b16 %v212
    %v822 = vunpack.c.h.b16 %v212
    %v823 = vunpack.c.l.b16 %v213
    %v824 = vunpack.c.h.b16 %v213
    %v825 = vunpack.c.l.b16 %v214
    %v826 = vunpack.c.h.b16 %v214
    %v827 = vunpack.c.l.b16 %v215
    %v828 = vunpack.c.h.b16 %v215
    %v829 = vunpack.c.l.b16 %v216
    %v830 = vunpack.c.h.b16 %v216
    %v831 = vunpack.c.l.b16 %v217
    %v832 = vunpack.c.h.b16 %v217
    %v833 = vunpack.c.l.b16 %v218
    %v834 = vunpack.c.h.b16 %v218
    %v835 = vunpack.c.l.b16 %v219
    %v836 = vunpack.c.h.b16 %v219
    %v837 = vunpack.c.l.b16 %v220
    %v838 = vunpack.c.h.b16 %v220
    %v839 = vunpack.c.l.b16 %v221
    %v840 = vunpack.c.h.b16 %v221
    %v841 = vunpack.c.l.b16 %v222
    %v842 = vunpack.c.h.b16 %v222
    %v843 = vunpack.c.l.b16 %v223
    %v844 = vunpack.c.h.b16 %v223
    %v845 = vunpack.c.l.b16 %v224
    %v846 = vunpack.c.h.b16 %v224
    %v847 = vunpack.c.l.b16 %v225
    %v848 = vunpack.c.h.b16 %v225
    %v849 = vunpack.c.l.b16 %v226
    %v850 = vunpack.c.h.b16 %v226
    %v851 = vunpack.c.l.b16 %v227
    %v852 = vunpack.c.h.b16 %v227
    %v853 = vunpack.c.l.b16 %v228
    %v854 = vunpack.c.h.b16 %v228
    %v855 = vunpack.c.l.b16 %v229
    %v856 = vunpack.c.h.b16 %v229
    %v857 = vunpack.c.l.b16 %v230
    %v858 = vunpack.c.h.b16 %v230
    %v859 = vunpack.c.l.b16 %v231
    %v860 = vunpack.c.h.b16 %v231
    %v861 = vunpack.c.l.b16 %v232
    %v862 = vunpack.c.h.b16 %v232
    %v863 = vunpack.c.l.b16 %v233
    %v864 = vunpack.c.h.b16 %v233
    %v865 = vunpack.c.l.b16 %v234
    %v866 = vunpack.c.h.b16 %v234
    %v867 = vunpack.c.l.b16 %v235
    %v868 = vunpack.c.h.b16 %v235
    %v869 = vunpack.c.l.b16 %v236
    %v870 = vunpack.c.h.b16 %v236
    %v871 = vunpack.c.l.b16 %v237
    %v872 = vunpack.c.h.b16 %v237
    %v873 = vunpack.c.l.b16 %v238
    %v874 = vunpack.c.h.b16 %v238
    %v875 = vunpack.c.l.b16 %v239
    %v876 = vunpack.c.h.b16 %v239
    %v877 = vunpack.c.l.b16 %v240
    %v878 = vunpack.c.h.b16 %v240
    %v879 = vunpack.c.l.b16 %v241
    %v880 = vunpack.c.h.b16 %v241
    %v881 = vunpack.c.l.b16 %v242
    %v882 = vunpack.c.h.b16 %v242
    %v883 = vunpack.c.l.b16 %v243
    %v884 = vunpack.c.h.b16 %v243
    %v885 = vunpack.c.l.b16 %v244
    %v886 = vunpack.c.h.b16 %v244
    %v887 = vunpack.c.l.b16 %v245
    %v888 = vunpack.c.h.b16 %v245
    %v889 = vunpack.c.l.b16 %v246
    %v890 = vunpack.c.h.b16 %v246
    %v891 = vunpack.c.l.b16 %v247
    %v892 = vunpack.c.h.b16 %v247
    %v893 = vunpack.c.l.b16 %v248
    %v894 = vunpack.c.h.b16 %v248
    %v895 = vunpack.c.l.b16 %v249
    %v896 = vunpack.c.h.b16 %v249
    %v897 = vunpack.c.l.b16 %v250
    %v898 = vunpack.c.h.b16 %v250
    %v899 = vunpack.c.l.b16 %v251
    %v900 = vunpack.c.h.b16 %v251
    %v901 = vunpack.c.l.b16 %v252
    %v902 = vunpack.c.h.b16 %v252
    %v903 = vunpack.c.l.b16 %v253
    %v904 = vunpack.c.h.b16 %v253
    %v905 = vunpack.c.l.b16 %v254
    %v906 = vunpack.c.h.b16 %v254
    %v907 = vunpack.c.l.b16 %v255
    %v908 = vunpack.c.h.b16 %v255
    %v909 = vunpack.c.l.b16 %v256
    %v910 = vunpack.c.h.b16 %v256
    %v911 = vunpack.c.l.b16 %v257
    %v912 = vunpack.c.h.b16 %v257
    %v913 = vunpack.c.l.b16 %v258
    %v914 = vunpack.c.h.b16 %v258
    %v915 = vunpack.c.l.b16 %v259
    %v916 = vunpack.c.h.b16 %v259
    %v917 = vunpack.c.l.b16 %v260
    %v918 = vunpack.c.h.b16 %v260
    %v919 = vunpack.c.l.b16 %v261
    %v920 = vunpack.c.h.b16 %v261
    %v921 = vunpack.c.l.b16 %v262
    %v922 = vunpack.c.h.b16 %v262
    %v923 = vunpack.c.l.b16 %v263
    %v924 = vunpack.c.h.b16 %v263
    %v925 = vunpack.c.l.b16 %v264
    %v926 = vunpack.c.h.b16 %v264
    %v927 = vunpack.c.l.b16 %v265
    %v928 = vunpack.c.h.b16 %v265
    %v929 = vunpack.c.l.b16 %v266
    %v930 = vunpack.c.h.b16 %v266
    %v931 = vunpack.c.l.b16 %v267
    %v932 = vunpack.c.h.b16 %v267
    %v933 = vunpack.c.l.b16 %v268
    %v934 = vunpack.c.h.b16 %v268
    %v935 = vunpack.c.l.b16 %v269
    %v936 = vunpack.c.h.b16 %v269
    %v937 = vunpack.c.l.b16 %v270
    %v938 = vunpack.c.h.b16 %v270
    %v939 = vunpack.c.l.b16 %v271
    %v940 = vunpack.c.h.b16 %v271
    %v941 = vunpack.c.l.b16 %v272
    %v942 = vunpack.c.h.b16 %v272
    %v943 = vunpack.c.l.b16 %v273
    %v944 = vunpack.c.h.b16 %v273
    %v945 = vunpack.c.l.b16 %v274
    %v946 = vunpack.c.h.b16 %v274
    %v947 = vunpack.c.l.b16 %v275
    %v948 = vunpack.c.h.b16 %v275
    %v949 = vunpack.c.l.b16 %v276
    %v950 = vunpack.c.h.b16 %v276
    %v951 = vunpack.c.l.b16 %v277
    %v952 = vunpack.c.h.b16 %v277
    %v953 = vunpack.c.l.b16 %v278
    %v954 = vunpack.c.h.b16 %v278
    %v955 = vunpack.c.l.b16 %v279
    %v956 = vunpack.c.h.b16 %v279
    %v957 = vunpack.c.l.b16 %v280
    %v958 = vunpack.c.h.b16 %v280
    %v959 = vunpack.c.l.b16 %v281
    %v960 = vunpack.c.h.b16 %v281
    %v961 = vunpack.c.l.b16 %v282
    %v962 = vunpack.c.h.b16 %v282
    %v963 = vunpack.c.l.b16 %v283
    %v964 = vunpack.c.h.b16 %v283
    %v965 = vunpack.c.l.b16 %v284
    %v966 = vunpack.c.h.b16 %v284
    %v967 = vpack.c.b16 %v523, %v519
    %v968 = vpack.c.b16 %v524, %v520
    %v969 = vpack.c.b16 %v525, %v521
    %v970 = vpack.c.b16 %v526, %v522
    %v971 = vpack.c.b16 %v531, %v527
    %v972 = vpack.c.b16 %v532, %v528
    %v973 = vpack.c.b16 %v533, %v529
    %v974 = vpack.c.b16 %v534, %v530
    %v975 = vpack.c.b16 %v539, %v535
    %v976 = vpack.c.b16 %v540, %v536
    %v977 = vpack.c.b16 %v541, %v537
    %v978 = vpack.c.b16 %v542, %v538
    %v979 = vpack.c.b16 %v547, %v543
    %v980 = vpack.c.b16 %v548, %v544
    %v981 = vpack.c.b16 %v549, %v545
    %v982 = vpack.c.b16 %v550, %v546
    %v983 = vpack.c.b16 %v555, %v551
    %v984 = vpack.c.b16 %v556, %v552
    %v985 = vpack.c.b16 %v557, %v553
    %v986 = vpack.c.b16 %v558, %v554
    %v987 = vpack.c.b16 %v563, %v559
    %v988 = vpack.c.b16 %v564, %v560
    %v989 = vpack.c.b16 %v565, %v561
    %v990 = vpack.c.b16 %v566, %v562
    %v991 = vpack.c.b16 %v571, %v567
    %v992 = vpack.c.b16 %v572, %v568
    %v993 = vpack.c.b16 %v573, %v569
    %v994 = vpack.c.b16 %v574, %v570
    %v995 = vpack.c.b16 %v579, %v575
    %v996 = vpack.c.b16 %v580, %v576
    %v997 = vpack.c.b16 %v581, %v577
    %v998 = vpack.c.b16 %v582, %v578
    %v999 = vpack.c.b16 %v587, %v583
    %v1000 = vpack.c.b16 %v588, %v584
    %v1001 = vpack.c.b16 %v589, %v585
    %v1002 = vpack.c.b16 %v590, %v586
    %v1003 = vpack.c.b16 %v595, %v591
    %v1004 = vpack.c.b16 %v596, %v592
    %v1005 = vpack.c.b16 %v597, %v593
    %v1006 = vpack.c.b16 %v598, %v594
    %v1007 = vpack.c.b16 %v603, %v599
    %v1008 = vpack.c.b16 %v604, %v600
    %v1009 = vpack.c.b16 %v605, %v601
    %v1010 = vpack.c.b16 %v606, %v602
    %v1011 = vpack.c.b16 %v611, %v607
    %v1012 = vpack.c.b16 %v612, %v608
    %v1013 = vpack.c.b16 %v613, %v609
    %v1014 = vpack.c.b16 %v614, %v610
    %v1015 = vpack.c.b16 %v619, %v615
    %v1016 = vpack.c.b16 %v620, %v616
    %v1017 = vpack.c.b16 %v621, %v617
    %v1018 = vpack.c.b16 %v622, %v618
    %v1019 = vpack.c.b16 %v627, %v623
    %v1020 = vpack.c.b16 %v628, %v624
    %v1021 = vpack.c.b16 %v629, %v625
    %v1022 = vpack.c.b16 %v630, %v626
    %v1023 = vpack.c.b16 %v635, %v631
    %v1024 = vpack.c.b16 %v636, %v632
    %v1025 = vpack.c.b16 %v637, %v633
    %v1026 = vpack.c.b16 %v638, %v634
    %v1027 = vpack.c.b16 %v643, %v639
    %v1028 = vpack.c.b16 %v644, %v640
    %v1029 = vpack.c.b16 %v645, %v641
    %v1030 = vpack.c.b16 %v646, %v642
    %v1031 = vpack.c.b16 %v651, %v647
    %v1032 = vpack.c.b16 %v652, %v648
    %v1033 = vpack.c.b16 %v653, %v649
    %v1034 = vpack.c.b16 %v654, %v650
    %v1035 = vpack.c.b16 %v659, %v655
    %v1036 = vpack.c.b16 %v660, %v656
    %v1037 = vpack.c.b16 %v661, %v657
    %v1038 = vpack.c.b16 %v662, %v658
    %v1039 = vpack.c.b16 %v667, %v663
    %v1040 = vpack.c.b16 %v668, %v664
    %v1041 = vpack.c.b16 %v669, %v665
    %v1042 = vpack.c.b16 %v670, %v666
    %v1043 = vpack.c.b16 %v675, %v671
    %v1044 = vpack.c.b16 %v676, %v672
    %v1045 = vpack.c.b16 %v677, %v673
    %v1046 = vpack.c.b16 %v678, %v674
    %v1047 = vpack.c.b16 %v683, %v679
    %v1048 = vpack.c.b16 %v684, %v680
    %v1049 = vpack.c.b16 %v685, %v681
    %v1050 = vpack.c.b16 %v686, %v682
    %v1051 = vpack.c.b16 %v691, %v687
    %v1052 = vpack.c.b16 %v692, %v688
    %v1053 = vpack.c.b16 %v693, %v689
    %v1054 = vpack.c.b16 %v694, %v690
    %v1055 = vpack.c.b16 %v699, %v695
    %v1056 = vpack.c.b16 %v700, %v696
    %v1057 = vpack.c.b16 %v701, %v697
    %v1058 = vpack.c.b16 %v702, %v698
    %v1059 = vpack.c.b16 %v707, %v703
    %v1060 = vpack.c.b16 %v708, %v704
    %v1061 = vpack.c.b16 %v709, %v705
    %v1062 = vpack.c.b16 %v710, %v706
    %v1063 = vpack.c.b16 %v715, %v711
    %v1064 = vpack.c.b16 %v716, %v712
    %v1065 = vpack.c.b16 %v717, %v713
    %v1066 = vpack.c.b16 %v718, %v714
    %v1067 = vpack.c.b16 %v723, %v719
    %v1068 = vpack.c.b16 %v724, %v720
    %v1069 = vpack.c.b16 %v725, %v721
    %v1070 = vpack.c.b16 %v726, %v722
    %v1071 = vpack.c.b16 %v731, %v727
    %v1072 = vpack.c.b16 %v732, %v728
    %v1073 = vpack.c.b16 %v733, %v729
    %v1074 = vpack.c.b16 %v734, %v730
    %v1075 = vpack.c.b16 %v739, %v735
    %v1076 = vpack.c.b16 %v740, %v736
    %v1077 = vpack.c.b16 %v741, %v737
    %v1078 = vpack.c.b16 %v742, %v738
    %v1079 = vpack.c.b16 %v747, %v743
    %v1080 = vpack.c.b16 %v748, %v744
    %v1081 = vpack.c.b16 %v749, %v745
    %v1082 = vpack.c.b16 %v750, %v746
    %v1083 = vpack.c.b16 %v755, %v751
    %v1084 = vpack.c.b16 %v756, %v752
    %v1085 = vpack.c.b16 %v757, %v753
    %v1086 = vpack.c.b16 %v758, %v754
    %v1087 = vpack.c.b16 %v763, %v759
    %v1088 = vpack.c.b16 %v764, %v760
    %v1089 = vpack.c.b16 %v765, %v761
    %v1090 = vpack.c.b16 %v766, %v762
    %v1091 = vpack.c.b16 %v771, %v767
    %v1092 = vpack.c.b16 %v772, %v768
    %v1093 = vpack.c.b16 %v773, %v769
    %v1094 = vpack.c.b16 %v774, %v770
    %v1095 = vpack.c.b16 %v779, %v775
    %v1096 = vpack.c.b16 %v780, %v776
    %v1097 = vpack.c.b16 %v781, %v777
    %v1098 = vpack.c.b16 %v782, %v778
    %v1099 = vpack.c.b16 %v787, %v783
    %v1100 = vpack.c.b16 %v788, %v784
    %v1101 = vpack.c.b16 %v789, %v785
    %v1102 = vpack.c.b16 %v790, %v786
    %v1103 = vpack.c.b16 %v795, %v791
    %v1104 = vpack.c.b16 %v796, %v792
    %v1105 = vpack.c.b16 %v797, %v793
    %v1106 = vpack.c.b16 %v798, %v794
    %v1107 = vpack.c.b16 %v803, %v799
    %v1108 = vpack.c.b16 %v804, %v800
    %v1109 = vpack.c.b16 %v805, %v801
    %v1110 = vpack.c.b16 %v806, %v802
    %v1111 = vpack.c.b16 %v811, %v807
    %v1112 = vpack.c.b16 %v812, %v808
    %v1113 = vpack.c.b16 %v813, %v809
    %v1114 = vpack.c.b16 %v814, %v810
    %v1115 = vpack.c.b16 %v819, %v815
    %v1116 = vpack.c.b16 %v820, %v816
    %v1117 = vpack.c.b16 %v821, %v817
    %v1118 = vpack.c.b16 %v822, %v818
    %v1119 = vpack.c.b16 %v827, %v823
    %v1120 = vpack.c.b16 %v828, %v824
    %v1121 = vpack.c.b16 %v829, %v825
    %v1122 = vpack.c.b16 %v830, %v826
    %v1123 = vpack.c.b16 %v835, %v831
    %v1124 = vpack.c.b16 %v836, %v832
    %v1125 = vpack.c.b16 %v837, %v833
    %v1126 = vpack.c.b16 %v838, %v834
    %v1127 = vpack.c.b16 %v843, %v839
    %v1128 = vpack.c.b16 %v844, %v840
    %v1129 = vpack.c.b16 %v845, %v841
    %v1130 = vpack.c.b16 %v846, %v842
    %v1131 = vpack.c.b16 %v851, %v847
    %v1132 = vpack.c.b16 %v852, %v848
    %v1133 = vpack.c.b16 %v853, %v849
    %v1134 = vpack.c.b16 %v854, %v850
    %v1135 = vpack.c.b16 %v859, %v855
    %v1136 = vpack.c.b16 %v860, %v856
    %v1137 = vpack.c.b16 %v861, %v857
    %v1138 = vpack.c.b16 %v862, %v858
    %v1139 = vpack.c.b16 %v867, %v863
    %v1140 = vpack.c.b16 %v868, %v864
    %v1141 = vpack.c.b16 %v869, %v865
    %v1142 = vpack.c.b16 %v870, %v866
    %v1143 = vpack.c.b16 %v875, %v871
    %v1144 = vpack.c.b16 %v876, %v872
    %v1145 = vpack.c.b16 %v877, %v873
    %v1146 = vpack.c.b16 %v878, %v874
    %v1147 = vpack.c.b16 %v883, %v879
    %v1148 = vpack.c.b16 %v884, %v880
    %v1149 = vpack.c.b16 %v885, %v881
    %v1150 = vpack.c.b16 %v886, %v882
    %v1151 = vpack.c.b16 %v891, %v887
    %v1152 = vpack.c.b16 %v892, %v888
    %v1153 = vpack.c.b16 %v893, %v889
    %v1154 = vpack.c.b16 %v894, %v890
    %v1155 = vpack.c.b16 %v899, %v895
    %v1156 = vpack.c.b16 %v900, %v896
    %v1157 = vpack.c.b16 %v901, %v897
    %v1158 = vpack.c.b16 %v902, %v898
    %v1159 = vpack.c.b16 %v907, %v903
    %v1160 = vpack.c.b16 %v908, %v904
    %v1161 = vpack.c.b16 %v909, %v905
    %v1162 = vpack.c.b16 %v910, %v906
    %v1163 = vpack.c.b16 %v915, %v911
    %v1164 = vpack.c.b16 %v916, %v912
    %v1165 = vpack.c.b16 %v917, %v913
    %v1166 = vpack.c.b16 %v918, %v914
    %v1167 = vpack.c.b16 %v923, %v919
    %v1168 = vpack.c.b16 %v924, %v920
    %v1169 = vpack.c.b16 %v925, %v921
    %v1170 = vpack.c.b16 %v926, %v922
    %v1171 = vpack.c.b16 %v931, %v927
    %v1172 = vpack.c.b16 %v932, %v928
    %v1173 = vpack.c.b16 %v933, %v929
    %v1174 = vpack.c.b16 %v934, %v930
    %v1175 = vpack.c.b16 %v939, %v935
    %v1176 = vpack.c.b16 %v940, %v936
    %v1177 = vpack.c.b16 %v941, %v937
    %v1178 = vpack.c.b16 %v942, %v938
    %v1179 = vpack.c.b16 %v947, %v943
    %v1180 = vpack.c.b16 %v948, %v944
    %v1181 = vpack.c.b16 %v949, %v945
    %v1182 = vpack.c.b16 %v950, %v946
    %v1183 = vpack.c.b16 %v955, %v951
    %v1184 = vpack.c.b16 %v956, %v952
    %v1185 = vpack.c.b16 %v957, %v953
    %v1186 = vpack.c.b16 %v958, %v954
    %v1187 = vpack.c.b16 %v963, %v959
    %v1188 = vpack.c.b16 %v964, %v960
    %v1189 = vpack.c.b16 %v965, %v961
    %v1190 = vpack.c.b16 %v966, %v962
    %1415 = vmatpush.bf16.msra.mxu0 %v995
    %1416 = vmatpush.bf16.msra.mxu0 %v991
    %1417 = vmatpush.bf16.msra.mxu0 %v987
    %1418 = vmatpush.bf16.msra.mxu0 %v983
    %1419 = vmatpush.bf16.msra.mxu0 %v979
    %1420 = vmatpush.bf16.msra.mxu0 %v975
    %1421 = vmatpush.bf16.msra.mxu0 %v971
    %1422 = vmatpush.bf16.msra.mxu0 %v967
    %1423 = vmatmul.bf16.gmra.mxu0 %v54
    %v1424 = vpop.f32.mrf.mxu0
    %v1425 = vadd.f32 %v287, %v1424
    %v1426 = vpop.f32.mrf.mxu0
    %v1427 = vadd.f32 %v287, %v1426
    %1428 = vdwg.mxu0
    %1429 = vmatpush.bf16.msra.mxu0 %v1027
    %1430 = vmatpush.bf16.msra.mxu0 %v1023
    %1431 = vmatpush.bf16.msra.mxu0 %v1019
    %1432 = vmatpush.bf16.msra.mxu0 %v1015
    %1433 = vmatpush.bf16.msra.mxu0 %v1011
    %1434 = vmatpush.bf16.msra.mxu0 %v1007
    %1435 = vmatpush.bf16.msra.mxu0 %v1003
    %1436 = vmatpush.bf16.msra.mxu0 %v999
    %1437 = vmatmul.bf16.gmra.mxu0 %v55
    %v1438 = vpop.f32.mrf.mxu0
    %v1439 = vadd.f32 %v1425, %v1438
    %v1440 = vpop.f32.mrf.mxu0
    %v1441 = vadd.f32 %v1427, %v1440
    %1442 = vdwg.mxu0
    %1443 = vmatpush.bf16.msra.mxu0 %v1059
    %1444 = vmatpush.bf16.msra.mxu0 %v1055
    %1445 = vmatpush.bf16.msra.mxu0 %v1051
    %1446 = vmatpush.bf16.msra.mxu0 %v1047
    %1447 = vmatpush.bf16.msra.mxu0 %v1043
    %1448 = vmatpush.bf16.msra.mxu0 %v1039
    %1449 = vmatpush.bf16.msra.mxu0 %v1035
    %1450 = vmatpush.bf16.msra.mxu0 %v1031
    %1451 = vmatmul.bf16.gmra.mxu0 %v56
    %v1452 = vpop.f32.mrf.mxu0
    %v1453 = vadd.f32 %v1439, %v1452
    %v1454 = vpop.f32.mrf.mxu0
    %v1455 = vadd.f32 %v1441, %v1454
    %1456 = vdwg.mxu0
    %1457 = vmatpush.bf16.msra.mxu0 %v1091
    %1458 = vmatpush.bf16.msra.mxu0 %v1087
    %1459 = vmatpush.bf16.msra.mxu0 %v1083
    %1460 = vmatpush.bf16.msra.mxu0 %v1079
    %1461 = vmatpush.bf16.msra.mxu0 %v1075
    %1462 = vmatpush.bf16.msra.mxu0 %v1071
    %1463 = vmatpush.bf16.msra.mxu0 %v1067
    %1464 = vmatpush.bf16.msra.mxu0 %v1063
    %1465 = vmatmul.bf16.gmra.mxu0 %v57
    %v1466 = vpop.f32.mrf.mxu0
    %v1467 = vadd.f32 %v1453, %v1466
    %v1468 = vpop.f32.mrf.mxu0
    %v1469 = vadd.f32 %v1455, %v1468
    %1470 = vdwg.mxu0
    %1471 = vmatpush.bf16.msra.mxu0 %v1123
    %1472 = vmatpush.bf16.msra.mxu0 %v1119
    %1473 = vmatpush.bf16.msra.mxu0 %v1115
    %1474 = vmatpush.bf16.msra.mxu0 %v1111
    %1475 = vmatpush.bf16.msra.mxu0 %v1107
    %1476 = vmatpush.bf16.msra.mxu0 %v1103
    %1477 = vmatpush.bf16.msra.mxu0 %v1099
    %1478 = vmatpush.bf16.msra.mxu0 %v1095
    %1479 = vmatmul.bf16.gmra.mxu0 %v58
    %v1480 = vpop.f32.mrf.mxu0
    %v1481 = vadd.f32 %v1467, %v1480
    %v1482 = vpop.f32.mrf.mxu0
    %v1483 = vadd.f32 %v1469, %v1482
    %1484 = vdwg.mxu0
    %1485 = vmatpush.bf16.msra.mxu0 %v1155
    %1486 = vmatpush.bf16.msra.mxu0 %v1151
    %1487 = vmatpush.bf16.msra.mxu0 %v1147
    %1488 = vmatpush.bf16.msra.mxu0 %v1143
    %1489 = vmatpush.bf16.msra.mxu0 %v1139
    %1490 = vmatpush.bf16.msra.mxu0 %v1135
    %1491 = vmatpush.bf16.msra.mxu0 %v1131
    %1492 = vmatpush.bf16.msra.mxu0 %v1127
    %1493 = vmatmul.bf16.gmra.mxu0 %v59
    %v1494 = vpop.f32.mrf.mxu0
    %v1495 = vadd.f32 %v1481, %v1494
    %v1496 = vpop.f32.mrf.mxu0
    %v1497 = vadd.f32 %v1483, %v1496
    %1498 = vdwg.mxu0
    %1499 = vmatpush.bf16.msra.mxu0 %v1187
    %1500 = vmatpush.bf16.msra.mxu0 %v1183
    %1501 = vmatpush.bf16.msra.mxu0 %v1179
    %1502 = vmatpush.bf16.msra.mxu0 %v1175
    %1503 = vmatpush.bf16.msra.mxu0 %v1171
    %1504 = vmatpush.bf16.msra.mxu0 %v1167
    %1505 = vmatpush.bf16.msra.mxu0 %v1163
    %1506 = vmatpush.bf16.msra.mxu0 %v1159
    %1507 = vmatmul.bf16.gmra.mxu0 %v60
    %v1508 = vpop.f32.mrf.mxu0
    %v1509 = vadd.f32 %v1495, %v1508
    %v1510 = vpop.f32.mrf.mxu0
    %v1511 = vadd.f32 %v1497, %v1510
    %1512 = vdwg.mxu0
    %1513 = vmatpush.bf16.msra.mxu0 %v996
    %1514 = vmatpush.bf16.msra.mxu0 %v992
    %1515 = vmatpush.bf16.msra.mxu0 %v988
    %1516 = vmatpush.bf16.msra.mxu0 %v984
    %1517 = vmatpush.bf16.msra.mxu0 %v980
    %1518 = vmatpush.bf16.msra.mxu0 %v976
    %1519 = vmatpush.bf16.msra.mxu0 %v972
    %1520 = vmatpush.bf16.msra.mxu0 %v968
    %1521 = vmatmul.bf16.gmra.mxu0 %v54
    %v1522 = vpop.f32.mrf.mxu0
    %v1523 = vadd.f32 %v288, %v1522
    %v1524 = vpop.f32.mrf.mxu0
    %v1525 = vadd.f32 %v288, %v1524
    %1526 = vdwg.mxu0
    %1527 = vmatpush.bf16.msra.mxu0 %v1028
    %1528 = vmatpush.bf16.msra.mxu0 %v1024
    %1529 = vmatpush.bf16.msra.mxu0 %v1020
    %1530 = vmatpush.bf16.msra.mxu0 %v1016
    %1531 = vmatpush.bf16.msra.mxu0 %v1012
    %1532 = vmatpush.bf16.msra.mxu0 %v1008
    %1533 = vmatpush.bf16.msra.mxu0 %v1004
    %1534 = vmatpush.bf16.msra.mxu0 %v1000
    %1535 = vmatmul.bf16.gmra.mxu0 %v55
    %v1536 = vpop.f32.mrf.mxu0
    %v1537 = vadd.f32 %v1523, %v1536
    %v1538 = vpop.f32.mrf.mxu0
    %v1539 = vadd.f32 %v1525, %v1538
    %1540 = vdwg.mxu0
    %1541 = vmatpush.bf16.msra.mxu0 %v1060
    %1542 = vmatpush.bf16.msra.mxu0 %v1056
    %1543 = vmatpush.bf16.msra.mxu0 %v1052
    %1544 = vmatpush.bf16.msra.mxu0 %v1048
    %1545 = vmatpush.bf16.msra.mxu0 %v1044
    %1546 = vmatpush.bf16.msra.mxu0 %v1040
    %1547 = vmatpush.bf16.msra.mxu0 %v1036
    %1548 = vmatpush.bf16.msra.mxu0 %v1032
    %1549 = vmatmul.bf16.gmra.mxu0 %v56
    %v1550 = vpop.f32.mrf.mxu0
    %v1551 = vadd.f32 %v1537, %v1550
    %v1552 = vpop.f32.mrf.mxu0
    %v1553 = vadd.f32 %v1539, %v1552
    %1554 = vdwg.mxu0
    %1555 = vmatpush.bf16.msra.mxu0 %v1092
    %1556 = vmatpush.bf16.msra.mxu0 %v1088
    %1557 = vmatpush.bf16.msra.mxu0 %v1084
    %1558 = vmatpush.bf16.msra.mxu0 %v1080
    %1559 = vmatpush.bf16.msra.mxu0 %v1076
    %1560 = vmatpush.bf16.msra.mxu0 %v1072
    %1561 = vmatpush.bf16.msra.mxu0 %v1068
    %1562 = vmatpush.bf16.msra.mxu0 %v1064
    %1563 = vmatmul.bf16.gmra.mxu0 %v57
    %v1564 = vpop.f32.mrf.mxu0
    %v1565 = vadd.f32 %v1551, %v1564
    %v1566 = vpop.f32.mrf.mxu0
    %v1567 = vadd.f32 %v1553, %v1566
    %1568 = vdwg.mxu0
    %1569 = vmatpush.bf16.msra.mxu0 %v1124
    %1570 = vmatpush.bf16.msra.mxu0 %v1120
    %1571 = vmatpush.bf16.msra.mxu0 %v1116
    %1572 = vmatpush.bf16.msra.mxu0 %v1112
    %1573 = vmatpush.bf16.msra.mxu0 %v1108
    %1574 = vmatpush.bf16.msra.mxu0 %v1104
    %1575 = vmatpush.bf16.msra.mxu0 %v1100
    %1576 = vmatpush.bf16.msra.mxu0 %v1096
    %1577 = vmatmul.bf16.gmra.mxu0 %v58
    %v1578 = vpop.f32.mrf.mxu0
    %v1579 = vadd.f32 %v1565, %v1578
    %v1580 = vpop.f32.mrf.mxu0
    %v1581 = vadd.f32 %v1567, %v1580
    %1582 = vdwg.mxu0
    %1583 = vmatpush.bf16.msra.mxu0 %v1156
    %1584 = vmatpush.bf16.msra.mxu0 %v1152
    %1585 = vmatpush.bf16.msra.mxu0 %v1148
    %1586 = vmatpush.bf16.msra.mxu0 %v1144
    %1587 = vmatpush.bf16.msra.mxu0 %v1140
    %1588 = vmatpush.bf16.msra.mxu0 %v1136
    %1589 = vmatpush.bf16.msra.mxu0 %v1132
    %1590 = vmatpush.bf16.msra.mxu0 %v1128
    %1591 = vmatmul.bf16.gmra.mxu0 %v59
    %v1592 = vpop.f32.mrf.mxu0
    %v1593 = vadd.f32 %v1579, %v1592
    %v1594 = vpop.f32.mrf.mxu0
    %v1595 = vadd.f32 %v1581, %v1594
    %1596 = vdwg.mxu0
    %1597 = vmatpush.bf16.msra.mxu0 %v1188
    %1598 = vmatpush.bf16.msra.mxu0 %v1184
    %1599 = vmatpush.bf16.msra.mxu0 %v1180
    %1600 = vmatpush.bf16.msra.mxu0 %v1176
    %1601 = vmatpush.bf16.msra.mxu0 %v1172
    %1602 = vmatpush.bf16.msra.mxu0 %v1168
    %1603 = vmatpush.bf16.msra.mxu0 %v1164
    %1604 = vmatpush.bf16.msra.mxu0 %v1160
    %1605 = vmatmul.bf16.gmra.mxu0 %v60
    %v1606 = vpop.f32.mrf.mxu0
    %v1607 = vadd.f32 %v1593, %v1606
    %v1608 = vpop.f32.mrf.mxu0
    %v1609 = vadd.f32 %v1595, %v1608
    %1610 = vdwg.mxu0
    %1611 = vmatpush.bf16.msra.mxu0 %v997
    %1612 = vmatpush.bf16.msra.mxu0 %v993
    %1613 = vmatpush.bf16.msra.mxu0 %v989
    %1614 = vmatpush.bf16.msra.mxu0 %v985
    %1615 = vmatpush.bf16.msra.mxu0 %v981
    %1616 = vmatpush.bf16.msra.mxu0 %v977
    %1617 = vmatpush.bf16.msra.mxu0 %v973
    %1618 = vmatpush.bf16.msra.mxu0 %v969
    %1619 = vmatmul.bf16.gmra.mxu0 %v54
    %v1620 = vpop.f32.mrf.mxu0
    %v1621 = vadd.f32 %v289, %v1620
    %v1622 = vpop.f32.mrf.mxu0
    %v1623 = vadd.f32 %v289, %v1622
    %1624 = vdwg.mxu0
    %1625 = vmatpush.bf16.msra.mxu0 %v1029
    %1626 = vmatpush.bf16.msra.mxu0 %v1025
    %1627 = vmatpush.bf16.msra.mxu0 %v1021
    %1628 = vmatpush.bf16.msra.mxu0 %v1017
    %1629 = vmatpush.bf16.msra.mxu0 %v1013
    %1630 = vmatpush.bf16.msra.mxu0 %v1009
    %1631 = vmatpush.bf16.msra.mxu0 %v1005
    %1632 = vmatpush.bf16.msra.mxu0 %v1001
    %1633 = vmatmul.bf16.gmra.mxu0 %v55
    %v1634 = vpop.f32.mrf.mxu0
    %v1635 = vadd.f32 %v1621, %v1634
    %v1636 = vpop.f32.mrf.mxu0
    %v1637 = vadd.f32 %v1623, %v1636
    %1638 = vdwg.mxu0
    %1639 = vmatpush.bf16.msra.mxu0 %v1061
    %1640 = vmatpush.bf16.msra.mxu0 %v1057
    %1641 = vmatpush.bf16.msra.mxu0 %v1053
    %1642 = vmatpush.bf16.msra.mxu0 %v1049
    %1643 = vmatpush.bf16.msra.mxu0 %v1045
    %1644 = vmatpush.bf16.msra.mxu0 %v1041
    %1645 = vmatpush.bf16.msra.mxu0 %v1037
    %1646 = vmatpush.bf16.msra.mxu0 %v1033
    %1647 = vmatmul.bf16.gmra.mxu0 %v56
    %v1648 = vpop.f32.mrf.mxu0
    %v1649 = vadd.f32 %v1635, %v1648
    %v1650 = vpop.f32.mrf.mxu0
    %v1651 = vadd.f32 %v1637, %v1650
    %1652 = vdwg.mxu0
    %1653 = vmatpush.bf16.msra.mxu0 %v1093
    %1654 = vmatpush.bf16.msra.mxu0 %v1089
    %1655 = vmatpush.bf16.msra.mxu0 %v1085
    %1656 = vmatpush.bf16.msra.mxu0 %v1081
    %1657 = vmatpush.bf16.msra.mxu0 %v1077
    %1658 = vmatpush.bf16.msra.mxu0 %v1073
    %1659 = vmatpush.bf16.msra.mxu0 %v1069
    %1660 = vmatpush.bf16.msra.mxu0 %v1065
    %1661 = vmatmul.bf16.gmra.mxu0 %v57
    %v1662 = vpop.f32.mrf.mxu0
    %v1663 = vadd.f32 %v1649, %v1662
    %v1664 = vpop.f32.mrf.mxu0
    %v1665 = vadd.f32 %v1651, %v1664
    %1666 = vdwg.mxu0
    %1667 = vmatpush.bf16.msra.mxu0 %v1125
    %1668 = vmatpush.bf16.msra.mxu0 %v1121
    %1669 = vmatpush.bf16.msra.mxu0 %v1117
    %1670 = vmatpush.bf16.msra.mxu0 %v1113
    %1671 = vmatpush.bf16.msra.mxu0 %v1109
    %1672 = vmatpush.bf16.msra.mxu0 %v1105
    %1673 = vmatpush.bf16.msra.mxu0 %v1101
    %1674 = vmatpush.bf16.msra.mxu0 %v1097
    %1675 = vmatmul.bf16.gmra.mxu0 %v58
    %v1676 = vpop.f32.mrf.mxu0
    %v1677 = vadd.f32 %v1663, %v1676
    %v1678 = vpop.f32.mrf.mxu0
    %v1679 = vadd.f32 %v1665, %v1678
    %1680 = vdwg.mxu0
    %1681 = vmatpush.bf16.msra.mxu0 %v1157
    %1682 = vmatpush.bf16.msra.mxu0 %v1153
    %1683 = vmatpush.bf16.msra.mxu0 %v1149
    %1684 = vmatpush.bf16.msra.mxu0 %v1145
    %1685 = vmatpush.bf16.msra.mxu0 %v1141
    %1686 = vmatpush.bf16.msra.mxu0 %v1137
    %1687 = vmatpush.bf16.msra.mxu0 %v1133
    %1688 = vmatpush.bf16.msra.mxu0 %v1129
    %1689 = vmatmul.bf16.gmra.mxu0 %v59
    %v1690 = vpop.f32.mrf.mxu0
    %v1691 = vadd.f32 %v1677, %v1690
    %v1692 = vpop.f32.mrf.mxu0
    %v1693 = vadd.f32 %v1679, %v1692
    %1694 = vdwg.mxu0
    %1695 = vmatpush.bf16.msra.mxu0 %v1189
    %1696 = vmatpush.bf16.msra.mxu0 %v1185
    %1697 = vmatpush.bf16.msra.mxu0 %v1181
    %1698 = vmatpush.bf16.msra.mxu0 %v1177
    %1699 = vmatpush.bf16.msra.mxu0 %v1173
    %1700 = vmatpush.bf16.msra.mxu0 %v1169
    %1701 = vmatpush.bf16.msra.mxu0 %v1165
    %1702 = vmatpush.bf16.msra.mxu0 %v1161
    %1703 = vmatmul.bf16.gmra.mxu0 %v60
    %v1704 = vpop.f32.mrf.mxu0
    %v1705 = vadd.f32 %v1691, %v1704
    %v1706 = vpop.f32.mrf.mxu0
    %v1707 = vadd.f32 %v1693, %v1706
    %1708 = vdwg.mxu0
    %1709 = vmatpush.bf16.msra.mxu0 %v998
    %1710 = vmatpush.bf16.msra.mxu0 %v994
    %1711 = vmatpush.bf16.msra.mxu0 %v990
    %1712 = vmatpush.bf16.msra.mxu0 %v986
    %1713 = vmatpush.bf16.msra.mxu0 %v982
    %1714 = vmatpush.bf16.msra.mxu0 %v978
    %1715 = vmatpush.bf16.msra.mxu0 %v974
    %1716 = vmatpush.bf16.msra.mxu0 %v970
    %1717 = vmatmul.bf16.gmra.mxu0 %v54
    %v1718 = vpop.f32.mrf.mxu0
    %v1719 = vadd.f32 %v290, %v1718
    %v1720 = vpop.f32.mrf.mxu0
    %v1721 = vadd.f32 %v290, %v1720
    %1722 = vdwg.mxu0
    %1723 = vmatpush.bf16.msra.mxu0 %v1030
    %1724 = vmatpush.bf16.msra.mxu0 %v1026
    %1725 = vmatpush.bf16.msra.mxu0 %v1022
    %1726 = vmatpush.bf16.msra.mxu0 %v1018
    %1727 = vmatpush.bf16.msra.mxu0 %v1014
    %1728 = vmatpush.bf16.msra.mxu0 %v1010
    %1729 = vmatpush.bf16.msra.mxu0 %v1006
    %1730 = vmatpush.bf16.msra.mxu0 %v1002
    %1731 = vmatmul.bf16.gmra.mxu0 %v55
    %v1732 = vpop.f32.mrf.mxu0
    %v1733 = vadd.f32 %v1719, %v1732
    %v1734 = vpop.f32.mrf.mxu0
    %v1735 = vadd.f32 %v1721, %v1734
    %1736 = vdwg.mxu0
    %1737 = vmatpush.bf16.msra.mxu0 %v1062
    %1738 = vmatpush.bf16.msra.mxu0 %v1058
    %1739 = vmatpush.bf16.msra.mxu0 %v1054
    %1740 = vmatpush.bf16.msra.mxu0 %v1050
    %1741 = vmatpush.bf16.msra.mxu0 %v1046
    %1742 = vmatpush.bf16.msra.mxu0 %v1042
    %1743 = vmatpush.bf16.msra.mxu0 %v1038
    %1744 = vmatpush.bf16.msra.mxu0 %v1034
    %1745 = vmatmul.bf16.gmra.mxu0 %v56
    %v1746 = vpop.f32.mrf.mxu0
    %v1747 = vadd.f32 %v1733, %v1746
    %v1748 = vpop.f32.mrf.mxu0
    %v1749 = vadd.f32 %v1735, %v1748
    %1750 = vdwg.mxu0
    %1751 = vmatpush.bf16.msra.mxu0 %v1094
    %1752 = vmatpush.bf16.msra.mxu0 %v1090
    %1753 = vmatpush.bf16.msra.mxu0 %v1086
    %1754 = vmatpush.bf16.msra.mxu0 %v1082
    %1755 = vmatpush.bf16.msra.mxu0 %v1078
    %1756 = vmatpush.bf16.msra.mxu0 %v1074
    %1757 = vmatpush.bf16.msra.mxu0 %v1070
    %1758 = vmatpush.bf16.msra.mxu0 %v1066
    %1759 = vmatmul.bf16.gmra.mxu0 %v57
    %v1760 = vpop.f32.mrf.mxu0
    %v1761 = vadd.f32 %v1747, %v1760
    %v1762 = vpop.f32.mrf.mxu0
    %v1763 = vadd.f32 %v1749, %v1762
    %1764 = vdwg.mxu0
    %1765 = vmatpush.bf16.msra.mxu0 %v1126
    %1766 = vmatpush.bf16.msra.mxu0 %v1122
    %1767 = vmatpush.bf16.msra.mxu0 %v1118
    %1768 = vmatpush.bf16.msra.mxu0 %v1114
    %1769 = vmatpush.bf16.msra.mxu0 %v1110
    %1770 = vmatpush.bf16.msra.mxu0 %v1106
    %1771 = vmatpush.bf16.msra.mxu0 %v1102
    %1772 = vmatpush.bf16.msra.mxu0 %v1098
    %1773 = vmatmul.bf16.gmra.mxu0 %v58
    %v1774 = vpop.f32.mrf.mxu0
    %v1775 = vadd.f32 %v1761, %v1774
    %v1776 = vpop.f32.mrf.mxu0
    %v1777 = vadd.f32 %v1763, %v1776
    %1778 = vdwg.mxu0
    %1779 = vmatpush.bf16.msra.mxu0 %v1158
    %1780 = vmatpush.bf16.msra.mxu0 %v1154
    %1781 = vmatpush.bf16.msra.mxu0 %v1150
    %1782 = vmatpush.bf16.msra.mxu0 %v1146
    %1783 = vmatpush.bf16.msra.mxu0 %v1142
    %1784 = vmatpush.bf16.msra.mxu0 %v1138
    %1785 = vmatpush.bf16.msra.mxu0 %v1134
    %1786 = vmatpush.bf16.msra.mxu0 %v1130
    %1787 = vmatmul.bf16.gmra.mxu0 %v59
    %v1788 = vpop.f32.mrf.mxu0
    %v1789 = vadd.f32 %v1775, %v1788
    %v1790 = vpop.f32.mrf.mxu0
    %v1791 = vadd.f32 %v1777, %v1790
    %1792 = vdwg.mxu0
    %1793 = vmatpush.bf16.msra.mxu0 %v1190
    %1794 = vmatpush.bf16.msra.mxu0 %v1186
    %1795 = vmatpush.bf16.msra.mxu0 %v1182
    %1796 = vmatpush.bf16.msra.mxu0 %v1178
    %1797 = vmatpush.bf16.msra.mxu0 %v1174
    %1798 = vmatpush.bf16.msra.mxu0 %v1170
    %1799 = vmatpush.bf16.msra.mxu0 %v1166
    %1800 = vmatpush.bf16.msra.mxu0 %v1162
    %1801 = vmatmul.bf16.gmra.mxu0 %v60
    %v1802 = vpop.f32.mrf.mxu0
    %v1803 = vadd.f32 %v1789, %v1802
    %v1804 = vpop.f32.mrf.mxu0
    %v1805 = vadd.f32 %v1791, %v1804
    %1806 = vdwg.mxu0
    %v1807 = vmax.f32 %v1509, 0.0
    %v1808 = vmax.f32 %v1607, 0.0
    %v1809 = vmax.f32 %v1705, 0.0
    %v1810 = vmax.f32 %v1803, 0.0
    %v1811 = vmax.f32 %v1511, 0.0
    %v1812 = vmax.f32 %v1609, 0.0
    %v1813 = vmax.f32 %v1707, 0.0
    %v1814 = vmax.f32 %v1805, 0.0
    %v1815 = vpack.c.bf16 %v1811, %v1807
    %v1816 = vpack.c.bf16 %v1812, %v1808
    %v1817 = vpack.c.bf16 %v1813, %v1809
    %v1818 = vpack.c.bf16 %v1814, %v1810
    %v1819 = vld [vmem:[%s4] sm:$0xff]
    %v1820 = vld [vmem:[%s4 + $0x8] sm:$0xff]
    %v1821 = vld [vmem:[%s4 + $0x10] sm:$0xff]
    %v1822 = vld [vmem:[%s4 + $0x18] sm:$0xff]
    %v1823 = vld [vmem:[%s4 + $0x20] sm:$0xff]
    %v1824 = vld [vmem:[%s4 + $0x28] sm:$0xff]
    %v1825 = vld [vmem:[%s4 + $0x30] sm:$0xff]
    %v1826 = vld [vmem:[%s4 + $0x38] sm:$0xff]
    %v1827 = vld [vmem:[%s4 + $0x40] sm:$0xff]
    %v1828 = vld [vmem:[%s4 + $0x48] sm:$0xff]
    %v1829 = vld [vmem:[%s4 + $0x50] sm:$0xff]
    %v1830 = vld [vmem:[%s4 + $0x58] sm:$0xff]
    %v1831 = vld [vmem:[%s4 + $0x60] sm:$0xff]
    %v1832 = vld [vmem:[%s4 + $0x68] sm:$0xff]
    %v1833 = vld [vmem:[%s4 + $0x70] sm:$0xff]
    %v1834 = vld [vmem:[%s4 + $0x78] sm:$0xff]
    %v1835 = vld [vmem:[%s4 + $0x80] sm:$0xff]
    %v1836 = vld [vmem:[%s4 + $0x88] sm:$0xff]
    %v1837 = vld [vmem:[%s4 + $0x90] sm:$0xff]
    %v1838 = vld [vmem:[%s4 + $0x98] sm:$0xff]
    %v1839 = vld [vmem:[%s4 + $0xa0] sm:$0xff]
    %v1840 = vld [vmem:[%s4 + $0xa8] sm:$0xff]
    %v1841 = vld [vmem:[%s4 + $0xb0] sm:$0xff]
    %v1842 = vld [vmem:[%s4 + $0xb8] sm:$0xff]
    %v1843 = vld [vmem:[%s4 + $0xc0] sm:$0xff]
    %v1844 = vld [vmem:[%s4 + $0xc8] sm:$0xff]
    %v1845 = vld [vmem:[%s4 + $0xd0] sm:$0xff]
    %v1846 = vld [vmem:[%s4 + $0xd8] sm:$0xff]
    %v1847 = vld [vmem:[%s4 + $0xe0] sm:$0xff]
    %v1848 = vld [vmem:[%s4 + $0xe8] sm:$0xff]
    %v1849 = vld [vmem:[%s4 + $0xf0] sm:$0xff]
    %v1850 = vld [vmem:[%s4 + $0xf8] sm:$0xff]
    %v1851 = vld [vmem:[%s4 + $0x100] sm:$0xff]
    %v1852 = vld [vmem:[%s4 + $0x108] sm:$0xff]
    %v1853 = vld [vmem:[%s4 + $0x110] sm:$0xff]
    %v1854 = vld [vmem:[%s4 + $0x118] sm:$0xff]
    %v1855 = vld [vmem:[%s4 + $0x120] sm:$0xff]
    %v1856 = vld [vmem:[%s4 + $0x128] sm:$0xff]
    %v1857 = vld [vmem:[%s4 + $0x130] sm:$0xff]
    %v1858 = vld [vmem:[%s4 + $0x138] sm:$0xff]
    %v1859 = vld [vmem:[%s4 + $0x140] sm:$0xff]
    %v1860 = vld [vmem:[%s4 + $0x148] sm:$0xff]
    %v1861 = vld [vmem:[%s4 + $0x150] sm:$0xff]
    %v1862 = vld [vmem:[%s4 + $0x158] sm:$0xff]
    %v1863 = vld [vmem:[%s4 + $0x160] sm:$0xff]
    %v1864 = vld [vmem:[%s4 + $0x168] sm:$0xff]
    %v1865 = vld [vmem:[%s4 + $0x170] sm:$0xff]
    %v1866 = vld [vmem:[%s4 + $0x178] sm:$0xff]
    %v1867 = vld [vmem:[%s4 + $0x180] sm:$0xff]
    %v1868 = vld [vmem:[%s4 + $0x188] sm:$0xff]
    %v1869 = vld [vmem:[%s5] sm:$0x3]
    %v1871 = vperm.slane %v1869, 0
    %v1872 = vperm.slane %v1869, 1
    %v1925 = vunpack.c.l.b16 %v1819
    %v1926 = vunpack.c.h.b16 %v1819
    %v1927 = vunpack.c.l.b16 %v1820
    %v1928 = vunpack.c.h.b16 %v1820
    %v1929 = vunpack.c.l.b16 %v1821
    %v1930 = vunpack.c.h.b16 %v1821
    %v1931 = vunpack.c.l.b16 %v1822
    %v1932 = vunpack.c.h.b16 %v1822
    %v1933 = vunpack.c.l.b16 %v1823
    %v1934 = vunpack.c.h.b16 %v1823
    %v1935 = vunpack.c.l.b16 %v1824
    %v1936 = vunpack.c.h.b16 %v1824
    %v1937 = vunpack.c.l.b16 %v1825
    %v1938 = vunpack.c.h.b16 %v1825
    %v1939 = vunpack.c.l.b16 %v1826
    %v1940 = vunpack.c.h.b16 %v1826
    %v1941 = vunpack.c.l.b16 %v1827
    %v1942 = vunpack.c.h.b16 %v1827
    %v1943 = vunpack.c.l.b16 %v1828
    %v1944 = vunpack.c.h.b16 %v1828
    %v1945 = vunpack.c.l.b16 %v1829
    %v1946 = vunpack.c.h.b16 %v1829
    %v1947 = vunpack.c.l.b16 %v1830
    %v1948 = vunpack.c.h.b16 %v1830
    %v1949 = vunpack.c.l.b16 %v1831
    %v1950 = vunpack.c.h.b16 %v1831
    %v1951 = vunpack.c.l.b16 %v1832
    %v1952 = vunpack.c.h.b16 %v1832
    %v1953 = vunpack.c.l.b16 %v1833
    %v1954 = vunpack.c.h.b16 %v1833
    %v1955 = vunpack.c.l.b16 %v1834
    %v1956 = vunpack.c.h.b16 %v1834
    %v1957 = vunpack.c.l.b16 %v1835
    %v1958 = vunpack.c.h.b16 %v1835
    %v1959 = vunpack.c.l.b16 %v1836
    %v1960 = vunpack.c.h.b16 %v1836
    %v1961 = vunpack.c.l.b16 %v1837
    %v1962 = vunpack.c.h.b16 %v1837
    %v1963 = vunpack.c.l.b16 %v1838
    %v1964 = vunpack.c.h.b16 %v1838
    %v1965 = vunpack.c.l.b16 %v1839
    %v1966 = vunpack.c.h.b16 %v1839
    %v1967 = vunpack.c.l.b16 %v1840
    %v1968 = vunpack.c.h.b16 %v1840
    %v1969 = vunpack.c.l.b16 %v1841
    %v1970 = vunpack.c.h.b16 %v1841
    %v1971 = vunpack.c.l.b16 %v1842
    %v1972 = vunpack.c.h.b16 %v1842
    %v1973 = vunpack.c.l.b16 %v1843
    %v1974 = vunpack.c.h.b16 %v1843
    %v1975 = vunpack.c.l.b16 %v1844
    %v1976 = vunpack.c.h.b16 %v1844
    %v1977 = vunpack.c.l.b16 %v1845
    %v1978 = vunpack.c.h.b16 %v1845
    %v1979 = vunpack.c.l.b16 %v1846
    %v1980 = vunpack.c.h.b16 %v1846
    %v1981 = vunpack.c.l.b16 %v1847
    %v1982 = vunpack.c.h.b16 %v1847
    %v1983 = vunpack.c.l.b16 %v1848
    %v1984 = vunpack.c.h.b16 %v1848
    %v1985 = vunpack.c.l.b16 %v1849
    %v1986 = vunpack.c.h.b16 %v1849
    %v1987 = vunpack.c.l.b16 %v1850
    %v1988 = vunpack.c.h.b16 %v1850
    %v1989 = vunpack.c.l.b16 %v1851
    %v1990 = vunpack.c.h.b16 %v1851
    %v1991 = vunpack.c.l.b16 %v1852
    %v1992 = vunpack.c.h.b16 %v1852
    %v1993 = vunpack.c.l.b16 %v1853
    %v1994 = vunpack.c.h.b16 %v1853
    %v1995 = vunpack.c.l.b16 %v1854
    %v1996 = vunpack.c.h.b16 %v1854
    %v1997 = vunpack.c.l.b16 %v1855
    %v1998 = vunpack.c.h.b16 %v1855
    %v1999 = vunpack.c.l.b16 %v1856
    %v2000 = vunpack.c.h.b16 %v1856
    %v2001 = vunpack.c.l.b16 %v1857
    %v2002 = vunpack.c.h.b16 %v1857
    %v2003 = vunpack.c.l.b16 %v1858
    %v2004 = vunpack.c.h.b16 %v1858
    %v2005 = vunpack.c.l.b16 %v1859
    %v2006 = vunpack.c.h.b16 %v1859
    %v2007 = vunpack.c.l.b16 %v1860
    %v2008 = vunpack.c.h.b16 %v1860
    %v2009 = vunpack.c.l.b16 %v1861
    %v2010 = vunpack.c.h.b16 %v1861
    %v2011 = vunpack.c.l.b16 %v1862
    %v2012 = vunpack.c.h.b16 %v1862
    %v2013 = vunpack.c.l.b16 %v1863
    %v2014 = vunpack.c.h.b16 %v1863
    %v2015 = vunpack.c.l.b16 %v1864
    %v2016 = vunpack.c.h.b16 %v1864
    %v2017 = vunpack.c.l.b16 %v1865
    %v2018 = vunpack.c.h.b16 %v1865
    %v2019 = vunpack.c.l.b16 %v1866
    %v2020 = vunpack.c.h.b16 %v1866
    %v2021 = vunpack.c.l.b16 %v1867
    %v2022 = vunpack.c.h.b16 %v1867
    %v2023 = vunpack.c.l.b16 %v1868
    %v2024 = vunpack.c.h.b16 %v1868
    %v2025 = vpack.c.b16 %v1927, %v1925
    %v2026 = vpack.c.b16 %v1928, %v1926
    %v2027 = vpack.c.b16 %v1931, %v1929
    %v2028 = vpack.c.b16 %v1932, %v1930
    %v2029 = vpack.c.b16 %v1935, %v1933
    %v2030 = vpack.c.b16 %v1936, %v1934
    %v2031 = vpack.c.b16 %v1939, %v1937
    %v2032 = vpack.c.b16 %v1940, %v1938
    %v2033 = vpack.c.b16 %v1943, %v1941
    %v2034 = vpack.c.b16 %v1944, %v1942
    %v2035 = vpack.c.b16 %v1947, %v1945
    %v2036 = vpack.c.b16 %v1948, %v1946
    %v2037 = vpack.c.b16 %v1951, %v1949
    %v2038 = vpack.c.b16 %v1952, %v1950
    %v2039 = vpack.c.b16 %v1955, %v1953
    %v2040 = vpack.c.b16 %v1956, %v1954
    %v2041 = vpack.c.b16 %v1959, %v1957
    %v2042 = vpack.c.b16 %v1960, %v1958
    %v2043 = vpack.c.b16 %v1963, %v1961
    %v2044 = vpack.c.b16 %v1964, %v1962
    %v2045 = vpack.c.b16 %v1967, %v1965
    %v2046 = vpack.c.b16 %v1968, %v1966
    %v2047 = vpack.c.b16 %v1971, %v1969
    %v2048 = vpack.c.b16 %v1972, %v1970
    %v2049 = vpack.c.b16 %v1975, %v1973
    %v2050 = vpack.c.b16 %v1976, %v1974
    %v2051 = vpack.c.b16 %v1979, %v1977
    %v2052 = vpack.c.b16 %v1980, %v1978
    %v2053 = vpack.c.b16 %v1983, %v1981
    %v2054 = vpack.c.b16 %v1984, %v1982
    %v2055 = vpack.c.b16 %v1987, %v1985
    %v2056 = vpack.c.b16 %v1988, %v1986
    %v2057 = vpack.c.b16 %v1991, %v1989
    %v2058 = vpack.c.b16 %v1992, %v1990
    %v2059 = vpack.c.b16 %v1995, %v1993
    %v2060 = vpack.c.b16 %v1996, %v1994
    %v2061 = vpack.c.b16 %v1999, %v1997
    %v2062 = vpack.c.b16 %v2000, %v1998
    %v2063 = vpack.c.b16 %v2003, %v2001
    %v2064 = vpack.c.b16 %v2004, %v2002
    %v2065 = vpack.c.b16 %v2007, %v2005
    %v2066 = vpack.c.b16 %v2008, %v2006
    %v2067 = vpack.c.b16 %v2011, %v2009
    %v2068 = vpack.c.b16 %v2012, %v2010
    %v2069 = vpack.c.b16 %v2015, %v2013
    %v2070 = vpack.c.b16 %v2016, %v2014
    %v2071 = vpack.c.b16 %v2019, %v2017
    %v2072 = vpack.c.b16 %v2020, %v2018
    %v2073 = vpack.c.b16 %v2023, %v2021
    %v2074 = vpack.c.b16 %v2024, %v2022
    %vm2125 = vcmask 130048
    %v2127 = vsel %vm2125, %v1818, 0
    %2129 = vmatpush.bf16.msra.mxu0 %v2039
    %2130 = vmatpush.bf16.msra.mxu0 %v2037
    %2131 = vmatpush.bf16.msra.mxu0 %v2035
    %2132 = vmatpush.bf16.msra.mxu0 %v2033
    %2133 = vmatpush.bf16.msra.mxu0 %v2031
    %2134 = vmatpush.bf16.msra.mxu0 %v2029
    %2135 = vmatpush.bf16.msra.mxu0 %v2027
    %2136 = vmatpush.bf16.msra.mxu0 %v2025
    %2137 = vmatmul.bf16.gmra.mxu0 %v1815
    %v2138 = vpop.f32.mrf.mxu0
    %v2139 = vadd.f32 %v1871, %v2138
    %v2140 = vpop.f32.mrf.mxu0
    %v2141 = vadd.f32 %v1871, %v2140
    %2142 = vdwg.mxu0
    %2143 = vmatpush.bf16.msra.mxu0 %v2055
    %2144 = vmatpush.bf16.msra.mxu0 %v2053
    %2145 = vmatpush.bf16.msra.mxu0 %v2051
    %2146 = vmatpush.bf16.msra.mxu0 %v2049
    %2147 = vmatpush.bf16.msra.mxu0 %v2047
    %2148 = vmatpush.bf16.msra.mxu0 %v2045
    %2149 = vmatpush.bf16.msra.mxu0 %v2043
    %2150 = vmatpush.bf16.msra.mxu0 %v2041
    %2151 = vmatmul.bf16.gmra.mxu0 %v1816
    %v2152 = vpop.f32.mrf.mxu0
    %v2153 = vadd.f32 %v2139, %v2152
    %v2154 = vpop.f32.mrf.mxu0
    %v2155 = vadd.f32 %v2141, %v2154
    %2156 = vdwg.mxu0
    %2157 = vmatpush.bf16.msra.mxu0 %v2071
    %2158 = vmatpush.bf16.msra.mxu0 %v2069
    %2159 = vmatpush.bf16.msra.mxu0 %v2067
    %2160 = vmatpush.bf16.msra.mxu0 %v2065
    %2161 = vmatpush.bf16.msra.mxu0 %v2063
    %2162 = vmatpush.bf16.msra.mxu0 %v2061
    %2163 = vmatpush.bf16.msra.mxu0 %v2059
    %2164 = vmatpush.bf16.msra.mxu0 %v2057
    %2165 = vmatmul.bf16.gmra.mxu0 %v1817
    %v2166 = vpop.f32.mrf.mxu0
    %v2167 = vadd.f32 %v2153, %v2166
    %v2168 = vpop.f32.mrf.mxu0
    %v2169 = vadd.f32 %v2155, %v2168
    %2170 = vdwg.mxu0
    %2171 = vmatpush.bf16.msra.mxu0 0
    %2172 = vmatpush.bf16.msra.mxu0 0
    %2173 = vmatpush.bf16.msra.mxu0 0
    %2174 = vmatpush.bf16.msra.mxu0 0
    %2175 = vmatpush.bf16.msra.mxu0 0
    %2176 = vmatpush.bf16.msra.mxu0 0
    %2177 = vmatpush.bf16.msra.mxu0 0
    %2178 = vmatpush.bf16.msra.mxu0 %v2073
    %2179 = vmatmul.bf16.gmra.mxu0 %v2127
    %v2180 = vpop.f32.mrf.mxu0
    %v2181 = vadd.f32 %v2167, %v2180
    %v2182 = vpop.f32.mrf.mxu0
    %v2183 = vadd.f32 %v2169, %v2182
    %2184 = vdwg.mxu0
    %2185 = vmatpush.bf16.msra.mxu0 %v2040
    %2186 = vmatpush.bf16.msra.mxu0 %v2038
    %2187 = vmatpush.bf16.msra.mxu0 %v2036
    %2188 = vmatpush.bf16.msra.mxu0 %v2034
    %2189 = vmatpush.bf16.msra.mxu0 %v2032
    %2190 = vmatpush.bf16.msra.mxu0 %v2030
    %2191 = vmatpush.bf16.msra.mxu0 %v2028
    %2192 = vmatpush.bf16.msra.mxu0 %v2026
    %2193 = vmatmul.bf16.gmra.mxu0 %v1815
    %v2194 = vpop.f32.mrf.mxu0
    %v2195 = vadd.f32 %v1872, %v2194
    %v2196 = vpop.f32.mrf.mxu0
    %v2197 = vadd.f32 %v1872, %v2196
    %2198 = vdwg.mxu0
    %2199 = vmatpush.bf16.msra.mxu0 %v2056
    %2200 = vmatpush.bf16.msra.mxu0 %v2054
    %2201 = vmatpush.bf16.msra.mxu0 %v2052
    %2202 = vmatpush.bf16.msra.mxu0 %v2050
    %2203 = vmatpush.bf16.msra.mxu0 %v2048
    %2204 = vmatpush.bf16.msra.mxu0 %v2046
    %2205 = vmatpush.bf16.msra.mxu0 %v2044
    %2206 = vmatpush.bf16.msra.mxu0 %v2042
    %2207 = vmatmul.bf16.gmra.mxu0 %v1816
    %v2208 = vpop.f32.mrf.mxu0
    %v2209 = vadd.f32 %v2195, %v2208
    %v2210 = vpop.f32.mrf.mxu0
    %v2211 = vadd.f32 %v2197, %v2210
    %2212 = vdwg.mxu0
    %2213 = vmatpush.bf16.msra.mxu0 %v2072
    %2214 = vmatpush.bf16.msra.mxu0 %v2070
    %2215 = vmatpush.bf16.msra.mxu0 %v2068
    %2216 = vmatpush.bf16.msra.mxu0 %v2066
    %2217 = vmatpush.bf16.msra.mxu0 %v2064
    %2218 = vmatpush.bf16.msra.mxu0 %v2062
    %2219 = vmatpush.bf16.msra.mxu0 %v2060
    %2220 = vmatpush.bf16.msra.mxu0 %v2058
    %2221 = vmatmul.bf16.gmra.mxu0 %v1817
    %v2222 = vpop.f32.mrf.mxu0
    %v2223 = vadd.f32 %v2209, %v2222
    %v2224 = vpop.f32.mrf.mxu0
    %v2225 = vadd.f32 %v2211, %v2224
    %2226 = vdwg.mxu0
    %2227 = vmatpush.bf16.msra.mxu0 0
    %2228 = vmatpush.bf16.msra.mxu0 0
    %2229 = vmatpush.bf16.msra.mxu0 0
    %2230 = vmatpush.bf16.msra.mxu0 0
    %2231 = vmatpush.bf16.msra.mxu0 0
    %2232 = vmatpush.bf16.msra.mxu0 0
    %2233 = vmatpush.bf16.msra.mxu0 0
    %2234 = vmatpush.bf16.msra.mxu0 %v2074
    %2235 = vmatmul.bf16.gmra.mxu0 %v2127
    %v2236 = vpop.f32.mrf.mxu0
    %v2237 = vadd.f32 %v2223, %v2236
    %v2238 = vpop.f32.mrf.mxu0
    %v2239 = vadd.f32 %v2225, %v2238
    %2240 = vdwg.mxu0
    %v2241 = vld [vmem:[%s1] sm:$0xff]
    %v2242 = vld [vmem:[%s1 + $0x8] sm:$0xff]
    %v2243 = vmul.f32 %v2237, 0.5
    %v2244 = vmul.f32 %v2239, 0.5
    %v2245 = vmul.f32 %v2243, 1.442695
    %v2246 = vpow.pop %v2245
    %v2247 = vmul.f32 %v2244, 1.442695
    %v2248 = vpow.pop %v2247
    %v2249 = vmul.f32 %v2241, %v2246
    %v2250 = vmul.f32 %v2242, %v2248
    %v2251 = vadd.f32 %v2181, %v2249
    %v2252 = vadd.f32 %v2183, %v2250
    %v2253 = vpack.c.bf16 %v2252, %v2251
    %v2254 = vld [vmem:[%s6] sm:$0xff]
    %v2255 = vld [vmem:[%s6 + $0x8] sm:$0xff]
    %v2256 = vld [vmem:[%s6 + $0x10] sm:$0xff]
    %v2257 = vld [vmem:[%s6 + $0x18] sm:$0xff]
    %v2258 = vld [vmem:[%s6 + $0x20] sm:$0xff]
    %v2259 = vld [vmem:[%s6 + $0x28] sm:$0xff]
    %v2260 = vld [vmem:[%s6 + $0x30] sm:$0xff]
    %v2261 = vld [vmem:[%s6 + $0x38] sm:$0xff]
    %v2262 = vld [vmem:[%s6 + $0x40] sm:$0xff]
    %v2263 = vld [vmem:[%s6 + $0x48] sm:$0xff]
    %v2264 = vld [vmem:[%s6 + $0x50] sm:$0xff]
    %v2265 = vld [vmem:[%s6 + $0x58] sm:$0xff]
    %v2266 = vld [vmem:[%s6 + $0x60] sm:$0xff]
    %v2267 = vld [vmem:[%s6 + $0x68] sm:$0xff]
    %v2268 = vld [vmem:[%s6 + $0x70] sm:$0xff]
    %v2269 = vld [vmem:[%s6 + $0x78] sm:$0xff]
    %v2270 = vld [vmem:[%s6 + $0x80] sm:$0xff]
    %v2271 = vld [vmem:[%s6 + $0x88] sm:$0xff]
    %v2272 = vld [vmem:[%s6 + $0x90] sm:$0xff]
    %v2273 = vld [vmem:[%s6 + $0x98] sm:$0xff]
    %v2274 = vld [vmem:[%s6 + $0xa0] sm:$0xff]
    %v2275 = vld [vmem:[%s6 + $0xa8] sm:$0xff]
    %v2276 = vld [vmem:[%s6 + $0xb0] sm:$0xff]
    %v2277 = vld [vmem:[%s6 + $0xb8] sm:$0xff]
    %v2278 = vld [vmem:[%s6 + $0xc0] sm:$0xff]
    %v2279 = vld [vmem:[%s6 + $0xc8] sm:$0xff]
    %v2280 = vld [vmem:[%s6 + $0xd0] sm:$0xff]
    %v2281 = vld [vmem:[%s6 + $0xd8] sm:$0xff]
    %v2282 = vld [vmem:[%s6 + $0xe0] sm:$0xff]
    %v2283 = vld [vmem:[%s6 + $0xe8] sm:$0xff]
    %v2284 = vld [vmem:[%s6 + $0xf0] sm:$0xff]
    %v2285 = vld [vmem:[%s6 + $0xf8] sm:$0xff]
    %v2286 = vld [vmem:[%s7] sm:$0xf]
    %v2288 = vperm.slane %v2286, 0
    %v2289 = vperm.slane %v2286, 1
    %v2290 = vperm.slane %v2286, 2
    %v2291 = vperm.slane %v2286, 3
    %v2328 = vunpack.c.l.b16 %v2254
    %v2329 = vunpack.c.h.b16 %v2254
    %v2330 = vunpack.c.l.b16 %v2255
    %v2331 = vunpack.c.h.b16 %v2255
    %v2332 = vunpack.c.l.b16 %v2256
    %v2333 = vunpack.c.h.b16 %v2256
    %v2334 = vunpack.c.l.b16 %v2257
    %v2335 = vunpack.c.h.b16 %v2257
    %v2336 = vunpack.c.l.b16 %v2258
    %v2337 = vunpack.c.h.b16 %v2258
    %v2338 = vunpack.c.l.b16 %v2259
    %v2339 = vunpack.c.h.b16 %v2259
    %v2340 = vunpack.c.l.b16 %v2260
    %v2341 = vunpack.c.h.b16 %v2260
    %v2342 = vunpack.c.l.b16 %v2261
    %v2343 = vunpack.c.h.b16 %v2261
    %v2344 = vunpack.c.l.b16 %v2262
    %v2345 = vunpack.c.h.b16 %v2262
    %v2346 = vunpack.c.l.b16 %v2263
    %v2347 = vunpack.c.h.b16 %v2263
    %v2348 = vunpack.c.l.b16 %v2264
    %v2349 = vunpack.c.h.b16 %v2264
    %v2350 = vunpack.c.l.b16 %v2265
    %v2351 = vunpack.c.h.b16 %v2265
    %v2352 = vunpack.c.l.b16 %v2266
    %v2353 = vunpack.c.h.b16 %v2266
    %v2354 = vunpack.c.l.b16 %v2267
    %v2355 = vunpack.c.h.b16 %v2267
    %v2356 = vunpack.c.l.b16 %v2268
    %v2357 = vunpack.c.h.b16 %v2268
    %v2358 = vunpack.c.l.b16 %v2269
    %v2359 = vunpack.c.h.b16 %v2269
    %v2360 = vunpack.c.l.b16 %v2270
    %v2361 = vunpack.c.h.b16 %v2270
    %v2362 = vunpack.c.l.b16 %v2271
    %v2363 = vunpack.c.h.b16 %v2271
    %v2364 = vunpack.c.l.b16 %v2272
    %v2365 = vunpack.c.h.b16 %v2272
    %v2366 = vunpack.c.l.b16 %v2273
    %v2367 = vunpack.c.h.b16 %v2273
    %v2368 = vunpack.c.l.b16 %v2274
    %v2369 = vunpack.c.h.b16 %v2274
    %v2370 = vunpack.c.l.b16 %v2275
    %v2371 = vunpack.c.h.b16 %v2275
    %v2372 = vunpack.c.l.b16 %v2276
    %v2373 = vunpack.c.h.b16 %v2276
    %v2374 = vunpack.c.l.b16 %v2277
    %v2375 = vunpack.c.h.b16 %v2277
    %v2376 = vunpack.c.l.b16 %v2278
    %v2377 = vunpack.c.h.b16 %v2278
    %v2378 = vunpack.c.l.b16 %v2279
    %v2379 = vunpack.c.h.b16 %v2279
    %v2380 = vunpack.c.l.b16 %v2280
    %v2381 = vunpack.c.h.b16 %v2280
    %v2382 = vunpack.c.l.b16 %v2281
    %v2383 = vunpack.c.h.b16 %v2281
    %v2384 = vunpack.c.l.b16 %v2282
    %v2385 = vunpack.c.h.b16 %v2282
    %v2386 = vunpack.c.l.b16 %v2283
    %v2387 = vunpack.c.h.b16 %v2283
    %v2388 = vunpack.c.l.b16 %v2284
    %v2389 = vunpack.c.h.b16 %v2284
    %v2390 = vunpack.c.l.b16 %v2285
    %v2391 = vunpack.c.h.b16 %v2285
    %v2392 = vpack.c.b16 %v2332, %v2328
    %v2393 = vpack.c.b16 %v2333, %v2329
    %v2394 = vpack.c.b16 %v2334, %v2330
    %v2395 = vpack.c.b16 %v2335, %v2331
    %v2396 = vpack.c.b16 %v2340, %v2336
    %v2397 = vpack.c.b16 %v2341, %v2337
    %v2398 = vpack.c.b16 %v2342, %v2338
    %v2399 = vpack.c.b16 %v2343, %v2339
    %v2400 = vpack.c.b16 %v2348, %v2344
    %v2401 = vpack.c.b16 %v2349, %v2345
    %v2402 = vpack.c.b16 %v2350, %v2346
    %v2403 = vpack.c.b16 %v2351, %v2347
    %v2404 = vpack.c.b16 %v2356, %v2352
    %v2405 = vpack.c.b16 %v2357, %v2353
    %v2406 = vpack.c.b16 %v2358, %v2354
    %v2407 = vpack.c.b16 %v2359, %v2355
    %v2408 = vpack.c.b16 %v2364, %v2360
    %v2409 = vpack.c.b16 %v2365, %v2361
    %v2410 = vpack.c.b16 %v2366, %v2362
    %v2411 = vpack.c.b16 %v2367, %v2363
    %v2412 = vpack.c.b16 %v2372, %v2368
    %v2413 = vpack.c.b16 %v2373, %v2369
    %v2414 = vpack.c.b16 %v2374, %v2370
    %v2415 = vpack.c.b16 %v2375, %v2371
    %v2416 = vpack.c.b16 %v2380, %v2376
    %v2417 = vpack.c.b16 %v2381, %v2377
    %v2418 = vpack.c.b16 %v2382, %v2378
    %v2419 = vpack.c.b16 %v2383, %v2379
    %v2420 = vpack.c.b16 %v2388, %v2384
    %v2421 = vpack.c.b16 %v2389, %v2385
    %v2422 = vpack.c.b16 %v2390, %v2386
    %v2423 = vpack.c.b16 %v2391, %v2387
    %2456 = vmatpush.bf16.msra.mxu0 %v2420
    %2457 = vmatpush.bf16.msra.mxu0 %v2416
    %2458 = vmatpush.bf16.msra.mxu0 %v2412
    %2459 = vmatpush.bf16.msra.mxu0 %v2408
    %2460 = vmatpush.bf16.msra.mxu0 %v2404
    %2461 = vmatpush.bf16.msra.mxu0 %v2400
    %2462 = vmatpush.bf16.msra.mxu0 %v2396
    %2463 = vmatpush.bf16.msra.mxu0 %v2392
    %2464 = vmatmul.bf16.gmra.mxu0 %v2253
    %v2465 = vpop.f32.mrf.mxu0
    %v2466 = vadd.f32 %v2288, %v2465
    %v2467 = vpop.f32.mrf.mxu0
    %v2468 = vadd.f32 %v2288, %v2467
    %2469 = vdwg.mxu0
    %2470 = vmatpush.bf16.msra.mxu0 %v2421
    %2471 = vmatpush.bf16.msra.mxu0 %v2417
    %2472 = vmatpush.bf16.msra.mxu0 %v2413
    %2473 = vmatpush.bf16.msra.mxu0 %v2409
    %2474 = vmatpush.bf16.msra.mxu0 %v2405
    %2475 = vmatpush.bf16.msra.mxu0 %v2401
    %2476 = vmatpush.bf16.msra.mxu0 %v2397
    %2477 = vmatpush.bf16.msra.mxu0 %v2393
    %2478 = vmatmul.bf16.gmra.mxu0 %v2253
    %v2479 = vpop.f32.mrf.mxu0
    %v2480 = vadd.f32 %v2289, %v2479
    %v2481 = vpop.f32.mrf.mxu0
    %v2482 = vadd.f32 %v2289, %v2481
    %2483 = vdwg.mxu0
    %2484 = vmatpush.bf16.msra.mxu0 %v2422
    %2485 = vmatpush.bf16.msra.mxu0 %v2418
    %2486 = vmatpush.bf16.msra.mxu0 %v2414
    %2487 = vmatpush.bf16.msra.mxu0 %v2410
    %2488 = vmatpush.bf16.msra.mxu0 %v2406
    %2489 = vmatpush.bf16.msra.mxu0 %v2402
    %2490 = vmatpush.bf16.msra.mxu0 %v2398
    %2491 = vmatpush.bf16.msra.mxu0 %v2394
    %2492 = vmatmul.bf16.gmra.mxu0 %v2253
    %v2493 = vpop.f32.mrf.mxu0
    %v2494 = vadd.f32 %v2290, %v2493
    %v2495 = vpop.f32.mrf.mxu0
    %v2496 = vadd.f32 %v2290, %v2495
    %2497 = vdwg.mxu0
    %2498 = vmatpush.bf16.msra.mxu0 %v2423
    %2499 = vmatpush.bf16.msra.mxu0 %v2419
    %2500 = vmatpush.bf16.msra.mxu0 %v2415
    %2501 = vmatpush.bf16.msra.mxu0 %v2411
    %2502 = vmatpush.bf16.msra.mxu0 %v2407
    %2503 = vmatpush.bf16.msra.mxu0 %v2403
    %2504 = vmatpush.bf16.msra.mxu0 %v2399
    %2505 = vmatpush.bf16.msra.mxu0 %v2395
    %2506 = vmatmul.bf16.gmra.mxu0 %v2253
    %v2507 = vpop.f32.mrf.mxu0
    %v2508 = vadd.f32 %v2291, %v2507
    %v2509 = vpop.f32.mrf.mxu0
    %v2510 = vadd.f32 %v2291, %v2509
    %2511 = vdwg.mxu0
    %v2512 = vmax.f32 %v2466, 0.0
    %v2513 = vmax.f32 %v2480, 0.0
    %v2514 = vmax.f32 %v2494, 0.0
    %v2515 = vmax.f32 %v2508, 0.0
    %v2516 = vmax.f32 %v2468, 0.0
    %v2517 = vmax.f32 %v2482, 0.0
    %v2518 = vmax.f32 %v2496, 0.0
    %v2519 = vmax.f32 %v2510, 0.0
    %v2520 = vpack.c.bf16 %v2516, %v2512
    %v2521 = vpack.c.bf16 %v2517, %v2513
    %v2522 = vpack.c.bf16 %v2518, %v2514
    %v2523 = vpack.c.bf16 %v2519, %v2515
    %v2524 = vld [vmem:[%s8] sm:$0xff]
    %v2525 = vld [vmem:[%s8 + $0x8] sm:$0xff]
    %v2526 = vld [vmem:[%s8 + $0x10] sm:$0xff]
    %v2527 = vld [vmem:[%s8 + $0x18] sm:$0xf]
    %v2528 = vld [vmem:[%s8 + $0x1c] sm:$0xff]
    %v2529 = vld [vmem:[%s8 + $0x24] sm:$0xff]
    %v2530 = vld [vmem:[%s8 + $0x2c] sm:$0xff]
    %v2531 = vld [vmem:[%s8 + $0x34] sm:$0xf]
    %v2532 = vld [vmem:[%s8 + $0x38] sm:$0xff]
    %v2533 = vld [vmem:[%s8 + $0x40] sm:$0xff]
    %v2534 = vld [vmem:[%s8 + $0x48] sm:$0xff]
    %v2535 = vld [vmem:[%s8 + $0x50] sm:$0xf]
    %v2536 = vld [vmem:[%s8 + $0x54] sm:$0xff]
    %v2537 = vld [vmem:[%s8 + $0x5c] sm:$0xff]
    %v2538 = vld [vmem:[%s8 + $0x64] sm:$0xff]
    %v2539 = vld [vmem:[%s8 + $0x6c] sm:$0xf]
    %v2540 = vld [vmem:[%s8 + $0x70] sm:$0xff]
    %v2541 = vld [vmem:[%s8 + $0x78] sm:$0xff]
    %v2542 = vld [vmem:[%s8 + $0x80] sm:$0xff]
    %v2543 = vld [vmem:[%s8 + $0x88] sm:$0xf]
    %v2544 = vld [vmem:[%s8 + $0x8c] sm:$0xff]
    %v2545 = vld [vmem:[%s8 + $0x94] sm:$0xff]
    %v2546 = vld [vmem:[%s8 + $0x9c] sm:$0xff]
    %v2547 = vld [vmem:[%s8 + $0xa4] sm:$0xf]
    %v2548 = vld [vmem:[%s8 + $0xa8] sm:$0xff]
    %v2549 = vld [vmem:[%s8 + $0xb0] sm:$0xff]
    %v2550 = vld [vmem:[%s8 + $0xb8] sm:$0xff]
    %v2551 = vld [vmem:[%s8 + $0xc0] sm:$0xf]
    %v2552 = vld [vmem:[%s8 + $0xc4] sm:$0xff]
    %v2553 = vld [vmem:[%s8 + $0xcc] sm:$0xff]
    %v2554 = vld [vmem:[%s8 + $0xd4] sm:$0xff]
    %v2555 = vld [vmem:[%s8 + $0xdc] sm:$0xf]
    %v2556 = vld [vmem:[%s8 + $0xe0] sm:$0xff]
    %v2557 = vld [vmem:[%s8 + $0xe8] sm:$0xff]
    %v2558 = vld [vmem:[%s8 + $0xf0] sm:$0xff]
    %v2559 = vld [vmem:[%s8 + $0xf8] sm:$0xf]
    %v2560 = vld [vmem:[%s8 + $0xfc] sm:$0xff]
    %v2561 = vld [vmem:[%s8 + $0x104] sm:$0xff]
    %v2562 = vld [vmem:[%s8 + $0x10c] sm:$0xff]
    %v2563 = vld [vmem:[%s8 + $0x114] sm:$0xf]
    %v2564 = vld [vmem:[%s8 + $0x118] sm:$0xff]
    %v2565 = vld [vmem:[%s8 + $0x120] sm:$0xff]
    %v2566 = vld [vmem:[%s8 + $0x128] sm:$0xff]
    %v2567 = vld [vmem:[%s8 + $0x130] sm:$0xf]
    %v2568 = vld [vmem:[%s8 + $0x134] sm:$0xff]
    %v2569 = vld [vmem:[%s8 + $0x13c] sm:$0xff]
    %v2570 = vld [vmem:[%s8 + $0x144] sm:$0xff]
    %v2571 = vld [vmem:[%s8 + $0x14c] sm:$0xf]
    %v2572 = vld [vmem:[%s8 + $0x150] sm:$0xff]
    %v2573 = vld [vmem:[%s8 + $0x158] sm:$0xff]
    %v2574 = vld [vmem:[%s8 + $0x160] sm:$0xff]
    %v2575 = vld [vmem:[%s8 + $0x168] sm:$0xf]
    %v2576 = vld [vmem:[%s8 + $0x16c] sm:$0xff]
    %v2577 = vld [vmem:[%s8 + $0x174] sm:$0xff]
    %v2578 = vld [vmem:[%s8 + $0x17c] sm:$0xff]
    %v2579 = vld [vmem:[%s8 + $0x184] sm:$0xf]
    %v2580 = vld [vmem:[%s8 + $0x188] sm:$0xff]
    %v2581 = vld [vmem:[%s8 + $0x190] sm:$0xff]
    %v2582 = vld [vmem:[%s8 + $0x198] sm:$0xff]
    %v2583 = vld [vmem:[%s8 + $0x1a0] sm:$0xf]
    %v2584 = vld [vmem:[%s8 + $0x1a4] sm:$0xff]
    %v2585 = vld [vmem:[%s8 + $0x1ac] sm:$0xff]
    %v2586 = vld [vmem:[%s8 + $0x1b4] sm:$0xff]
    %v2587 = vld [vmem:[%s8 + $0x1bc] sm:$0xf]
    %v2588 = vld [vmem:[%s8 + $0x1c0] sm:$0xff]
    %v2589 = vld [vmem:[%s8 + $0x1c8] sm:$0xff]
    %v2590 = vld [vmem:[%s8 + $0x1d0] sm:$0xff]
    %v2591 = vld [vmem:[%s8 + $0x1d8] sm:$0xf]
    %v2592 = vld [vmem:[%s8 + $0x1dc] sm:$0xff]
    %v2593 = vld [vmem:[%s8 + $0x1e4] sm:$0xff]
    %v2594 = vld [vmem:[%s8 + $0x1ec] sm:$0xff]
    %v2595 = vld [vmem:[%s8 + $0x1f4] sm:$0xf]
    %v2596 = vld [vmem:[%s8 + $0x1f8] sm:$0xff]
    %v2597 = vld [vmem:[%s8 + $0x200] sm:$0xff]
    %v2598 = vld [vmem:[%s8 + $0x208] sm:$0xff]
    %v2599 = vld [vmem:[%s8 + $0x210] sm:$0xf]
    %v2600 = vld [vmem:[%s8 + $0x214] sm:$0xff]
    %v2601 = vld [vmem:[%s8 + $0x21c] sm:$0xff]
    %v2602 = vld [vmem:[%s8 + $0x224] sm:$0xff]
    %v2603 = vld [vmem:[%s8 + $0x22c] sm:$0xf]
    %v2604 = vld [vmem:[%s8 + $0x230] sm:$0xff]
    %v2605 = vld [vmem:[%s8 + $0x238] sm:$0xff]
    %v2606 = vld [vmem:[%s8 + $0x240] sm:$0xff]
    %v2607 = vld [vmem:[%s8 + $0x248] sm:$0xf]
    %v2608 = vld [vmem:[%s8 + $0x24c] sm:$0xff]
    %v2609 = vld [vmem:[%s8 + $0x254] sm:$0xff]
    %v2610 = vld [vmem:[%s8 + $0x25c] sm:$0xff]
    %v2611 = vld [vmem:[%s8 + $0x264] sm:$0xf]
    %v2612 = vld [vmem:[%s8 + $0x268] sm:$0xff]
    %v2613 = vld [vmem:[%s8 + $0x270] sm:$0xff]
    %v2614 = vld [vmem:[%s8 + $0x278] sm:$0xff]
    %v2615 = vld [vmem:[%s8 + $0x280] sm:$0xf]
    %v2616 = vld [vmem:[%s8 + $0x284] sm:$0xff]
    %v2617 = vld [vmem:[%s8 + $0x28c] sm:$0xff]
    %v2618 = vld [vmem:[%s8 + $0x294] sm:$0xff]
    %v2619 = vld [vmem:[%s8 + $0x29c] sm:$0xf]
    %v2620 = vld [vmem:[%s8 + $0x2a0] sm:$0xff]
    %v2621 = vld [vmem:[%s8 + $0x2a8] sm:$0xff]
    %v2622 = vld [vmem:[%s8 + $0x2b0] sm:$0xff]
    %v2623 = vld [vmem:[%s8 + $0x2b8] sm:$0xf]
    %v2624 = vld [vmem:[%s8 + $0x2bc] sm:$0xff]
    %v2625 = vld [vmem:[%s8 + $0x2c4] sm:$0xff]
    %v2626 = vld [vmem:[%s8 + $0x2cc] sm:$0xff]
    %v2627 = vld [vmem:[%s8 + $0x2d4] sm:$0xf]
    %v2628 = vld [vmem:[%s8 + $0x2d8] sm:$0xff]
    %v2629 = vld [vmem:[%s8 + $0x2e0] sm:$0xff]
    %v2630 = vld [vmem:[%s8 + $0x2e8] sm:$0xff]
    %v2631 = vld [vmem:[%s8 + $0x2f0] sm:$0xf]
    %v2632 = vld [vmem:[%s8 + $0x2f4] sm:$0xff]
    %v2633 = vld [vmem:[%s8 + $0x2fc] sm:$0xff]
    %v2634 = vld [vmem:[%s8 + $0x304] sm:$0xff]
    %v2635 = vld [vmem:[%s8 + $0x30c] sm:$0xf]
    %v2636 = vld [vmem:[%s8 + $0x310] sm:$0xff]
    %v2637 = vld [vmem:[%s8 + $0x318] sm:$0xff]
    %v2638 = vld [vmem:[%s8 + $0x320] sm:$0xff]
    %v2639 = vld [vmem:[%s8 + $0x328] sm:$0xf]
    %v2640 = vld [vmem:[%s8 + $0x32c] sm:$0xff]
    %v2641 = vld [vmem:[%s8 + $0x334] sm:$0xff]
    %v2642 = vld [vmem:[%s8 + $0x33c] sm:$0xff]
    %v2643 = vld [vmem:[%s8 + $0x344] sm:$0xf]
    %v2644 = vld [vmem:[%s8 + $0x348] sm:$0xff]
    %v2645 = vld [vmem:[%s8 + $0x350] sm:$0xff]
    %v2646 = vld [vmem:[%s8 + $0x358] sm:$0xff]
    %v2647 = vld [vmem:[%s8 + $0x360] sm:$0xf]
    %v2648 = vld [vmem:[%s8 + $0x364] sm:$0xff]
    %v2649 = vld [vmem:[%s8 + $0x36c] sm:$0xff]
    %v2650 = vld [vmem:[%s8 + $0x374] sm:$0xff]
    %v2651 = vld [vmem:[%s8 + $0x37c] sm:$0xf]
    %v2652 = vld [vmem:[%s8 + $0x380] sm:$0xff]
    %v2653 = vld [vmem:[%s8 + $0x388] sm:$0xff]
    %v2654 = vld [vmem:[%s8 + $0x390] sm:$0xff]
    %v2655 = vld [vmem:[%s8 + $0x398] sm:$0xf]
    %v2656 = vld [vmem:[%s8 + $0x39c] sm:$0xff]
    %v2657 = vld [vmem:[%s8 + $0x3a4] sm:$0xff]
    %v2658 = vld [vmem:[%s8 + $0x3ac] sm:$0xff]
    %v2659 = vld [vmem:[%s8 + $0x3b4] sm:$0xf]
    %v2660 = vld [vmem:[%s8 + $0x3b8] sm:$0xff]
    %v2661 = vld [vmem:[%s8 + $0x3c0] sm:$0xff]
    %v2662 = vld [vmem:[%s8 + $0x3c8] sm:$0xff]
    %v2663 = vld [vmem:[%s8 + $0x3d0] sm:$0xf]
    %v2664 = vld [vmem:[%s8 + $0x3d4] sm:$0xff]
    %v2665 = vld [vmem:[%s8 + $0x3dc] sm:$0xff]
    %v2666 = vld [vmem:[%s8 + $0x3e4] sm:$0xff]
    %v2667 = vld [vmem:[%s8 + $0x3ec] sm:$0xf]
    %v2668 = vld [vmem:[%s8 + $0x3f0] sm:$0xff]
    %v2669 = vld [vmem:[%s8 + $0x3f8] sm:$0xff]
    %v2670 = vld [vmem:[%s8 + $0x400] sm:$0xff]
    %v2671 = vld [vmem:[%s8 + $0x408] sm:$0xf]
    %v2672 = vld [vmem:[%s8 + $0x40c] sm:$0xff]
    %v2673 = vld [vmem:[%s8 + $0x414] sm:$0xff]
    %v2674 = vld [vmem:[%s8 + $0x41c] sm:$0xff]
    %v2675 = vld [vmem:[%s8 + $0x424] sm:$0xf]
    %v2676 = vld [vmem:[%s8 + $0x428] sm:$0xff]
    %v2677 = vld [vmem:[%s8 + $0x430] sm:$0xff]
    %v2678 = vld [vmem:[%s8 + $0x438] sm:$0xff]
    %v2679 = vld [vmem:[%s8 + $0x440] sm:$0xf]
    %v2680 = vld [vmem:[%s8 + $0x444] sm:$0xff]
    %v2681 = vld [vmem:[%s8 + $0x44c] sm:$0xff]
    %v2682 = vld [vmem:[%s8 + $0x454] sm:$0xff]
    %v2683 = vld [vmem:[%s8 + $0x45c] sm:$0xf]
    %v2684 = vld [vmem:[%s8 + $0x460] sm:$0xff]
    %v2685 = vld [vmem:[%s8 + $0x468] sm:$0xff]
    %v2686 = vld [vmem:[%s8 + $0x470] sm:$0xff]
    %v2687 = vld [vmem:[%s8 + $0x478] sm:$0xf]
    %v2688 = vld [vmem:[%s8 + $0x47c] sm:$0xff]
    %v2689 = vld [vmem:[%s8 + $0x484] sm:$0xff]
    %v2690 = vld [vmem:[%s8 + $0x48c] sm:$0xff]
    %v2691 = vld [vmem:[%s8 + $0x494] sm:$0xf]
    %v2692 = vld [vmem:[%s8 + $0x498] sm:$0xff]
    %v2693 = vld [vmem:[%s8 + $0x4a0] sm:$0xff]
    %v2694 = vld [vmem:[%s8 + $0x4a8] sm:$0xff]
    %v2695 = vld [vmem:[%s8 + $0x4b0] sm:$0xf]
    %v2696 = vld [vmem:[%s8 + $0x4b4] sm:$0xff]
    %v2697 = vld [vmem:[%s8 + $0x4bc] sm:$0xff]
    %v2698 = vld [vmem:[%s8 + $0x4c4] sm:$0xff]
    %v2699 = vld [vmem:[%s8 + $0x4cc] sm:$0xf]
    %v2700 = vld [vmem:[%s8 + $0x4d0] sm:$0xff]
    %v2701 = vld [vmem:[%s8 + $0x4d8] sm:$0xff]
    %v2702 = vld [vmem:[%s8 + $0x4e0] sm:$0xff]
    %v2703 = vld [vmem:[%s8 + $0x4e8] sm:$0xf]
    %v2704 = vld [vmem:[%s8 + $0x4ec] sm:$0xff]
    %v2705 = vld [vmem:[%s8 + $0x4f4] sm:$0xff]
    %v2706 = vld [vmem:[%s8 + $0x4fc] sm:$0xff]
    %v2707 = vld [vmem:[%s8 + $0x504] sm:$0xf]
    %v2708 = vld [vmem:[%s8 + $0x508] sm:$0xff]
    %v2709 = vld [vmem:[%s8 + $0x510] sm:$0xff]
    %v2710 = vld [vmem:[%s8 + $0x518] sm:$0xff]
    %v2711 = vld [vmem:[%s8 + $0x520] sm:$0xf]
    %v2712 = vld [vmem:[%s8 + $0x524] sm:$0xff]
    %v2713 = vld [vmem:[%s8 + $0x52c] sm:$0xff]
    %v2714 = vld [vmem:[%s8 + $0x534] sm:$0xff]
    %v2715 = vld [vmem:[%s8 + $0x53c] sm:$0xf]
    %v2716 = vld [vmem:[%s8 + $0x540] sm:$0xff]
    %v2717 = vld [vmem:[%s8 + $0x548] sm:$0xff]
    %v2718 = vld [vmem:[%s8 + $0x550] sm:$0xff]
    %v2719 = vld [vmem:[%s8 + $0x558] sm:$0xf]
    %v2720 = vld [vmem:[%s8 + $0x55c] sm:$0xff]
    %v2721 = vld [vmem:[%s8 + $0x564] sm:$0xff]
    %v2722 = vld [vmem:[%s8 + $0x56c] sm:$0xff]
    %v2723 = vld [vmem:[%s8 + $0x574] sm:$0xf]
    %v2724 = vld [vmem:[%s9] sm:$0xff]
    %v2726 = vperm.slane %v2724, 0
    %v2727 = vperm.slane %v2724, 1
    %v2728 = vperm.slane %v2724, 2
    %v2729 = vperm.slane %v2724, 3
    %v2730 = vperm.slane %v2724, 4
    %v2731 = vperm.slane %v2724, 5
    %v2732 = vperm.slane %v2724, 6
    %v2940 = vunpack.c.l.b16 %v2524
    %v2941 = vunpack.c.h.b16 %v2524
    %v2942 = vunpack.c.l.b16 %v2525
    %v2943 = vunpack.c.h.b16 %v2525
    %v2944 = vunpack.c.l.b16 %v2526
    %v2945 = vunpack.c.h.b16 %v2526
    %v2946 = vunpack.c.l.b16 %v2527
    %v2947 = vunpack.c.l.b16 %v2528
    %v2948 = vunpack.c.h.b16 %v2528
    %v2949 = vunpack.c.l.b16 %v2529
    %v2950 = vunpack.c.h.b16 %v2529
    %v2951 = vunpack.c.l.b16 %v2530
    %v2952 = vunpack.c.h.b16 %v2530
    %v2953 = vunpack.c.l.b16 %v2531
    %v2954 = vunpack.c.l.b16 %v2532
    %v2955 = vunpack.c.h.b16 %v2532
    %v2956 = vunpack.c.l.b16 %v2533
    %v2957 = vunpack.c.h.b16 %v2533
    %v2958 = vunpack.c.l.b16 %v2534
    %v2959 = vunpack.c.h.b16 %v2534
    %v2960 = vunpack.c.l.b16 %v2535
    %v2961 = vunpack.c.l.b16 %v2536
    %v2962 = vunpack.c.h.b16 %v2536
    %v2963 = vunpack.c.l.b16 %v2537
    %v2964 = vunpack.c.h.b16 %v2537
    %v2965 = vunpack.c.l.b16 %v2538
    %v2966 = vunpack.c.h.b16 %v2538
    %v2967 = vunpack.c.l.b16 %v2539
    %v2968 = vunpack.c.l.b16 %v2540
    %v2969 = vunpack.c.h.b16 %v2540
    %v2970 = vunpack.c.l.b16 %v2541
    %v2971 = vunpack.c.h.b16 %v2541
    %v2972 = vunpack.c.l.b16 %v2542
    %v2973 = vunpack.c.h.b16 %v2542
    %v2974 = vunpack.c.l.b16 %v2543
    %v2975 = vunpack.c.l.b16 %v2544
    %v2976 = vunpack.c.h.b16 %v2544
    %v2977 = vunpack.c.l.b16 %v2545
    %v2978 = vunpack.c.h.b16 %v2545
    %v2979 = vunpack.c.l.b16 %v2546
    %v2980 = vunpack.c.h.b16 %v2546
    %v2981 = vunpack.c.l.b16 %v2547
    %v2982 = vunpack.c.l.b16 %v2548
    %v2983 = vunpack.c.h.b16 %v2548
    %v2984 = vunpack.c.l.b16 %v2549
    %v2985 = vunpack.c.h.b16 %v2549
    %v2986 = vunpack.c.l.b16 %v2550
    %v2987 = vunpack.c.h.b16 %v2550
    %v2988 = vunpack.c.l.b16 %v2551
    %v2989 = vunpack.c.l.b16 %v2552
    %v2990 = vunpack.c.h.b16 %v2552
    %v2991 = vunpack.c.l.b16 %v2553
    %v2992 = vunpack.c.h.b16 %v2553
    %v2993 = vunpack.c.l.b16 %v2554
    %v2994 = vunpack.c.h.b16 %v2554
    %v2995 = vunpack.c.l.b16 %v2555
    %v2996 = vunpack.c.l.b16 %v2556
    %v2997 = vunpack.c.h.b16 %v2556
    %v2998 = vunpack.c.l.b16 %v2557
    %v2999 = vunpack.c.h.b16 %v2557
    %v3000 = vunpack.c.l.b16 %v2558
    %v3001 = vunpack.c.h.b16 %v2558
    %v3002 = vunpack.c.l.b16 %v2559
    %v3003 = vunpack.c.l.b16 %v2560
    %v3004 = vunpack.c.h.b16 %v2560
    %v3005 = vunpack.c.l.b16 %v2561
    %v3006 = vunpack.c.h.b16 %v2561
    %v3007 = vunpack.c.l.b16 %v2562
    %v3008 = vunpack.c.h.b16 %v2562
    %v3009 = vunpack.c.l.b16 %v2563
    %v3010 = vunpack.c.l.b16 %v2564
    %v3011 = vunpack.c.h.b16 %v2564
    %v3012 = vunpack.c.l.b16 %v2565
    %v3013 = vunpack.c.h.b16 %v2565
    %v3014 = vunpack.c.l.b16 %v2566
    %v3015 = vunpack.c.h.b16 %v2566
    %v3016 = vunpack.c.l.b16 %v2567
    %v3017 = vunpack.c.l.b16 %v2568
    %v3018 = vunpack.c.h.b16 %v2568
    %v3019 = vunpack.c.l.b16 %v2569
    %v3020 = vunpack.c.h.b16 %v2569
    %v3021 = vunpack.c.l.b16 %v2570
    %v3022 = vunpack.c.h.b16 %v2570
    %v3023 = vunpack.c.l.b16 %v2571
    %v3024 = vunpack.c.l.b16 %v2572
    %v3025 = vunpack.c.h.b16 %v2572
    %v3026 = vunpack.c.l.b16 %v2573
    %v3027 = vunpack.c.h.b16 %v2573
    %v3028 = vunpack.c.l.b16 %v2574
    %v3029 = vunpack.c.h.b16 %v2574
    %v3030 = vunpack.c.l.b16 %v2575
    %v3031 = vunpack.c.l.b16 %v2576
    %v3032 = vunpack.c.h.b16 %v2576
    %v3033 = vunpack.c.l.b16 %v2577
    %v3034 = vunpack.c.h.b16 %v2577
    %v3035 = vunpack.c.l.b16 %v2578
    %v3036 = vunpack.c.h.b16 %v2578
    %v3037 = vunpack.c.l.b16 %v2579
    %v3038 = vunpack.c.l.b16 %v2580
    %v3039 = vunpack.c.h.b16 %v2580
    %v3040 = vunpack.c.l.b16 %v2581
    %v3041 = vunpack.c.h.b16 %v2581
    %v3042 = vunpack.c.l.b16 %v2582
    %v3043 = vunpack.c.h.b16 %v2582
    %v3044 = vunpack.c.l.b16 %v2583
    %v3045 = vunpack.c.l.b16 %v2584
    %v3046 = vunpack.c.h.b16 %v2584
    %v3047 = vunpack.c.l.b16 %v2585
    %v3048 = vunpack.c.h.b16 %v2585
    %v3049 = vunpack.c.l.b16 %v2586
    %v3050 = vunpack.c.h.b16 %v2586
    %v3051 = vunpack.c.l.b16 %v2587
    %v3052 = vunpack.c.l.b16 %v2588
    %v3053 = vunpack.c.h.b16 %v2588
    %v3054 = vunpack.c.l.b16 %v2589
    %v3055 = vunpack.c.h.b16 %v2589
    %v3056 = vunpack.c.l.b16 %v2590
    %v3057 = vunpack.c.h.b16 %v2590
    %v3058 = vunpack.c.l.b16 %v2591
    %v3059 = vunpack.c.l.b16 %v2592
    %v3060 = vunpack.c.h.b16 %v2592
    %v3061 = vunpack.c.l.b16 %v2593
    %v3062 = vunpack.c.h.b16 %v2593
    %v3063 = vunpack.c.l.b16 %v2594
    %v3064 = vunpack.c.h.b16 %v2594
    %v3065 = vunpack.c.l.b16 %v2595
    %v3066 = vunpack.c.l.b16 %v2596
    %v3067 = vunpack.c.h.b16 %v2596
    %v3068 = vunpack.c.l.b16 %v2597
    %v3069 = vunpack.c.h.b16 %v2597
    %v3070 = vunpack.c.l.b16 %v2598
    %v3071 = vunpack.c.h.b16 %v2598
    %v3072 = vunpack.c.l.b16 %v2599
    %v3073 = vunpack.c.l.b16 %v2600
    %v3074 = vunpack.c.h.b16 %v2600
    %v3075 = vunpack.c.l.b16 %v2601
    %v3076 = vunpack.c.h.b16 %v2601
    %v3077 = vunpack.c.l.b16 %v2602
    %v3078 = vunpack.c.h.b16 %v2602
    %v3079 = vunpack.c.l.b16 %v2603
    %v3080 = vunpack.c.l.b16 %v2604
    %v3081 = vunpack.c.h.b16 %v2604
    %v3082 = vunpack.c.l.b16 %v2605
    %v3083 = vunpack.c.h.b16 %v2605
    %v3084 = vunpack.c.l.b16 %v2606
    %v3085 = vunpack.c.h.b16 %v2606
    %v3086 = vunpack.c.l.b16 %v2607
    %v3087 = vunpack.c.l.b16 %v2608
    %v3088 = vunpack.c.h.b16 %v2608
    %v3089 = vunpack.c.l.b16 %v2609
    %v3090 = vunpack.c.h.b16 %v2609
    %v3091 = vunpack.c.l.b16 %v2610
    %v3092 = vunpack.c.h.b16 %v2610
    %v3093 = vunpack.c.l.b16 %v2611
    %v3094 = vunpack.c.l.b16 %v2612
    %v3095 = vunpack.c.h.b16 %v2612
    %v3096 = vunpack.c.l.b16 %v2613
    %v3097 = vunpack.c.h.b16 %v2613
    %v3098 = vunpack.c.l.b16 %v2614
    %v3099 = vunpack.c.h.b16 %v2614
    %v3100 = vunpack.c.l.b16 %v2615
    %v3101 = vunpack.c.l.b16 %v2616
    %v3102 = vunpack.c.h.b16 %v2616
    %v3103 = vunpack.c.l.b16 %v2617
    %v3104 = vunpack.c.h.b16 %v2617
    %v3105 = vunpack.c.l.b16 %v2618
    %v3106 = vunpack.c.h.b16 %v2618
    %v3107 = vunpack.c.l.b16 %v2619
    %v3108 = vunpack.c.l.b16 %v2620
    %v3109 = vunpack.c.h.b16 %v2620
    %v3110 = vunpack.c.l.b16 %v2621
    %v3111 = vunpack.c.h.b16 %v2621
    %v3112 = vunpack.c.l.b16 %v2622
    %v3113 = vunpack.c.h.b16 %v2622
    %v3114 = vunpack.c.l.b16 %v2623
    %v3115 = vunpack.c.l.b16 %v2624
    %v3116 = vunpack.c.h.b16 %v2624
    %v3117 = vunpack.c.l.b16 %v2625
    %v3118 = vunpack.c.h.b16 %v2625
    %v3119 = vunpack.c.l.b16 %v2626
    %v3120 = vunpack.c.h.b16 %v2626
    %v3121 = vunpack.c.l.b16 %v2627
    %v3122 = vunpack.c.l.b16 %v2628
    %v3123 = vunpack.c.h.b16 %v2628
    %v3124 = vunpack.c.l.b16 %v2629
    %v3125 = vunpack.c.h.b16 %v2629
    %v3126 = vunpack.c.l.b16 %v2630
    %v3127 = vunpack.c.h.b16 %v2630
    %v3128 = vunpack.c.l.b16 %v2631
    %v3129 = vunpack.c.l.b16 %v2632
    %v3130 = vunpack.c.h.b16 %v2632
    %v3131 = vunpack.c.l.b16 %v2633
    %v3132 = vunpack.c.h.b16 %v2633
    %v3133 = vunpack.c.l.b16 %v2634
    %v3134 = vunpack.c.h.b16 %v2634
    %v3135 = vunpack.c.l.b16 %v2635
    %v3136 = vunpack.c.l.b16 %v2636
    %v3137 = vunpack.c.h.b16 %v2636
    %v3138 = vunpack.c.l.b16 %v2637
    %v3139 = vunpack.c.h.b16 %v2637
    %v3140 = vunpack.c.l.b16 %v2638
    %v3141 = vunpack.c.h.b16 %v2638
    %v3142 = vunpack.c.l.b16 %v2639
    %v3143 = vunpack.c.l.b16 %v2640
    %v3144 = vunpack.c.h.b16 %v2640
    %v3145 = vunpack.c.l.b16 %v2641
    %v3146 = vunpack.c.h.b16 %v2641
    %v3147 = vunpack.c.l.b16 %v2642
    %v3148 = vunpack.c.h.b16 %v2642
    %v3149 = vunpack.c.l.b16 %v2643
    %v3150 = vunpack.c.l.b16 %v2644
    %v3151 = vunpack.c.h.b16 %v2644
    %v3152 = vunpack.c.l.b16 %v2645
    %v3153 = vunpack.c.h.b16 %v2645
    %v3154 = vunpack.c.l.b16 %v2646
    %v3155 = vunpack.c.h.b16 %v2646
    %v3156 = vunpack.c.l.b16 %v2647
    %v3157 = vunpack.c.l.b16 %v2648
    %v3158 = vunpack.c.h.b16 %v2648
    %v3159 = vunpack.c.l.b16 %v2649
    %v3160 = vunpack.c.h.b16 %v2649
    %v3161 = vunpack.c.l.b16 %v2650
    %v3162 = vunpack.c.h.b16 %v2650
    %v3163 = vunpack.c.l.b16 %v2651
    %v3164 = vunpack.c.l.b16 %v2652
    %v3165 = vunpack.c.h.b16 %v2652
    %v3166 = vunpack.c.l.b16 %v2653
    %v3167 = vunpack.c.h.b16 %v2653
    %v3168 = vunpack.c.l.b16 %v2654
    %v3169 = vunpack.c.h.b16 %v2654
    %v3170 = vunpack.c.l.b16 %v2655
    %v3171 = vunpack.c.l.b16 %v2656
    %v3172 = vunpack.c.h.b16 %v2656
    %v3173 = vunpack.c.l.b16 %v2657
    %v3174 = vunpack.c.h.b16 %v2657
    %v3175 = vunpack.c.l.b16 %v2658
    %v3176 = vunpack.c.h.b16 %v2658
    %v3177 = vunpack.c.l.b16 %v2659
    %v3178 = vunpack.c.l.b16 %v2660
    %v3179 = vunpack.c.h.b16 %v2660
    %v3180 = vunpack.c.l.b16 %v2661
    %v3181 = vunpack.c.h.b16 %v2661
    %v3182 = vunpack.c.l.b16 %v2662
    %v3183 = vunpack.c.h.b16 %v2662
    %v3184 = vunpack.c.l.b16 %v2663
    %v3185 = vunpack.c.l.b16 %v2664
    %v3186 = vunpack.c.h.b16 %v2664
    %v3187 = vunpack.c.l.b16 %v2665
    %v3188 = vunpack.c.h.b16 %v2665
    %v3189 = vunpack.c.l.b16 %v2666
    %v3190 = vunpack.c.h.b16 %v2666
    %v3191 = vunpack.c.l.b16 %v2667
    %v3192 = vunpack.c.l.b16 %v2668
    %v3193 = vunpack.c.h.b16 %v2668
    %v3194 = vunpack.c.l.b16 %v2669
    %v3195 = vunpack.c.h.b16 %v2669
    %v3196 = vunpack.c.l.b16 %v2670
    %v3197 = vunpack.c.h.b16 %v2670
    %v3198 = vunpack.c.l.b16 %v2671
    %v3199 = vunpack.c.l.b16 %v2672
    %v3200 = vunpack.c.h.b16 %v2672
    %v3201 = vunpack.c.l.b16 %v2673
    %v3202 = vunpack.c.h.b16 %v2673
    %v3203 = vunpack.c.l.b16 %v2674
    %v3204 = vunpack.c.h.b16 %v2674
    %v3205 = vunpack.c.l.b16 %v2675
    %v3206 = vunpack.c.l.b16 %v2676
    %v3207 = vunpack.c.h.b16 %v2676
    %v3208 = vunpack.c.l.b16 %v2677
    %v3209 = vunpack.c.h.b16 %v2677
    %v3210 = vunpack.c.l.b16 %v2678
    %v3211 = vunpack.c.h.b16 %v2678
    %v3212 = vunpack.c.l.b16 %v2679
    %v3213 = vunpack.c.l.b16 %v2680
    %v3214 = vunpack.c.h.b16 %v2680
    %v3215 = vunpack.c.l.b16 %v2681
    %v3216 = vunpack.c.h.b16 %v2681
    %v3217 = vunpack.c.l.b16 %v2682
    %v3218 = vunpack.c.h.b16 %v2682
    %v3219 = vunpack.c.l.b16 %v2683
    %v3220 = vunpack.c.l.b16 %v2684
    %v3221 = vunpack.c.h.b16 %v2684
    %v3222 = vunpack.c.l.b16 %v2685
    %v3223 = vunpack.c.h.b16 %v2685
    %v3224 = vunpack.c.l.b16 %v2686
    %v3225 = vunpack.c.h.b16 %v2686
    %v3226 = vunpack.c.l.b16 %v2687
    %v3227 = vunpack.c.l.b16 %v2688
    %v3228 = vunpack.c.h.b16 %v2688
    %v3229 = vunpack.c.l.b16 %v2689
    %v3230 = vunpack.c.h.b16 %v2689
    %v3231 = vunpack.c.l.b16 %v2690
    %v3232 = vunpack.c.h.b16 %v2690
    %v3233 = vunpack.c.l.b16 %v2691
    %v3234 = vunpack.c.l.b16 %v2692
    %v3235 = vunpack.c.h.b16 %v2692
    %v3236 = vunpack.c.l.b16 %v2693
    %v3237 = vunpack.c.h.b16 %v2693
    %v3238 = vunpack.c.l.b16 %v2694
    %v3239 = vunpack.c.h.b16 %v2694
    %v3240 = vunpack.c.l.b16 %v2695
    %v3241 = vunpack.c.l.b16 %v2696
    %v3242 = vunpack.c.h.b16 %v2696
    %v3243 = vunpack.c.l.b16 %v2697
    %v3244 = vunpack.c.h.b16 %v2697
    %v3245 = vunpack.c.l.b16 %v2698
    %v3246 = vunpack.c.h.b16 %v2698
    %v3247 = vunpack.c.l.b16 %v2699
    %v3248 = vunpack.c.l.b16 %v2700
    %v3249 = vunpack.c.h.b16 %v2700
    %v3250 = vunpack.c.l.b16 %v2701
    %v3251 = vunpack.c.h.b16 %v2701
    %v3252 = vunpack.c.l.b16 %v2702
    %v3253 = vunpack.c.h.b16 %v2702
    %v3254 = vunpack.c.l.b16 %v2703
    %v3255 = vunpack.c.l.b16 %v2704
    %v3256 = vunpack.c.h.b16 %v2704
    %v3257 = vunpack.c.l.b16 %v2705
    %v3258 = vunpack.c.h.b16 %v2705
    %v3259 = vunpack.c.l.b16 %v2706
    %v3260 = vunpack.c.h.b16 %v2706
    %v3261 = vunpack.c.l.b16 %v2707
    %v3262 = vunpack.c.l.b16 %v2708
    %v3263 = vunpack.c.h.b16 %v2708
    %v3264 = vunpack.c.l.b16 %v2709
    %v3265 = vunpack.c.h.b16 %v2709
    %v3266 = vunpack.c.l.b16 %v2710
    %v3267 = vunpack.c.h.b16 %v2710
    %v3268 = vunpack.c.l.b16 %v2711
    %v3269 = vunpack.c.l.b16 %v2712
    %v3270 = vunpack.c.h.b16 %v2712
    %v3271 = vunpack.c.l.b16 %v2713
    %v3272 = vunpack.c.h.b16 %v2713
    %v3273 = vunpack.c.l.b16 %v2714
    %v3274 = vunpack.c.h.b16 %v2714
    %v3275 = vunpack.c.l.b16 %v2715
    %v3276 = vunpack.c.l.b16 %v2716
    %v3277 = vunpack.c.h.b16 %v2716
    %v3278 = vunpack.c.l.b16 %v2717
    %v3279 = vunpack.c.h.b16 %v2717
    %v3280 = vunpack.c.l.b16 %v2718
    %v3281 = vunpack.c.h.b16 %v2718
    %v3282 = vunpack.c.l.b16 %v2719
    %v3283 = vunpack.c.l.b16 %v2720
    %v3284 = vunpack.c.h.b16 %v2720
    %v3285 = vunpack.c.l.b16 %v2721
    %v3286 = vunpack.c.h.b16 %v2721
    %v3287 = vunpack.c.l.b16 %v2722
    %v3288 = vunpack.c.h.b16 %v2722
    %v3289 = vunpack.c.l.b16 %v2723
    %v3290 = vpack.c.b16 %v2947, %v2940
    %v3291 = vpack.c.b16 %v2948, %v2941
    %v3292 = vpack.c.b16 %v2949, %v2942
    %v3293 = vpack.c.b16 %v2950, %v2943
    %v3294 = vpack.c.b16 %v2951, %v2944
    %v3295 = vpack.c.b16 %v2952, %v2945
    %v3296 = vpack.c.b16 %v2953, %v2946
    %v3297 = vpack.c.b16 %v2961, %v2954
    %v3298 = vpack.c.b16 %v2962, %v2955
    %v3299 = vpack.c.b16 %v2963, %v2956
    %v3300 = vpack.c.b16 %v2964, %v2957
    %v3301 = vpack.c.b16 %v2965, %v2958
    %v3302 = vpack.c.b16 %v2966, %v2959
    %v3303 = vpack.c.b16 %v2967, %v2960
    %v3304 = vpack.c.b16 %v2975, %v2968
    %v3305 = vpack.c.b16 %v2976, %v2969
    %v3306 = vpack.c.b16 %v2977, %v2970
    %v3307 = vpack.c.b16 %v2978, %v2971
    %v3308 = vpack.c.b16 %v2979, %v2972
    %v3309 = vpack.c.b16 %v2980, %v2973
    %v3310 = vpack.c.b16 %v2981, %v2974
    %v3311 = vpack.c.b16 %v2989, %v2982
    %v3312 = vpack.c.b16 %v2990, %v2983
    %v3313 = vpack.c.b16 %v2991, %v2984
    %v3314 = vpack.c.b16 %v2992, %v2985
    %v3315 = vpack.c.b16 %v2993, %v2986
    %v3316 = vpack.c.b16 %v2994, %v2987
    %v3317 = vpack.c.b16 %v2995, %v2988
    %v3318 = vpack.c.b16 %v3003, %v2996
    %v3319 = vpack.c.b16 %v3004, %v2997
    %v3320 = vpack.c.b16 %v3005, %v2998
    %v3321 = vpack.c.b16 %v3006, %v2999
    %v3322 = vpack.c.b16 %v3007, %v3000
    %v3323 = vpack.c.b16 %v3008, %v3001
    %v3324 = vpack.c.b16 %v3009, %v3002
    %v3325 = vpack.c.b16 %v3017, %v3010
    %v3326 = vpack.c.b16 %v3018, %v3011
    %v3327 = vpack.c.b16 %v3019, %v3012
    %v3328 = vpack.c.b16 %v3020, %v3013
    %v3329 = vpack.c.b16 %v3021, %v3014
    %v3330 = vpack.c.b16 %v3022, %v3015
    %v3331 = vpack.c.b16 %v3023, %v3016
    %v3332 = vpack.c.b16 %v3031, %v3024
    %v3333 = vpack.c.b16 %v3032, %v3025
    %v3334 = vpack.c.b16 %v3033, %v3026
    %v3335 = vpack.c.b16 %v3034, %v3027
    %v3336 = vpack.c.b16 %v3035, %v3028
    %v3337 = vpack.c.b16 %v3036, %v3029
    %v3338 = vpack.c.b16 %v3037, %v3030
    %v3339 = vpack.c.b16 %v3045, %v3038
    %v3340 = vpack.c.b16 %v3046, %v3039
    %v3341 = vpack.c.b16 %v3047, %v3040
    %v3342 = vpack.c.b16 %v3048, %v3041
    %v3343 = vpack.c.b16 %v3049, %v3042
    %v3344 = vpack.c.b16 %v3050, %v3043
    %v3345 = vpack.c.b16 %v3051, %v3044
    %v3346 = vpack.c.b16 %v3059, %v3052
    %v3347 = vpack.c.b16 %v3060, %v3053
    %v3348 = vpack.c.b16 %v3061, %v3054
    %v3349 = vpack.c.b16 %v3062, %v3055
    %v3350 = vpack.c.b16 %v3063, %v3056
    %v3351 = vpack.c.b16 %v3064, %v3057
    %v3352 = vpack.c.b16 %v3065, %v3058
    %v3353 = vpack.c.b16 %v3073, %v3066
    %v3354 = vpack.c.b16 %v3074, %v3067
    %v3355 = vpack.c.b16 %v3075, %v3068
    %v3356 = vpack.c.b16 %v3076, %v3069
    %v3357 = vpack.c.b16 %v3077, %v3070
    %v3358 = vpack.c.b16 %v3078, %v3071
    %v3359 = vpack.c.b16 %v3079, %v3072
    %v3360 = vpack.c.b16 %v3087, %v3080
    %v3361 = vpack.c.b16 %v3088, %v3081
    %v3362 = vpack.c.b16 %v3089, %v3082
    %v3363 = vpack.c.b16 %v3090, %v3083
    %v3364 = vpack.c.b16 %v3091, %v3084
    %v3365 = vpack.c.b16 %v3092, %v3085
    %v3366 = vpack.c.b16 %v3093, %v3086
    %v3367 = vpack.c.b16 %v3101, %v3094
    %v3368 = vpack.c.b16 %v3102, %v3095
    %v3369 = vpack.c.b16 %v3103, %v3096
    %v3370 = vpack.c.b16 %v3104, %v3097
    %v3371 = vpack.c.b16 %v3105, %v3098
    %v3372 = vpack.c.b16 %v3106, %v3099
    %v3373 = vpack.c.b16 %v3107, %v3100
    %v3374 = vpack.c.b16 %v3115, %v3108
    %v3375 = vpack.c.b16 %v3116, %v3109
    %v3376 = vpack.c.b16 %v3117, %v3110
    %v3377 = vpack.c.b16 %v3118, %v3111
    %v3378 = vpack.c.b16 %v3119, %v3112
    %v3379 = vpack.c.b16 %v3120, %v3113
    %v3380 = vpack.c.b16 %v3121, %v3114
    %v3381 = vpack.c.b16 %v3129, %v3122
    %v3382 = vpack.c.b16 %v3130, %v3123
    %v3383 = vpack.c.b16 %v3131, %v3124
    %v3384 = vpack.c.b16 %v3132, %v3125
    %v3385 = vpack.c.b16 %v3133, %v3126
    %v3386 = vpack.c.b16 %v3134, %v3127
    %v3387 = vpack.c.b16 %v3135, %v3128
    %v3388 = vpack.c.b16 %v3143, %v3136
    %v3389 = vpack.c.b16 %v3144, %v3137
    %v3390 = vpack.c.b16 %v3145, %v3138
    %v3391 = vpack.c.b16 %v3146, %v3139
    %v3392 = vpack.c.b16 %v3147, %v3140
    %v3393 = vpack.c.b16 %v3148, %v3141
    %v3394 = vpack.c.b16 %v3149, %v3142
    %v3395 = vpack.c.b16 %v3157, %v3150
    %v3396 = vpack.c.b16 %v3158, %v3151
    %v3397 = vpack.c.b16 %v3159, %v3152
    %v3398 = vpack.c.b16 %v3160, %v3153
    %v3399 = vpack.c.b16 %v3161, %v3154
    %v3400 = vpack.c.b16 %v3162, %v3155
    %v3401 = vpack.c.b16 %v3163, %v3156
    %v3402 = vpack.c.b16 %v3171, %v3164
    %v3403 = vpack.c.b16 %v3172, %v3165
    %v3404 = vpack.c.b16 %v3173, %v3166
    %v3405 = vpack.c.b16 %v3174, %v3167
    %v3406 = vpack.c.b16 %v3175, %v3168
    %v3407 = vpack.c.b16 %v3176, %v3169
    %v3408 = vpack.c.b16 %v3177, %v3170
    %v3409 = vpack.c.b16 %v3185, %v3178
    %v3410 = vpack.c.b16 %v3186, %v3179
    %v3411 = vpack.c.b16 %v3187, %v3180
    %v3412 = vpack.c.b16 %v3188, %v3181
    %v3413 = vpack.c.b16 %v3189, %v3182
    %v3414 = vpack.c.b16 %v3190, %v3183
    %v3415 = vpack.c.b16 %v3191, %v3184
    %v3416 = vpack.c.b16 %v3199, %v3192
    %v3417 = vpack.c.b16 %v3200, %v3193
    %v3418 = vpack.c.b16 %v3201, %v3194
    %v3419 = vpack.c.b16 %v3202, %v3195
    %v3420 = vpack.c.b16 %v3203, %v3196
    %v3421 = vpack.c.b16 %v3204, %v3197
    %v3422 = vpack.c.b16 %v3205, %v3198
    %v3423 = vpack.c.b16 %v3213, %v3206
    %v3424 = vpack.c.b16 %v3214, %v3207
    %v3425 = vpack.c.b16 %v3215, %v3208
    %v3426 = vpack.c.b16 %v3216, %v3209
    %v3427 = vpack.c.b16 %v3217, %v3210
    %v3428 = vpack.c.b16 %v3218, %v3211
    %v3429 = vpack.c.b16 %v3219, %v3212
    %v3430 = vpack.c.b16 %v3227, %v3220
    %v3431 = vpack.c.b16 %v3228, %v3221
    %v3432 = vpack.c.b16 %v3229, %v3222
    %v3433 = vpack.c.b16 %v3230, %v3223
    %v3434 = vpack.c.b16 %v3231, %v3224
    %v3435 = vpack.c.b16 %v3232, %v3225
    %v3436 = vpack.c.b16 %v3233, %v3226
    %v3437 = vpack.c.b16 %v3241, %v3234
    %v3438 = vpack.c.b16 %v3242, %v3235
    %v3439 = vpack.c.b16 %v3243, %v3236
    %v3440 = vpack.c.b16 %v3244, %v3237
    %v3441 = vpack.c.b16 %v3245, %v3238
    %v3442 = vpack.c.b16 %v3246, %v3239
    %v3443 = vpack.c.b16 %v3247, %v3240
    %v3444 = vpack.c.b16 %v3255, %v3248
    %v3445 = vpack.c.b16 %v3256, %v3249
    %v3446 = vpack.c.b16 %v3257, %v3250
    %v3447 = vpack.c.b16 %v3258, %v3251
    %v3448 = vpack.c.b16 %v3259, %v3252
    %v3449 = vpack.c.b16 %v3260, %v3253
    %v3450 = vpack.c.b16 %v3261, %v3254
    %v3451 = vpack.c.b16 %v3269, %v3262
    %v3452 = vpack.c.b16 %v3270, %v3263
    %v3453 = vpack.c.b16 %v3271, %v3264
    %v3454 = vpack.c.b16 %v3272, %v3265
    %v3455 = vpack.c.b16 %v3273, %v3266
    %v3456 = vpack.c.b16 %v3274, %v3267
    %v3457 = vpack.c.b16 %v3275, %v3268
    %v3458 = vpack.c.b16 %v3283, %v3276
    %v3459 = vpack.c.b16 %v3284, %v3277
    %v3460 = vpack.c.b16 %v3285, %v3278
    %v3461 = vpack.c.b16 %v3286, %v3279
    %v3462 = vpack.c.b16 %v3287, %v3280
    %v3463 = vpack.c.b16 %v3288, %v3281
    %v3464 = vpack.c.b16 %v3289, %v3282
    %v3641 = vsel %vm2125, %v2523, 0
    %3643 = vmatpush.bf16.msra.mxu0 %v3339
    %3644 = vmatpush.bf16.msra.mxu0 %v3332
    %3645 = vmatpush.bf16.msra.mxu0 %v3325
    %3646 = vmatpush.bf16.msra.mxu0 %v3318
    %3647 = vmatpush.bf16.msra.mxu0 %v3311
    %3648 = vmatpush.bf16.msra.mxu0 %v3304
    %3649 = vmatpush.bf16.msra.mxu0 %v3297
    %3650 = vmatpush.bf16.msra.mxu0 %v3290
    %3651 = vmatmul.bf16.gmra.mxu0 %v2520
    %v3652 = vpop.f32.mrf.mxu0
    %v3653 = vadd.f32 %v2726, %v3652
    %v3654 = vpop.f32.mrf.mxu0
    %v3655 = vadd.f32 %v2726, %v3654
    %3656 = vdwg.mxu0
    %3657 = vmatpush.bf16.msra.mxu0 %v3395
    %3658 = vmatpush.bf16.msra.mxu0 %v3388
    %3659 = vmatpush.bf16.msra.mxu0 %v3381
    %3660 = vmatpush.bf16.msra.mxu0 %v3374
    %3661 = vmatpush.bf16.msra.mxu0 %v3367
    %3662 = vmatpush.bf16.msra.mxu0 %v3360
    %3663 = vmatpush.bf16.msra.mxu0 %v3353
    %3664 = vmatpush.bf16.msra.mxu0 %v3346
    %3665 = vmatmul.bf16.gmra.mxu0 %v2521
    %v3666 = vpop.f32.mrf.mxu0
    %v3667 = vadd.f32 %v3653, %v3666
    %v3668 = vpop.f32.mrf.mxu0
    %v3669 = vadd.f32 %v3655, %v3668
    %3670 = vdwg.mxu0
    %3671 = vmatpush.bf16.msra.mxu0 %v3451
    %3672 = vmatpush.bf16.msra.mxu0 %v3444
    %3673 = vmatpush.bf16.msra.mxu0 %v3437
    %3674 = vmatpush.bf16.msra.mxu0 %v3430
    %3675 = vmatpush.bf16.msra.mxu0 %v3423
    %3676 = vmatpush.bf16.msra.mxu0 %v3416
    %3677 = vmatpush.bf16.msra.mxu0 %v3409
    %3678 = vmatpush.bf16.msra.mxu0 %v3402
    %3679 = vmatmul.bf16.gmra.mxu0 %v2522
    %v3680 = vpop.f32.mrf.mxu0
    %v3681 = vadd.f32 %v3667, %v3680
    %v3682 = vpop.f32.mrf.mxu0
    %v3683 = vadd.f32 %v3669, %v3682
    %3684 = vdwg.mxu0
    %3685 = vmatpush.bf16.msra.mxu0 0
    %3686 = vmatpush.bf16.msra.mxu0 0
    %3687 = vmatpush.bf16.msra.mxu0 0
    %3688 = vmatpush.bf16.msra.mxu0 0
    %3689 = vmatpush.bf16.msra.mxu0 0
    %3690 = vmatpush.bf16.msra.mxu0 0
    %3691 = vmatpush.bf16.msra.mxu0 0
    %3692 = vmatpush.bf16.msra.mxu0 %v3458
    %3693 = vmatmul.bf16.gmra.mxu0 %v3641
    %v3694 = vpop.f32.mrf.mxu0
    %v3695 = vadd.f32 %v3681, %v3694
    %v3696 = vpop.f32.mrf.mxu0
    %v3697 = vadd.f32 %v3683, %v3696
    %3698 = vdwg.mxu0
    %3699 = vmatpush.bf16.msra.mxu0 %v3340
    %3700 = vmatpush.bf16.msra.mxu0 %v3333
    %3701 = vmatpush.bf16.msra.mxu0 %v3326
    %3702 = vmatpush.bf16.msra.mxu0 %v3319
    %3703 = vmatpush.bf16.msra.mxu0 %v3312
    %3704 = vmatpush.bf16.msra.mxu0 %v3305
    %3705 = vmatpush.bf16.msra.mxu0 %v3298
    %3706 = vmatpush.bf16.msra.mxu0 %v3291
    %3707 = vmatmul.bf16.gmra.mxu0 %v2520
    %v3708 = vpop.f32.mrf.mxu0
    %v3709 = vadd.f32 %v2727, %v3708
    %v3710 = vpop.f32.mrf.mxu0
    %v3711 = vadd.f32 %v2727, %v3710
    %3712 = vdwg.mxu0
    %3713 = vmatpush.bf16.msra.mxu0 %v3396
    %3714 = vmatpush.bf16.msra.mxu0 %v3389
    %3715 = vmatpush.bf16.msra.mxu0 %v3382
    %3716 = vmatpush.bf16.msra.mxu0 %v3375
    %3717 = vmatpush.bf16.msra.mxu0 %v3368
    %3718 = vmatpush.bf16.msra.mxu0 %v3361
    %3719 = vmatpush.bf16.msra.mxu0 %v3354
    %3720 = vmatpush.bf16.msra.mxu0 %v3347
    %3721 = vmatmul.bf16.gmra.mxu0 %v2521
    %v3722 = vpop.f32.mrf.mxu0
    %v3723 = vadd.f32 %v3709, %v3722
    %v3724 = vpop.f32.mrf.mxu0
    %v3725 = vadd.f32 %v3711, %v3724
    %3726 = vdwg.mxu0
    %3727 = vmatpush.bf16.msra.mxu0 %v3452
    %3728 = vmatpush.bf16.msra.mxu0 %v3445
    %3729 = vmatpush.bf16.msra.mxu0 %v3438
    %3730 = vmatpush.bf16.msra.mxu0 %v3431
    %3731 = vmatpush.bf16.msra.mxu0 %v3424
    %3732 = vmatpush.bf16.msra.mxu0 %v3417
    %3733 = vmatpush.bf16.msra.mxu0 %v3410
    %3734 = vmatpush.bf16.msra.mxu0 %v3403
    %3735 = vmatmul.bf16.gmra.mxu0 %v2522
    %v3736 = vpop.f32.mrf.mxu0
    %v3737 = vadd.f32 %v3723, %v3736
    %v3738 = vpop.f32.mrf.mxu0
    %v3739 = vadd.f32 %v3725, %v3738
    %3740 = vdwg.mxu0
    %3741 = vmatpush.bf16.msra.mxu0 0
    %3742 = vmatpush.bf16.msra.mxu0 0
    %3743 = vmatpush.bf16.msra.mxu0 0
    %3744 = vmatpush.bf16.msra.mxu0 0
    %3745 = vmatpush.bf16.msra.mxu0 0
    %3746 = vmatpush.bf16.msra.mxu0 0
    %3747 = vmatpush.bf16.msra.mxu0 0
    %3748 = vmatpush.bf16.msra.mxu0 %v3459
    %3749 = vmatmul.bf16.gmra.mxu0 %v3641
    %v3750 = vpop.f32.mrf.mxu0
    %v3751 = vadd.f32 %v3737, %v3750
    %v3752 = vpop.f32.mrf.mxu0
    %v3753 = vadd.f32 %v3739, %v3752
    %3754 = vdwg.mxu0
    %3755 = vmatpush.bf16.msra.mxu0 %v3341
    %3756 = vmatpush.bf16.msra.mxu0 %v3334
    %3757 = vmatpush.bf16.msra.mxu0 %v3327
    %3758 = vmatpush.bf16.msra.mxu0 %v3320
    %3759 = vmatpush.bf16.msra.mxu0 %v3313
    %3760 = vmatpush.bf16.msra.mxu0 %v3306
    %3761 = vmatpush.bf16.msra.mxu0 %v3299
    %3762 = vmatpush.bf16.msra.mxu0 %v3292
    %3763 = vmatmul.bf16.gmra.mxu0 %v2520
    %v3764 = vpop.f32.mrf.mxu0
    %v3765 = vadd.f32 %v2728, %v3764
    %v3766 = vpop.f32.mrf.mxu0
    %v3767 = vadd.f32 %v2728, %v3766
    %3768 = vdwg.mxu0
    %3769 = vmatpush.bf16.msra.mxu0 %v3397
    %3770 = vmatpush.bf16.msra.mxu0 %v3390
    %3771 = vmatpush.bf16.msra.mxu0 %v3383
    %3772 = vmatpush.bf16.msra.mxu0 %v3376
    %3773 = vmatpush.bf16.msra.mxu0 %v3369
    %3774 = vmatpush.bf16.msra.mxu0 %v3362
    %3775 = vmatpush.bf16.msra.mxu0 %v3355
    %3776 = vmatpush.bf16.msra.mxu0 %v3348
    %3777 = vmatmul.bf16.gmra.mxu0 %v2521
    %v3778 = vpop.f32.mrf.mxu0
    %v3779 = vadd.f32 %v3765, %v3778
    %v3780 = vpop.f32.mrf.mxu0
    %v3781 = vadd.f32 %v3767, %v3780
    %3782 = vdwg.mxu0
    %3783 = vmatpush.bf16.msra.mxu0 %v3453
    %3784 = vmatpush.bf16.msra.mxu0 %v3446
    %3785 = vmatpush.bf16.msra.mxu0 %v3439
    %3786 = vmatpush.bf16.msra.mxu0 %v3432
    %3787 = vmatpush.bf16.msra.mxu0 %v3425
    %3788 = vmatpush.bf16.msra.mxu0 %v3418
    %3789 = vmatpush.bf16.msra.mxu0 %v3411
    %3790 = vmatpush.bf16.msra.mxu0 %v3404
    %3791 = vmatmul.bf16.gmra.mxu0 %v2522
    %v3792 = vpop.f32.mrf.mxu0
    %v3793 = vadd.f32 %v3779, %v3792
    %v3794 = vpop.f32.mrf.mxu0
    %v3795 = vadd.f32 %v3781, %v3794
    %3796 = vdwg.mxu0
    %3797 = vmatpush.bf16.msra.mxu0 0
    %3798 = vmatpush.bf16.msra.mxu0 0
    %3799 = vmatpush.bf16.msra.mxu0 0
    %3800 = vmatpush.bf16.msra.mxu0 0
    %3801 = vmatpush.bf16.msra.mxu0 0
    %3802 = vmatpush.bf16.msra.mxu0 0
    %3803 = vmatpush.bf16.msra.mxu0 0
    %3804 = vmatpush.bf16.msra.mxu0 %v3460
    %3805 = vmatmul.bf16.gmra.mxu0 %v3641
    %v3806 = vpop.f32.mrf.mxu0
    %v3807 = vadd.f32 %v3793, %v3806
    %v3808 = vpop.f32.mrf.mxu0
    %v3809 = vadd.f32 %v3795, %v3808
    %3810 = vdwg.mxu0
    %3811 = vmatpush.bf16.msra.mxu0 %v3342
    %3812 = vmatpush.bf16.msra.mxu0 %v3335
    %3813 = vmatpush.bf16.msra.mxu0 %v3328
    %3814 = vmatpush.bf16.msra.mxu0 %v3321
    %3815 = vmatpush.bf16.msra.mxu0 %v3314
    %3816 = vmatpush.bf16.msra.mxu0 %v3307
    %3817 = vmatpush.bf16.msra.mxu0 %v3300
    %3818 = vmatpush.bf16.msra.mxu0 %v3293
    %3819 = vmatmul.bf16.gmra.mxu0 %v2520
    %v3820 = vpop.f32.mrf.mxu0
    %v3821 = vadd.f32 %v2729, %v3820
    %v3822 = vpop.f32.mrf.mxu0
    %v3823 = vadd.f32 %v2729, %v3822
    %3824 = vdwg.mxu0
    %3825 = vmatpush.bf16.msra.mxu0 %v3398
    %3826 = vmatpush.bf16.msra.mxu0 %v3391
    %3827 = vmatpush.bf16.msra.mxu0 %v3384
    %3828 = vmatpush.bf16.msra.mxu0 %v3377
    %3829 = vmatpush.bf16.msra.mxu0 %v3370
    %3830 = vmatpush.bf16.msra.mxu0 %v3363
    %3831 = vmatpush.bf16.msra.mxu0 %v3356
    %3832 = vmatpush.bf16.msra.mxu0 %v3349
    %3833 = vmatmul.bf16.gmra.mxu0 %v2521
    %v3834 = vpop.f32.mrf.mxu0
    %v3835 = vadd.f32 %v3821, %v3834
    %v3836 = vpop.f32.mrf.mxu0
    %v3837 = vadd.f32 %v3823, %v3836
    %3838 = vdwg.mxu0
    %3839 = vmatpush.bf16.msra.mxu0 %v3454
    %3840 = vmatpush.bf16.msra.mxu0 %v3447
    %3841 = vmatpush.bf16.msra.mxu0 %v3440
    %3842 = vmatpush.bf16.msra.mxu0 %v3433
    %3843 = vmatpush.bf16.msra.mxu0 %v3426
    %3844 = vmatpush.bf16.msra.mxu0 %v3419
    %3845 = vmatpush.bf16.msra.mxu0 %v3412
    %3846 = vmatpush.bf16.msra.mxu0 %v3405
    %3847 = vmatmul.bf16.gmra.mxu0 %v2522
    %v3848 = vpop.f32.mrf.mxu0
    %v3849 = vadd.f32 %v3835, %v3848
    %v3850 = vpop.f32.mrf.mxu0
    %v3851 = vadd.f32 %v3837, %v3850
    %3852 = vdwg.mxu0
    %3853 = vmatpush.bf16.msra.mxu0 0
    %3854 = vmatpush.bf16.msra.mxu0 0
    %3855 = vmatpush.bf16.msra.mxu0 0
    %3856 = vmatpush.bf16.msra.mxu0 0
    %3857 = vmatpush.bf16.msra.mxu0 0
    %3858 = vmatpush.bf16.msra.mxu0 0
    %3859 = vmatpush.bf16.msra.mxu0 0
    %3860 = vmatpush.bf16.msra.mxu0 %v3461
    %3861 = vmatmul.bf16.gmra.mxu0 %v3641
    %v3862 = vpop.f32.mrf.mxu0
    %v3863 = vadd.f32 %v3849, %v3862
    %v3864 = vpop.f32.mrf.mxu0
    %v3865 = vadd.f32 %v3851, %v3864
    %3866 = vdwg.mxu0
    %3867 = vmatpush.bf16.msra.mxu0 %v3343
    %3868 = vmatpush.bf16.msra.mxu0 %v3336
    %3869 = vmatpush.bf16.msra.mxu0 %v3329
    %3870 = vmatpush.bf16.msra.mxu0 %v3322
    %3871 = vmatpush.bf16.msra.mxu0 %v3315
    %3872 = vmatpush.bf16.msra.mxu0 %v3308
    %3873 = vmatpush.bf16.msra.mxu0 %v3301
    %3874 = vmatpush.bf16.msra.mxu0 %v3294
    %3875 = vmatmul.bf16.gmra.mxu0 %v2520
    %v3876 = vpop.f32.mrf.mxu0
    %v3877 = vadd.f32 %v2730, %v3876
    %v3878 = vpop.f32.mrf.mxu0
    %v3879 = vadd.f32 %v2730, %v3878
    %3880 = vdwg.mxu0
    %3881 = vmatpush.bf16.msra.mxu0 %v3399
    %3882 = vmatpush.bf16.msra.mxu0 %v3392
    %3883 = vmatpush.bf16.msra.mxu0 %v3385
    %3884 = vmatpush.bf16.msra.mxu0 %v3378
    %3885 = vmatpush.bf16.msra.mxu0 %v3371
    %3886 = vmatpush.bf16.msra.mxu0 %v3364
    %3887 = vmatpush.bf16.msra.mxu0 %v3357
    %3888 = vmatpush.bf16.msra.mxu0 %v3350
    %3889 = vmatmul.bf16.gmra.mxu0 %v2521
    %v3890 = vpop.f32.mrf.mxu0
    %v3891 = vadd.f32 %v3877, %v3890
    %v3892 = vpop.f32.mrf.mxu0
    %v3893 = vadd.f32 %v3879, %v3892
    %3894 = vdwg.mxu0
    %3895 = vmatpush.bf16.msra.mxu0 %v3455
    %3896 = vmatpush.bf16.msra.mxu0 %v3448
    %3897 = vmatpush.bf16.msra.mxu0 %v3441
    %3898 = vmatpush.bf16.msra.mxu0 %v3434
    %3899 = vmatpush.bf16.msra.mxu0 %v3427
    %3900 = vmatpush.bf16.msra.mxu0 %v3420
    %3901 = vmatpush.bf16.msra.mxu0 %v3413
    %3902 = vmatpush.bf16.msra.mxu0 %v3406
    %3903 = vmatmul.bf16.gmra.mxu0 %v2522
    %v3904 = vpop.f32.mrf.mxu0
    %v3905 = vadd.f32 %v3891, %v3904
    %v3906 = vpop.f32.mrf.mxu0
    %v3907 = vadd.f32 %v3893, %v3906
    %3908 = vdwg.mxu0
    %3909 = vmatpush.bf16.msra.mxu0 0
    %3910 = vmatpush.bf16.msra.mxu0 0
    %3911 = vmatpush.bf16.msra.mxu0 0
    %3912 = vmatpush.bf16.msra.mxu0 0
    %3913 = vmatpush.bf16.msra.mxu0 0
    %3914 = vmatpush.bf16.msra.mxu0 0
    %3915 = vmatpush.bf16.msra.mxu0 0
    %3916 = vmatpush.bf16.msra.mxu0 %v3462
    %3917 = vmatmul.bf16.gmra.mxu0 %v3641
    %v3918 = vpop.f32.mrf.mxu0
    %v3919 = vadd.f32 %v3905, %v3918
    %v3920 = vpop.f32.mrf.mxu0
    %v3921 = vadd.f32 %v3907, %v3920
    %3922 = vdwg.mxu0
    %3923 = vmatpush.bf16.msra.mxu0 %v3344
    %3924 = vmatpush.bf16.msra.mxu0 %v3337
    %3925 = vmatpush.bf16.msra.mxu0 %v3330
    %3926 = vmatpush.bf16.msra.mxu0 %v3323
    %3927 = vmatpush.bf16.msra.mxu0 %v3316
    %3928 = vmatpush.bf16.msra.mxu0 %v3309
    %3929 = vmatpush.bf16.msra.mxu0 %v3302
    %3930 = vmatpush.bf16.msra.mxu0 %v3295
    %3931 = vmatmul.bf16.gmra.mxu0 %v2520
    %v3932 = vpop.f32.mrf.mxu0
    %v3933 = vadd.f32 %v2731, %v3932
    %v3934 = vpop.f32.mrf.mxu0
    %v3935 = vadd.f32 %v2731, %v3934
    %3936 = vdwg.mxu0
    %3937 = vmatpush.bf16.msra.mxu0 %v3400
    %3938 = vmatpush.bf16.msra.mxu0 %v3393
    %3939 = vmatpush.bf16.msra.mxu0 %v3386
    %3940 = vmatpush.bf16.msra.mxu0 %v3379
    %3941 = vmatpush.bf16.msra.mxu0 %v3372
    %3942 = vmatpush.bf16.msra.mxu0 %v3365
    %3943 = vmatpush.bf16.msra.mxu0 %v3358
    %3944 = vmatpush.bf16.msra.mxu0 %v3351
    %3945 = vmatmul.bf16.gmra.mxu0 %v2521
    %v3946 = vpop.f32.mrf.mxu0
    %v3947 = vadd.f32 %v3933, %v3946
    %v3948 = vpop.f32.mrf.mxu0
    %v3949 = vadd.f32 %v3935, %v3948
    %3950 = vdwg.mxu0
    %3951 = vmatpush.bf16.msra.mxu0 %v3456
    %3952 = vmatpush.bf16.msra.mxu0 %v3449
    %3953 = vmatpush.bf16.msra.mxu0 %v3442
    %3954 = vmatpush.bf16.msra.mxu0 %v3435
    %3955 = vmatpush.bf16.msra.mxu0 %v3428
    %3956 = vmatpush.bf16.msra.mxu0 %v3421
    %3957 = vmatpush.bf16.msra.mxu0 %v3414
    %3958 = vmatpush.bf16.msra.mxu0 %v3407
    %3959 = vmatmul.bf16.gmra.mxu0 %v2522
    %v3960 = vpop.f32.mrf.mxu0
    %v3961 = vadd.f32 %v3947, %v3960
    %v3962 = vpop.f32.mrf.mxu0
    %v3963 = vadd.f32 %v3949, %v3962
    %3964 = vdwg.mxu0
    %3965 = vmatpush.bf16.msra.mxu0 0
    %3966 = vmatpush.bf16.msra.mxu0 0
    %3967 = vmatpush.bf16.msra.mxu0 0
    %3968 = vmatpush.bf16.msra.mxu0 0
    %3969 = vmatpush.bf16.msra.mxu0 0
    %3970 = vmatpush.bf16.msra.mxu0 0
    %3971 = vmatpush.bf16.msra.mxu0 0
    %3972 = vmatpush.bf16.msra.mxu0 %v3463
    %3973 = vmatmul.bf16.gmra.mxu0 %v3641
    %v3974 = vpop.f32.mrf.mxu0
    %v3975 = vadd.f32 %v3961, %v3974
    %v3976 = vpop.f32.mrf.mxu0
    %v3977 = vadd.f32 %v3963, %v3976
    %3978 = vdwg.mxu0
    %3979 = vmatpush.bf16.msra.mxu0 %v3345
    %3980 = vmatpush.bf16.msra.mxu0 %v3338
    %3981 = vmatpush.bf16.msra.mxu0 %v3331
    %3982 = vmatpush.bf16.msra.mxu0 %v3324
    %3983 = vmatpush.bf16.msra.mxu0 %v3317
    %3984 = vmatpush.bf16.msra.mxu0 %v3310
    %3985 = vmatpush.bf16.msra.mxu0 %v3303
    %3986 = vmatpush.bf16.msra.mxu0 %v3296
    %3987 = vmatmul.bf16.gmra.mxu0 %v2520
    %v3988 = vpop.f32.mrf.mxu0
    %v3989 = vadd.f32 %v2732, %v3988
    %v3990 = vpop.f32.mrf.mxu0
    %v3991 = vadd.f32 %v2732, %v3990
    %3992 = vdwg.mxu0
    %3993 = vmatpush.bf16.msra.mxu0 %v3401
    %3994 = vmatpush.bf16.msra.mxu0 %v3394
    %3995 = vmatpush.bf16.msra.mxu0 %v3387
    %3996 = vmatpush.bf16.msra.mxu0 %v3380
    %3997 = vmatpush.bf16.msra.mxu0 %v3373
    %3998 = vmatpush.bf16.msra.mxu0 %v3366
    %3999 = vmatpush.bf16.msra.mxu0 %v3359
    %4000 = vmatpush.bf16.msra.mxu0 %v3352
    %4001 = vmatmul.bf16.gmra.mxu0 %v2521
    %v4002 = vpop.f32.mrf.mxu0
    %v4003 = vadd.f32 %v3989, %v4002
    %v4004 = vpop.f32.mrf.mxu0
    %v4005 = vadd.f32 %v3991, %v4004
    %4006 = vdwg.mxu0
    %4007 = vmatpush.bf16.msra.mxu0 %v3457
    %4008 = vmatpush.bf16.msra.mxu0 %v3450
    %4009 = vmatpush.bf16.msra.mxu0 %v3443
    %4010 = vmatpush.bf16.msra.mxu0 %v3436
    %4011 = vmatpush.bf16.msra.mxu0 %v3429
    %4012 = vmatpush.bf16.msra.mxu0 %v3422
    %4013 = vmatpush.bf16.msra.mxu0 %v3415
    %4014 = vmatpush.bf16.msra.mxu0 %v3408
    %4015 = vmatmul.bf16.gmra.mxu0 %v2522
    %v4016 = vpop.f32.mrf.mxu0
    %v4017 = vadd.f32 %v4003, %v4016
    %v4018 = vpop.f32.mrf.mxu0
    %v4019 = vadd.f32 %v4005, %v4018
    %4020 = vdwg.mxu0
    %4021 = vmatpush.bf16.msra.mxu0 0
    %4022 = vmatpush.bf16.msra.mxu0 0
    %4023 = vmatpush.bf16.msra.mxu0 0
    %4024 = vmatpush.bf16.msra.mxu0 0
    %4025 = vmatpush.bf16.msra.mxu0 0
    %4026 = vmatpush.bf16.msra.mxu0 0
    %4027 = vmatpush.bf16.msra.mxu0 0
    %4028 = vmatpush.bf16.msra.mxu0 %v3464
    %4029 = vmatmul.bf16.gmra.mxu0 %v3641
    %v4030 = vpop.f32.mrf.mxu0
    %v4031 = vadd.f32 %v4017, %v4030
    %v4032 = vpop.f32.mrf.mxu0
    %v4033 = vadd.f32 %v4019, %v4032
    %4034 = vdwg.mxu0
    %v4035 = vxor.u32 %v3695, 2147483648
    %v4036 = vxor.u32 %v3751, 2147483648
    %v4037 = vxor.u32 %v3807, 2147483648
    %v4038 = vxor.u32 %v3863, 2147483648
    %v4039 = vxor.u32 %v3919, 2147483648
    %v4040 = vxor.u32 %v3975, 2147483648
    %v4041 = vxor.u32 %v4031, 2147483648
    %v4042 = vxor.u32 %v3697, 2147483648
    %v4043 = vxor.u32 %v3753, 2147483648
    %v4044 = vxor.u32 %v3809, 2147483648
    %v4045 = vxor.u32 %v3865, 2147483648
    %v4046 = vxor.u32 %v3921, 2147483648
    %v4047 = vxor.u32 %v3977, 2147483648
    %v4048 = vxor.u32 %v4033, 2147483648
    %v4049 = vmul.f32 %v4035, 1.442695
    %v4050 = vpow.pop %v4049
    %v4051 = vmul.f32 %v4036, 1.442695
    %v4052 = vpow.pop %v4051
    %v4053 = vmul.f32 %v4037, 1.442695
    %v4054 = vpow.pop %v4053
    %v4055 = vmul.f32 %v4038, 1.442695
    %v4056 = vpow.pop %v4055
    %v4057 = vmul.f32 %v4039, 1.442695
    %v4058 = vpow.pop %v4057
    %v4059 = vmul.f32 %v4040, 1.442695
    %v4060 = vpow.pop %v4059
    %v4061 = vmul.f32 %v4041, 1.442695
    %v4062 = vpow.pop %v4061
    %v4063 = vmul.f32 %v4042, 1.442695
    %v4064 = vpow.pop %v4063
    %v4065 = vmul.f32 %v4043, 1.442695
    %v4066 = vpow.pop %v4065
    %v4067 = vmul.f32 %v4044, 1.442695
    %v4068 = vpow.pop %v4067
    %v4069 = vmul.f32 %v4045, 1.442695
    %v4070 = vpow.pop %v4069
    %v4071 = vmul.f32 %v4046, 1.442695
    %v4072 = vpow.pop %v4071
    %v4073 = vmul.f32 %v4047, 1.442695
    %v4074 = vpow.pop %v4073
    %v4075 = vmul.f32 %v4048, 1.442695
    %v4076 = vpow.pop %v4075
    %v4077 = vadd.f32 %v4050, 1.0
    %v4078 = vadd.f32 %v4052, 1.0
    %v4079 = vadd.f32 %v4054, 1.0
    %v4080 = vadd.f32 %v4056, 1.0
    %v4081 = vadd.f32 %v4058, 1.0
    %v4082 = vadd.f32 %v4060, 1.0
    %v4083 = vadd.f32 %v4062, 1.0
    %v4084 = vadd.f32 %v4064, 1.0
    %v4085 = vadd.f32 %v4066, 1.0
    %v4086 = vadd.f32 %v4068, 1.0
    %v4087 = vadd.f32 %v4070, 1.0
    %v4088 = vadd.f32 %v4072, 1.0
    %v4089 = vadd.f32 %v4074, 1.0
    %v4090 = vadd.f32 %v4076, 1.0
    %v4091 = vrcp.pop %v4077
    %v4092 = vmul.f32 %v4077, %v4091
    %v4093 = vsub.f32 1.0, %v4092
    %v4094 = vmul.f32 %v4091, %v4093
    %v4095 = vadd.f32 %v4091, %v4094
    %vm4096 = vweird.f32 %v4077
    %vm4097 = vweird.f32 %v4091
    %vm4098 = vmor %vm4096, %vm4097
    %v4099 = vsel %vm4098, %v4091, %v4095
    %v4100 = vand.u32 2147483647, %v4077
    %vm4101 = vcmp.eq.f32.partialorder %v4100, 8.507059e+37
    %v4102 = vand.u32 %v4077, 2147483648
    %v4103 = vor.u32 1.1754944e-38, %v4102
    %v4104 = vsel %vm4101, %v4103, %v4099
    %v4105 = vmul.f32 1.0, %v4104
    %v4106 = vrcp.pop %v4078
    %v4107 = vmul.f32 %v4078, %v4106
    %v4108 = vsub.f32 1.0, %v4107
    %v4109 = vmul.f32 %v4106, %v4108
    %v4110 = vadd.f32 %v4106, %v4109
    %vm4111 = vweird.f32 %v4078
    %vm4112 = vweird.f32 %v4106
    %vm4113 = vmor %vm4111, %vm4112
    %v4114 = vsel %vm4113, %v4106, %v4110
    %v4115 = vand.u32 2147483647, %v4078
    %vm4116 = vcmp.eq.f32.partialorder %v4115, 8.507059e+37
    %v4117 = vand.u32 %v4078, 2147483648
    %v4118 = vor.u32 1.1754944e-38, %v4117
    %v4119 = vsel %vm4116, %v4118, %v4114
    %v4120 = vmul.f32 1.0, %v4119
    %v4121 = vrcp.pop %v4079
    %v4122 = vmul.f32 %v4079, %v4121
    %v4123 = vsub.f32 1.0, %v4122
    %v4124 = vmul.f32 %v4121, %v4123
    %v4125 = vadd.f32 %v4121, %v4124
    %vm4126 = vweird.f32 %v4079
    %vm4127 = vweird.f32 %v4121
    %vm4128 = vmor %vm4126, %vm4127
    %v4129 = vsel %vm4128, %v4121, %v4125
    %v4130 = vand.u32 2147483647, %v4079
    %vm4131 = vcmp.eq.f32.partialorder %v4130, 8.507059e+37
    %v4132 = vand.u32 %v4079, 2147483648
    %v4133 = vor.u32 1.1754944e-38, %v4132
    %v4134 = vsel %vm4131, %v4133, %v4129
    %v4135 = vmul.f32 1.0, %v4134
    %v4136 = vrcp.pop %v4080
    %v4137 = vmul.f32 %v4080, %v4136
    %v4138 = vsub.f32 1.0, %v4137
    %v4139 = vmul.f32 %v4136, %v4138
    %v4140 = vadd.f32 %v4136, %v4139
    %vm4141 = vweird.f32 %v4080
    %vm4142 = vweird.f32 %v4136
    %vm4143 = vmor %vm4141, %vm4142
    %v4144 = vsel %vm4143, %v4136, %v4140
    %v4145 = vand.u32 2147483647, %v4080
    %vm4146 = vcmp.eq.f32.partialorder %v4145, 8.507059e+37
    %v4147 = vand.u32 %v4080, 2147483648
    %v4148 = vor.u32 1.1754944e-38, %v4147
    %v4149 = vsel %vm4146, %v4148, %v4144
    %v4150 = vmul.f32 1.0, %v4149
    %v4151 = vrcp.pop %v4081
    %v4152 = vmul.f32 %v4081, %v4151
    %v4153 = vsub.f32 1.0, %v4152
    %v4154 = vmul.f32 %v4151, %v4153
    %v4155 = vadd.f32 %v4151, %v4154
    %vm4156 = vweird.f32 %v4081
    %vm4157 = vweird.f32 %v4151
    %vm4158 = vmor %vm4156, %vm4157
    %v4159 = vsel %vm4158, %v4151, %v4155
    %v4160 = vand.u32 2147483647, %v4081
    %vm4161 = vcmp.eq.f32.partialorder %v4160, 8.507059e+37
    %v4162 = vand.u32 %v4081, 2147483648
    %v4163 = vor.u32 1.1754944e-38, %v4162
    %v4164 = vsel %vm4161, %v4163, %v4159
    %v4165 = vmul.f32 1.0, %v4164
    %v4166 = vrcp.pop %v4082
    %v4167 = vmul.f32 %v4082, %v4166
    %v4168 = vsub.f32 1.0, %v4167
    %v4169 = vmul.f32 %v4166, %v4168
    %v4170 = vadd.f32 %v4166, %v4169
    %vm4171 = vweird.f32 %v4082
    %vm4172 = vweird.f32 %v4166
    %vm4173 = vmor %vm4171, %vm4172
    %v4174 = vsel %vm4173, %v4166, %v4170
    %v4175 = vand.u32 2147483647, %v4082
    %vm4176 = vcmp.eq.f32.partialorder %v4175, 8.507059e+37
    %v4177 = vand.u32 %v4082, 2147483648
    %v4178 = vor.u32 1.1754944e-38, %v4177
    %v4179 = vsel %vm4176, %v4178, %v4174
    %v4180 = vmul.f32 1.0, %v4179
    %v4181 = vrcp.pop %v4083
    %v4182 = vmul.f32 %v4083, %v4181
    %v4183 = vsub.f32 1.0, %v4182
    %v4184 = vmul.f32 %v4181, %v4183
    %v4185 = vadd.f32 %v4181, %v4184
    %vm4186 = vweird.f32 %v4083
    %vm4187 = vweird.f32 %v4181
    %vm4188 = vmor %vm4186, %vm4187
    %v4189 = vsel %vm4188, %v4181, %v4185
    %v4190 = vand.u32 2147483647, %v4083
    %vm4191 = vcmp.eq.f32.partialorder %v4190, 8.507059e+37
    %v4192 = vand.u32 %v4083, 2147483648
    %v4193 = vor.u32 1.1754944e-38, %v4192
    %v4194 = vsel %vm4191, %v4193, %v4189
    %v4195 = vmul.f32 1.0, %v4194
    %v4196 = vrcp.pop %v4084
    %v4197 = vmul.f32 %v4084, %v4196
    %v4198 = vsub.f32 1.0, %v4197
    %v4199 = vmul.f32 %v4196, %v4198
    %v4200 = vadd.f32 %v4196, %v4199
    %vm4201 = vweird.f32 %v4084
    %vm4202 = vweird.f32 %v4196
    %vm4203 = vmor %vm4201, %vm4202
    %v4204 = vsel %vm4203, %v4196, %v4200
    %v4205 = vand.u32 2147483647, %v4084
    %vm4206 = vcmp.eq.f32.partialorder %v4205, 8.507059e+37
    %v4207 = vand.u32 %v4084, 2147483648
    %v4208 = vor.u32 1.1754944e-38, %v4207
    %v4209 = vsel %vm4206, %v4208, %v4204
    %v4210 = vmul.f32 1.0, %v4209
    %v4211 = vrcp.pop %v4085
    %v4212 = vmul.f32 %v4085, %v4211
    %v4213 = vsub.f32 1.0, %v4212
    %v4214 = vmul.f32 %v4211, %v4213
    %v4215 = vadd.f32 %v4211, %v4214
    %vm4216 = vweird.f32 %v4085
    %vm4217 = vweird.f32 %v4211
    %vm4218 = vmor %vm4216, %vm4217
    %v4219 = vsel %vm4218, %v4211, %v4215
    %v4220 = vand.u32 2147483647, %v4085
    %vm4221 = vcmp.eq.f32.partialorder %v4220, 8.507059e+37
    %v4222 = vand.u32 %v4085, 2147483648
    %v4223 = vor.u32 1.1754944e-38, %v4222
    %v4224 = vsel %vm4221, %v4223, %v4219
    %v4225 = vmul.f32 1.0, %v4224
    %v4226 = vrcp.pop %v4086
    %v4227 = vmul.f32 %v4086, %v4226
    %v4228 = vsub.f32 1.0, %v4227
    %v4229 = vmul.f32 %v4226, %v4228
    %v4230 = vadd.f32 %v4226, %v4229
    %vm4231 = vweird.f32 %v4086
    %vm4232 = vweird.f32 %v4226
    %vm4233 = vmor %vm4231, %vm4232
    %v4234 = vsel %vm4233, %v4226, %v4230
    %v4235 = vand.u32 2147483647, %v4086
    %vm4236 = vcmp.eq.f32.partialorder %v4235, 8.507059e+37
    %v4237 = vand.u32 %v4086, 2147483648
    %v4238 = vor.u32 1.1754944e-38, %v4237
    %v4239 = vsel %vm4236, %v4238, %v4234
    %v4240 = vmul.f32 1.0, %v4239
    %v4241 = vrcp.pop %v4087
    %v4242 = vmul.f32 %v4087, %v4241
    %v4243 = vsub.f32 1.0, %v4242
    %v4244 = vmul.f32 %v4241, %v4243
    %v4245 = vadd.f32 %v4241, %v4244
    %vm4246 = vweird.f32 %v4087
    %vm4247 = vweird.f32 %v4241
    %vm4248 = vmor %vm4246, %vm4247
    %v4249 = vsel %vm4248, %v4241, %v4245
    %v4250 = vand.u32 2147483647, %v4087
    %vm4251 = vcmp.eq.f32.partialorder %v4250, 8.507059e+37
    %v4252 = vand.u32 %v4087, 2147483648
    %v4253 = vor.u32 1.1754944e-38, %v4252
    %v4254 = vsel %vm4251, %v4253, %v4249
    %v4255 = vmul.f32 1.0, %v4254
    %v4256 = vrcp.pop %v4088
    %v4257 = vmul.f32 %v4088, %v4256
    %v4258 = vsub.f32 1.0, %v4257
    %v4259 = vmul.f32 %v4256, %v4258
    %v4260 = vadd.f32 %v4256, %v4259
    %vm4261 = vweird.f32 %v4088
    %vm4262 = vweird.f32 %v4256
    %vm4263 = vmor %vm4261, %vm4262
    %v4264 = vsel %vm4263, %v4256, %v4260
    %v4265 = vand.u32 2147483647, %v4088
    %vm4266 = vcmp.eq.f32.partialorder %v4265, 8.507059e+37
    %v4267 = vand.u32 %v4088, 2147483648
    %v4268 = vor.u32 1.1754944e-38, %v4267
    %v4269 = vsel %vm4266, %v4268, %v4264
    %v4270 = vmul.f32 1.0, %v4269
    %v4271 = vrcp.pop %v4089
    %v4272 = vmul.f32 %v4089, %v4271
    %v4273 = vsub.f32 1.0, %v4272
    %v4274 = vmul.f32 %v4271, %v4273
    %v4275 = vadd.f32 %v4271, %v4274
    %vm4276 = vweird.f32 %v4089
    %vm4277 = vweird.f32 %v4271
    %vm4278 = vmor %vm4276, %vm4277
    %v4279 = vsel %vm4278, %v4271, %v4275
    %v4280 = vand.u32 2147483647, %v4089
    %vm4281 = vcmp.eq.f32.partialorder %v4280, 8.507059e+37
    %v4282 = vand.u32 %v4089, 2147483648
    %v4283 = vor.u32 1.1754944e-38, %v4282
    %v4284 = vsel %vm4281, %v4283, %v4279
    %v4285 = vmul.f32 1.0, %v4284
    %v4286 = vrcp.pop %v4090
    %v4287 = vmul.f32 %v4090, %v4286
    %v4288 = vsub.f32 1.0, %v4287
    %v4289 = vmul.f32 %v4286, %v4288
    %v4290 = vadd.f32 %v4286, %v4289
    %vm4291 = vweird.f32 %v4090
    %vm4292 = vweird.f32 %v4286
    %vm4293 = vmor %vm4291, %vm4292
    %v4294 = vsel %vm4293, %v4286, %v4290
    %v4295 = vand.u32 2147483647, %v4090
    %vm4296 = vcmp.eq.f32.partialorder %v4295, 8.507059e+37
    %v4297 = vand.u32 %v4090, 2147483648
    %v4298 = vor.u32 1.1754944e-38, %v4297
    %v4299 = vsel %vm4296, %v4298, %v4294
    %v4300 = vmul.f32 1.0, %v4299
    %4301 = vst [vmem:[#allocation2] sm:$0xff] %v4105
    %4302 = vst [vmem:[#allocation2 + $0x8] sm:$0xff] %v4120
    %4303 = vst [vmem:[#allocation2 + $0x10] sm:$0xff] %v4135
    %4304 = vst [vmem:[#allocation2 + $0x18] sm:$0xff] %v4150
    %4305 = vst [vmem:[#allocation2 + $0x20] sm:$0xff] %v4165
    %4306 = vst [vmem:[#allocation2 + $0x28] sm:$0xff] %v4180
    %4307 = vst [vmem:[#allocation2 + $0x30] sm:$0xff] %v4195
    %4308 = vst [vmem:[#allocation2 + $0x38] sm:$0xff] %v4210
    %4309 = vst [vmem:[#allocation2 + $0x40] sm:$0xff] %v4225
    %4310 = vst [vmem:[#allocation2 + $0x48] sm:$0xff] %v4240
    %4311 = vst [vmem:[#allocation2 + $0x50] sm:$0xff] %v4255
    %4312 = vst [vmem:[#allocation2 + $0x58] sm:$0xff] %v4270
    %4313 = vst [vmem:[#allocation2 + $0x60] sm:$0xff] %v4285
    %4314 = vst [vmem:[#allocation2 + $0x68] sm:$0xff] %v4300
    %4315 = vst [vmem:[#allocation4] sm:$0xff] %v2181
    %4316 = vst [vmem:[#allocation4 + $0x8] sm:$0xff] %v2237
    %4317 = vst [vmem:[#allocation4 + $0x10] sm:$0xff] %v2183
    %4318 = vst [vmem:[#allocation4 + $0x18] sm:$0xff] %v2239
    // Predicated region
    $region42: #{tpu_custom_call.1} parent=1 // pred_check
      _
    $region43: #{tpu_custom_call.1} parent=1 // pred_check_branch
      %4320 = sbr.rel (0) target = $region45
    $region44: #{tpu_custom_call.1} parent=1 // pred_region
      %4322 = vsyncadd [#allocation3], 0
      %s4323 = sshll.u32 [#allocation2], 4
      %s4324 = int_to_ptr.vmem [resolvable:$true] %s4323
      %s4325 = sshll.u32 %s10, 4
      %s4326 = int_to_ptr.hbm [resolvable:$true] %s4325
      %4331 = dma.vmem_to_hbm [thread:$0]  %s4324, 1792, %s4326, [#allocation3], 896, 896, 56
    $region45: #{tpu_custom_call.1} parent=1 // pred_fallthru
      _
    // Predicated region
    $region46: #{tpu_custom_call.1} parent=1 // pred_check
      _
    $region47: #{tpu_custom_call.1} parent=1 // pred_check_branch
      %4333 = sbr.rel (0) target = $region49
    $region48: #{tpu_custom_call.1} parent=1 // pred_region
      %4335 = vsyncadd [#allocation5], 0
      %s4336 = sshll.u32 [#allocation4], 4
      %s4337 = int_to_ptr.vmem [resolvable:$true] %s4336
      %s4338 = sshll.u32 %s11, 4
      %s4339 = int_to_ptr.hbm [resolvable:$true] %s4338
      %4344 = dma.vmem_to_hbm [thread:$0]  %s4337, 512, %s4339, [#allocation5], 256, 256, 16
    $region49: #{tpu_custom_call.1} parent=1 // pred_fallthru
      _
    // Predicated region
    $region50: #{tpu_custom_call.1} parent=1 // pred_check
      _
    $region51: #{tpu_custom_call.1} parent=1 // pred_check_branch
      %4346 = sbr.rel (0) target = $region53
    $region52: #{tpu_custom_call.1} parent=1 // pred_region
      %4348 = dma.done [#allocation3], 1792
    $region53: #{tpu_custom_call.1} parent=1 // pred_fallthru
      _
    // Predicated region
    $region54: #{tpu_custom_call.1} parent=1 // pred_check
      _
    $region55: #{tpu_custom_call.1} parent=1 // pred_check_branch
      %4350 = sbr.rel (0) target = $region57
    $region56: #{tpu_custom_call.1} parent=1 // pred_region
      %4352 = dma.done [#allocation5], 512
    $region57: #{tpu_custom_call.1} parent=1 // pred_fallthru
      _
    %4353 = vsyncpa [#allocation3], 1
    %4354 = vsyncpa [#allocation5], 1

</llo_original>
